<compile_context>
chip_gen: v7x
topology: tpu7x:2x2x1
jax: 0.10.0
libtpu: 0.0.40
codegen_flags: <defaults>
</compile_context>

<pallas_src>
import functools
import math

import jax
import jax.numpy as jnp
from jax import lax
from jax.experimental import pallas as pl
from jax.experimental.pallas import tpu as pltpu


def _bottleneck_kernel(x_ref, x_hbm, w1_ref, b1_ref, w2_ref, b2_ref,
                       w3_ref, b3_ref, out_ref,
                       halo_buf, halo_sem, y1_ref,
                       *, mm_dtype, fuse_dw_taps):
    # Per grid step (batch dim squeezed):
    #   x_ref    : (TH, W, Cin)   rows of this tile (also the residual)
    #   x_hbm    : (N, H, W, Cin) raw HBM ref, used only for the 2 halo rows
    #   w1_ref   : (Cin, P)       conv1 1x1 weight, BN1 scale folded in
    #   w2_ref   : (3, 3P, P)     conv2 packed [kh, kw*P + ci, co], BN2 folded
    #   w3_ref   : (P, Cout)      conv3 1x1 weight, BN3 scale folded in
    #   b*_ref   : (1, C) f32     folded BN biases
    #   halo_buf : (2, W, Cin)    VMEM scratch for the row above / below
    #   y1_ref   : (TH+2, W, P)   conv1 output window (mm_dtype), feeds conv2
    TH, W, Cin = x_ref.shape
    P = w1_ref.shape[1]
    Cout = w3_ref.shape[1]
    HW = TH * W
    H = x_hbm.shape[1]

    n = pl.program_id(0)
    t = pl.program_id(1)
    nt = pl.num_programs(1)

    # ---- kick off halo-row DMAs (row above / below the tile, clamped) ------
    top_row = jnp.maximum(t * TH - 1, 0)
    bot_row = jnp.minimum((t + 1) * TH, H - 1)
    cp_top = pltpu.make_async_copy(x_hbm.at[n, top_row], halo_buf.at[0],
                                   halo_sem.at[0])
    cp_bot = pltpu.make_async_copy(x_hbm.at[n, bot_row], halo_buf.at[1],
                                   halo_sem.at[1])
    cp_top.start()
    cp_bot.start()

    # ---- conv1 (1x1) + BN1 + ReLU on the tile rows -> scratch rows 1..TH ---
    x_tile = x_ref[...]                                   # native dtype, reused
    x2d = x_tile.reshape(HW, Cin)
    y1 = jnp.dot(x2d.astype(mm_dtype), w1_ref[...],
                 preferred_element_type=jnp.float32)
    y1 = jnp.maximum(y1 + b1_ref[...], 0.0)
    y1_ref[1:TH + 1] = y1.reshape(TH, W, P).astype(mm_dtype)

    # ---- conv1 on the 2 halo rows (recomputed; zeroed outside the image) ---
    cp_top.wait()
    cp_bot.wait()
    hy = jnp.dot(halo_buf[...].reshape(2 * W, Cin).astype(mm_dtype), w1_ref[...],
                 preferred_element_type=jnp.float32)
    hy = jnp.maximum(hy + b1_ref[...], 0.0).reshape(2, W, P)
    # Halo rows outside the image are conv2 zero-padding, not relu(b1).
    y1_ref[0] = jnp.where(t == 0, 0.0, hy[0]).astype(mm_dtype)
    y1_ref[TH + 1] = jnp.where(t == nt - 1, 0.0, hy[1]).astype(mm_dtype)

    # ---- conv2 (3x3, stride 1, pad 1) + BN2 + ReLU --------------------------
    # dw taps via XLU rolls along W (edge columns masked), all in mm_dtype.
    y1w = y1_ref[...]                                     # (TH+2, W, P)
    col = lax.broadcasted_iota(jnp.int32, (W, P), 0)
    y_m1 = jnp.where(col == 0, 0.0, pltpu.roll(y1w, 1, 1))          # y1[h, w-1]
    y_p1 = jnp.where(col == W - 1, 0.0, pltpu.roll(y1w, W - 1, 1))  # y1[h, w+1]

    if fuse_dw_taps:
        # K = 3P contraction per dh offset (3 matmuls, not 9).  dh taps come
        # from leading-axis (plane) slices of the window BEFORE the reshape,
        # so no sublane-misaligned row slice is generated for odd W.
        z3 = jnp.concatenate([y_m1, y1w, y_p1], axis=-1)            # (TH+2, W, 3P)
        acc = jnp.dot(z3[0:TH].reshape(HW, 3 * P), w2_ref[0],
                      preferred_element_type=jnp.float32)
        acc += jnp.dot(z3[1:TH + 1].reshape(HW, 3 * P), w2_ref[1],
                       preferred_element_type=jnp.float32)
        acc += jnp.dot(z3[2:TH + 2].reshape(HW, 3 * P), w2_ref[2],
                       preferred_element_type=jnp.float32)
    else:
        # Large-P path: K = P already fills the MXU, skip the lane concat.
        taps = (y_m1, y1w, y_p1)
        acc = None
        for kh in range(3):
            for kw in range(3):
                d = jnp.dot(taps[kw][kh:kh + TH].reshape(HW, P),
                            w2_ref[kh, kw * P:(kw + 1) * P, :],
                            preferred_element_type=jnp.float32)
                acc = d if acc is None else acc + d

    y2 = jnp.maximum(acc + b2_ref[...], 0.0)                        # (HW, P) f32

    # ---- conv3 (1x1) + BN3 + residual + ReLU --------------------------------
    y3 = jnp.dot(y2.astype(mm_dtype), w3_ref[...],
                 preferred_element_type=jnp.float32) + b3_ref[...]
    out = jnp.maximum(y3 + x2d, 0.0)                    # residual in x's dtype
    out_ref[...] = out.reshape(TH, W, Cout).astype(out_ref.dtype)


def _pick_row_tile(N, H, W, Cin, P, Cout, act_bytes, mm_bytes,
                   budget_bytes=24 * 1024 * 1024):
    """Largest divisor of H whose per-grid-step VMEM footprint fits the budget."""
    weights = 2 * ((Cin * P + 9 * P * P + P * Cout) * mm_bytes + (2 * P + Cout) * 4)
    best = 1
    for th in range(1, H + 1):
        if H % th:
            continue
        tiles = 2 * th * W * (Cin + Cout) * act_bytes     # double-buffered x/out blocks
        halo = 2 * W * Cin * act_bytes
        y1s = (th + 2) * W * P * mm_bytes
        conv2_tmp = 5 * (th + 2) * W * P * mm_bytes + th * W * P * 4
        if weights + tiles + halo + y1s + conv2_tmp <= budget_bytes:
            best = th
    # Keep >= 2 parallel grid steps for the v7x megacore when batch == 1.
    if N == 1 and best == H and H > 1:
        best = max(d for d in range(1, H) if H % d == 0)
    return best


def bottleneck_pallas(x_nhwc, params, *, row_tile=None, matmul_dtype=None,
                      fuse_dw_taps=None, vmem_limit_bytes=48 * 1024 * 1024):
    """Bottleneck forward (NHWC).  matmul_dtype lets f32 inputs use bf16 MXU."""
    w1, s1, b1, w2, s2, b2, w3, s3, b3 = params
    N, H, W, Cin = x_nhwc.shape
    P = w1.shape[1]
    Cout = w3.shape[1]
    assert Cin == Cout, "downsample=None requires inplanes == planes*expansion"

    act_dtype = jnp.dtype(x_nhwc.dtype)
    mm_dtype = act_dtype if matmul_dtype is None else jnp.dtype(matmul_dtype)
    if fuse_dw_taps is None:
        fuse_dw_taps = P < 256

    if row_tile is None:
        row_tile = _pick_row_tile(N, H, W, Cin, P, Cout,
                                  act_dtype.itemsize, mm_dtype.itemsize)
    assert H % row_tile == 0, "row_tile must divide H"
    T = H // row_tile

    # Fold eval-mode BN scales into the conv weights (wrapper side, free);
    # only the bias adds remain in-kernel.  conv2 packed as (kh, kw*P + ci, co).
    w1f = (w1 * s1).astype(mm_dtype)                                    # (Cin, P)
    w2f = (w2 * s2.reshape(1, 1, P)).reshape(3, 3 * P, P).astype(mm_dtype)
    w3f = (w3 * s3).astype(mm_dtype)                                    # (P, Cout)
    b1f = b1.astype(jnp.float32)
    b2f = b2.astype(jnp.float32)
    b3f = b3.astype(jnp.float32)

    const2 = lambda n, t: (0, 0)
    const3 = lambda n, t: (0, 0, 0)
    in_specs = [
        pl.BlockSpec((pl.Squeezed(), row_tile, W, Cin),
                     lambda n, t: (n, t, 0, 0)),                          # x tile
        pl.BlockSpec(memory_space=pl.ANY),                                # x (HBM) for halo DMA
        pl.BlockSpec((Cin, P), const2),                                   # w1
        pl.BlockSpec((1, P), const2),                                     # b1
        pl.BlockSpec((3, 3 * P, P), const3),                              # w2
        pl.BlockSpec((1, P), const2),                                     # b2
        pl.BlockSpec((P, Cout), const2),                                  # w3
        pl.BlockSpec((1, Cout), const2),                                  # b3
    ]
    out_specs = pl.BlockSpec((pl.Squeezed(), row_tile, W, Cout),
                             lambda n, t: (n, t, 0, 0))

    scratch_shapes = [
        pltpu.VMEM((2, W, Cin), act_dtype),                # halo rows
        pltpu.SemaphoreType.DMA((2,)),                     # halo DMA sems
        pltpu.VMEM((row_tile + 2, W, P), mm_dtype),        # conv1 output window
    ]

    itemsize = act_dtype.itemsize
    flops = (2 * N * H * W * (Cin * P + 9 * P * P + P * Cout)
             + 2 * N * T * 2 * W * Cin * P)                # halo-row conv1 recompute
    bytes_accessed = (
        N * H * W * (Cin + Cout) * itemsize                # x read + out write
        + N * T * 2 * W * Cin * itemsize                   # halo-row re-reads
        + (w1f.size + w2f.size + w3f.size) * mm_dtype.itemsize
        + (b1f.size + b2f.size + b3f.size) * 4)

    kernel = functools.partial(_bottleneck_kernel, mm_dtype=mm_dtype,
                               fuse_dw_taps=fuse_dw_taps)

    return pl.pallas_call(
        kernel,
        grid=(N, T),
        in_specs=in_specs,
        out_specs=out_specs,
        out_shape=jax.ShapeDtypeStruct((N, H, W, Cout), x_nhwc.dtype),
        scratch_shapes=scratch_shapes,
        compiler_params=pltpu.CompilerParams(
            dimension_semantics=("parallel", "parallel"),
            vmem_limit_bytes=vmem_limit_bytes),
        cost_estimate=pl.CostEstimate(flops=flops, transcendentals=0,
                                      bytes_accessed=bytes_accessed),
    )(x_nhwc, x_nhwc, w1f, b1f, w2f, b2f, w3f, b3f)


def init_params(key, inplanes, planes, expansion=4, eps=1e-5):
    cout = planes * expansion
    ks = jax.random.split(key, 15)

    def conv_init(k, shape, fan_in):
        return jax.random.normal(k, shape, jnp.float32) * (1.0 / math.sqrt(fan_in))

    # conv weights stored contraction-friendly: (C_in, C_out); 3x3 as (9, C_in, C_out)
    w1 = conv_init(ks[0], (inplanes, planes), inplanes)
    w2 = conv_init(ks[1], (9, planes, planes), 9 * planes)
    w3 = conv_init(ks[2], (planes, cout), planes)

    def bn_fold(kg, kb, km, kv, c):
        gamma = 1.0 + 0.1 * jax.random.normal(kg, (c,), jnp.float32)
        beta = 0.1 * jax.random.normal(kb, (c,), jnp.float32)
        mean = 0.1 * jax.random.normal(km, (c,), jnp.float32)
        var = jax.random.uniform(kv, (c,), jnp.float32, minval=0.5, maxval=1.5)
        scale = gamma / jnp.sqrt(var + eps)
        bias = beta - mean * scale
        return scale.reshape(1, c), bias.reshape(1, c)

    s1, b1 = bn_fold(ks[3], ks[4], ks[5], ks[6], planes)
    s2, b2 = bn_fold(ks[7], ks[8], ks[9], ks[10], planes)
    s3, b3 = bn_fold(ks[11], ks[12], ks[13], ks[14], cout)
    return (w1, s1, b1, w2, s2, b2, w3, s3, b3)


def bottleneck_ref(x_nhwc, params):
    """Pure-JAX reference (same NHWC layout) for correctness checking."""
    w1, s1, b1, w2, s2, b2, w3, s3, b3 = params
    Cin = x_nhwc.shape[-1]
    P = w1.shape[1]
    Cout = w3.shape[1]
    dn = ('NHWC', 'HWIO', 'NHWC')

    y = lax.conv_general_dilated(x_nhwc, w1.reshape(1, 1, Cin, P), (1, 1),
                                 'VALID', dimension_numbers=dn)
    y = jnp.maximum(y * s1.reshape(1, 1, 1, P) + b1.reshape(1, 1, 1, P), 0.0)

    y = lax.conv_general_dilated(y, w2.reshape(3, 3, P, P), (1, 1),
                                 'SAME', dimension_numbers=dn)
    y = jnp.maximum(y * s2.reshape(1, 1, 1, P) + b2.reshape(1, 1, 1, P), 0.0)

    y = lax.conv_general_dilated(y, w3.reshape(1, 1, P, Cout), (1, 1),
                                 'VALID', dimension_numbers=dn)
    y = y * s3.reshape(1, 1, 1, Cout) + b3.reshape(1, 1, 1, Cout)
    return jnp.maximum(y + x_nhwc, 0.0)


if __name__ == "__main__":
    key = jax.random.PRNGKey(0)
    kx, kp = jax.random.split(key)

    # Small shapes consistent with the module: inplanes must equal planes*4
    # (stride=1, downsample=None path).
    N, inplanes, planes, H, W = 2, 16, 4, 16, 16

    x_nchw = jax.random.normal(kx, (N, inplanes, H, W), jnp.float32)  # PyTorch layout
    params = init_params(kp, inplanes, planes)

    x_nhwc = jnp.transpose(x_nchw, (0, 2, 3, 1))
    ref_nhwc = bottleneck_ref(x_nhwc, params)

    # f32, default tiling (full-H row tile) + fused dw taps: strict gate.
    out_nhwc = jax.block_until_ready(bottleneck_pallas(x_nhwc, params))
    assert out_nhwc.shape == (N, H, W, planes * 4)
    assert jnp.allclose(out_nhwc, ref_nhwc, atol=1e-4, rtol=1e-4), (
        "Pallas kernel output mismatch vs JAX reference (f32, full-H tile)")

    # f32, multi-tile grid (exercises in-kernel halo DMA + edge zeroing) and
    # the per-tap (un-fused) conv2 path: strict gate.
    out_tiled = jax.block_until_ready(
        bottleneck_pallas(x_nhwc, params, row_tile=4, fuse_dw_taps=False))
    assert jnp.allclose(out_tiled, ref_nhwc, atol=1e-4, rtol=1e-4), (
        "Pallas kernel output mismatch vs JAX reference (f32, row_tile=4)")

    # bfloat16 activation path: loose sanity band vs the f32 reference.
    out_bf16 = jax.block_until_ready(
        bottleneck_pallas(x_nhwc.astype(jnp.bfloat16), params))
    assert out_bf16.dtype == jnp.bfloat16
    assert jnp.allclose(out_bf16.astype(jnp.float32), ref_nhwc,
                        atol=0.25, rtol=0.05), (
        "Pallas kernel output mismatch vs JAX reference (bf16 activations)")

    # f32 activations with bf16 MXU inputs (v5e/v6e throughput path).
    out_mm = jax.block_until_ready(
        bottleneck_pallas(x_nhwc, params, matmul_dtype=jnp.bfloat16))
    assert out_mm.dtype == jnp.float32
    assert jnp.allclose(out_mm, ref_nhwc, atol=0.25, rtol=0.05), (
        "Pallas kernel output mismatch vs JAX reference (f32 act, bf16 MXU)")

    out_nchw = jnp.transpose(out_nhwc, (0, 3, 1, 2))  # back to PyTorch NCHW
    assert out_nchw.shape == x_nchw.shape
    print("KERNEL_OK")
</pallas_src>

<mosaic_0001>
module attributes {stable_mosaic.version = 11 : i64} {
  func.func @_bottleneck_kernel(%arg0: i32, %arg1: i32, %arg2: memref<1x16x16x16xf32, #tpu.memory_space<vmem>>, %arg3: memref<2x16x16x16xf32, #tpu.memory_space<any>>, %arg4: memref<16x4xf32, #tpu.memory_space<vmem>>, %arg5: memref<1x4xf32, #tpu.memory_space<vmem>>, %arg6: memref<3x12x4xf32, #tpu.memory_space<vmem>>, %arg7: memref<1x4xf32, #tpu.memory_space<vmem>>, %arg8: memref<4x16xf32, #tpu.memory_space<vmem>>, %arg9: memref<1x16xf32, #tpu.memory_space<vmem>>, %arg10: memref<1x16x16x16xf32, #tpu.memory_space<vmem>>, %arg11: memref<2x16x16xf32, #tpu.memory_space<vmem>>, %arg12: memref<2x!tpu.dma_semaphore, #tpu.memory_space<semaphore_mem>>, %arg13: memref<18x16x4xf32, #tpu.memory_space<vmem>>) attributes {dimension_semantics = [#tpu.dimension_semantics<parallel>, #tpu.dimension_semantics<parallel>], iteration_bounds = array<i64: 2, 1>, scalar_prefetch = 0 : i64, scratch_operands = 3 : i64, tpu.core_type = #tpu.core_type<tc>, window_params = [{transform_indices = @transform_0, window_bounds = array<i64: 1, 16, 16, 16>}, {}, {pipeline_mode = #tpu.pipeline_mode<synchronous>, transform_indices = @transform_2, window_bounds = array<i64: 16, 4>}, {pipeline_mode = #tpu.pipeline_mode<synchronous>, transform_indices = @transform_3, window_bounds = array<i64: 1, 4>}, {pipeline_mode = #tpu.pipeline_mode<synchronous>, transform_indices = @transform_4, window_bounds = array<i64: 3, 12, 4>}, {pipeline_mode = #tpu.pipeline_mode<synchronous>, transform_indices = @transform_5, window_bounds = array<i64: 1, 4>}, {pipeline_mode = #tpu.pipeline_mode<synchronous>, transform_indices = @transform_6, window_bounds = array<i64: 4, 16>}, {pipeline_mode = #tpu.pipeline_mode<synchronous>, transform_indices = @transform_7, window_bounds = array<i64: 1, 16>}, {transform_indices = @transform_8, window_bounds = array<i64: 1, 16, 16, 16>}]} {
    %c16_i32 = arith.constant 16 : i32
    %0 = arith.muli %arg1, %c16_i32 : i32
    %c1_i32 = arith.constant 1 : i32
    %1 = arith.subi %0, %c1_i32 : i32
    %c0_i32 = arith.constant 0 : i32
    %2 = arith.maxsi %1, %c0_i32 : i32
    %c1_i32_0 = arith.constant 1 : i32
    %3 = arith.addi %arg1, %c1_i32_0 : i32
    %c16_i32_1 = arith.constant 16 : i32
    %4 = arith.muli %3, %c16_i32_1 : i32
    %c15_i32 = arith.constant 15 : i32
    %5 = arith.minsi %4, %c15_i32 : i32
    %c0_i32_2 = arith.constant 0 : i32
    %c0_i32_3 = arith.constant 0 : i32
    %c0_i32_4 = arith.constant 0 : i32
    %c0_i32_5 = arith.constant 0 : i32
    %6 = tpu.memref_slice %arg3[%arg0, %2, %c0_i32_4, %c0_i32_5] : memref<2x16x16x16xf32, #tpu.memory_space<any>> -> memref<1x1x16x16xf32, #tpu.memory_space<any>>
    %7 = tpu.memref_squeeze %6 : memref<1x1x16x16xf32, #tpu.memory_space<any>> -> memref<16x16xf32, #tpu.memory_space<any>>
    %c0_i32_6 = arith.constant 0 : i32
    %c0_i32_7 = arith.constant 0 : i32
    %8 = tpu.memref_slice %arg11[%c0_i32_2, %c0_i32_6, %c0_i32_7] : memref<2x16x16xf32, #tpu.memory_space<vmem>> -> memref<1x16x16xf32, #tpu.memory_space<vmem>>
    %9 = tpu.memref_squeeze %8 : memref<1x16x16xf32, #tpu.memory_space<vmem>> -> memref<16x16xf32, #tpu.memory_space<vmem>>
    %10 = tpu.memref_slice %arg12[%c0_i32_3] : memref<2x!tpu.dma_semaphore, #tpu.memory_space<semaphore_mem>> -> memref<1x!tpu.dma_semaphore, #tpu.memory_space<semaphore_mem>>
    %11 = tpu.memref_squeeze %10 : memref<1x!tpu.dma_semaphore, #tpu.memory_space<semaphore_mem>> -> memref<!tpu.dma_semaphore, #tpu.memory_space<semaphore_mem>>
    tpu.enqueue_dma source(%7 : memref<16x16xf32, #tpu.memory_space<any>>) target(%9 : memref<16x16xf32, #tpu.memory_space<vmem>>) target_semaphore(%11 : memref<!tpu.dma_semaphore, #tpu.memory_space<semaphore_mem>>)
    %c1_i32_8 = arith.constant 1 : i32
    %c1_i32_9 = arith.constant 1 : i32
    %c0_i32_10 = arith.constant 0 : i32
    %c0_i32_11 = arith.constant 0 : i32
    %12 = tpu.memref_slice %arg3[%arg0, %5, %c0_i32_10, %c0_i32_11] : memref<2x16x16x16xf32, #tpu.memory_space<any>> -> memref<1x1x16x16xf32, #tpu.memory_space<any>>
    %13 = tpu.memref_squeeze %12 : memref<1x1x16x16xf32, #tpu.memory_space<any>> -> memref<16x16xf32, #tpu.memory_space<any>>
    %c0_i32_12 = arith.constant 0 : i32
    %c0_i32_13 = arith.constant 0 : i32
    %14 = tpu.memref_slice %arg11[%c1_i32_8, %c0_i32_12, %c0_i32_13] : memref<2x16x16xf32, #tpu.memory_space<vmem>> -> memref<1x16x16xf32, #tpu.memory_space<vmem>>
    %15 = tpu.memref_squeeze %14 : memref<1x16x16xf32, #tpu.memory_space<vmem>> -> memref<16x16xf32, #tpu.memory_space<vmem>>
    %16 = tpu.memref_slice %arg12[%c1_i32_9] : memref<2x!tpu.dma_semaphore, #tpu.memory_space<semaphore_mem>> -> memref<1x!tpu.dma_semaphore, #tpu.memory_space<semaphore_mem>>
    %17 = tpu.memref_squeeze %16 : memref<1x!tpu.dma_semaphore, #tpu.memory_space<semaphore_mem>> -> memref<!tpu.dma_semaphore, #tpu.memory_space<semaphore_mem>>
    tpu.enqueue_dma source(%13 : memref<16x16xf32, #tpu.memory_space<any>>) target(%15 : memref<16x16xf32, #tpu.memory_space<vmem>>) target_semaphore(%17 : memref<!tpu.dma_semaphore, #tpu.memory_space<semaphore_mem>>)
    %c0 = arith.constant 0 : index
    %c0_14 = arith.constant 0 : index
    %c0_15 = arith.constant 0 : index
    %c0_16 = arith.constant 0 : index
    %18 = vector.load %arg2[%c0, %c0_14, %c0_15, %c0_16] : memref<1x16x16x16xf32, #tpu.memory_space<vmem>>, vector<1x16x16x16xf32>
    %19 = vector.shape_cast %18 : vector<1x16x16x16xf32> to vector<16x16x16xf32>
    %20 = vector.shape_cast %19 : vector<16x16x16xf32> to vector<256x16xf32>
    %c0_17 = arith.constant 0 : index
    %c0_18 = arith.constant 0 : index
    %21 = vector.load %arg4[%c0_17, %c0_18] : memref<16x4xf32, #tpu.memory_space<vmem>>, vector<16x4xf32>
    %cst = arith.constant dense<0.000000e+00> : vector<256x4xf32>
    %22 = tpu.matmul %20, %21, %cst {dimension_numbers = #tpu.dot_dimension_numbers<[1], [0], [0], [1], [0, 0, 1, 1], [], []>} : vector<256x16xf32>, vector<16x4xf32>, vector<256x4xf32> -> vector<256x4xf32>
    %c0_19 = arith.constant 0 : index
    %c0_20 = arith.constant 0 : index
    %23 = vector.load %arg5[%c0_19, %c0_20] : memref<1x4xf32, #tpu.memory_space<vmem>>, vector<1x4xf32>
    %24 = vector.broadcast %23 : vector<1x4xf32> to vector<256x4xf32>
    %25 = arith.addf %22, %24 : vector<256x4xf32>
    %cst_21 = arith.constant 0.000000e+00 : f32
    %26 = vector.broadcast %cst_21 : f32 to vector<256x4xf32>
    %27 = arith.maximumf %25, %26 : vector<256x4xf32>
    %28 = vector.shape_cast %27 : vector<256x4xf32> to vector<16x16x4xf32>
    %c1 = arith.constant 1 : index
    %c0_22 = arith.constant 0 : index
    %c0_23 = arith.constant 0 : index
    %29 = vector.load %arg13[%c1, %c0_22, %c0_23] : memref<18x16x4xf32, #tpu.memory_space<vmem>>, vector<16x16x4xf32>
    tpu.vector_store %arg13[%c1, %c0_22, %c0_23], %28 {strides = array<i32>} : memref<18x16x4xf32, #tpu.memory_space<vmem>>, vector<16x16x4xf32>,
    %c0_i32_24 = arith.constant 0 : i32
    %c0_i32_25 = arith.constant 0 : i32
    %c0_i32_26 = arith.constant 0 : i32
    %c0_i32_27 = arith.constant 0 : i32
    %30 = tpu.memref_slice %arg3[%arg0, %2, %c0_i32_26, %c0_i32_27] : memref<2x16x16x16xf32, #tpu.memory_space<any>> -> memref<1x1x16x16xf32, #tpu.memory_space<any>>
    %31 = tpu.memref_squeeze %30 : memref<1x1x16x16xf32, #tpu.memory_space<any>> -> memref<16x16xf32, #tpu.memory_space<any>>
    %c0_i32_28 = arith.constant 0 : i32
    %c0_i32_29 = arith.constant 0 : i32
    %32 = tpu.memref_slice %arg11[%c0_i32_24, %c0_i32_28, %c0_i32_29] : memref<2x16x16xf32, #tpu.memory_space<vmem>> -> memref<1x16x16xf32, #tpu.memory_space<vmem>>
    %33 = tpu.memref_squeeze %32 : memref<1x16x16xf32, #tpu.memory_space<vmem>> -> memref<16x16xf32, #tpu.memory_space<vmem>>
    %34 = tpu.memref_slice %arg12[%c0_i32_25] : memref<2x!tpu.dma_semaphore, #tpu.memory_space<semaphore_mem>> -> memref<1x!tpu.dma_semaphore, #tpu.memory_space<semaphore_mem>>
    %35 = tpu.memref_squeeze %34 : memref<1x!tpu.dma_semaphore, #tpu.memory_space<semaphore_mem>> -> memref<!tpu.dma_semaphore, #tpu.memory_space<semaphore_mem>>
    tpu.wait_dma2 semaphore(%35 : memref<!tpu.dma_semaphore, #tpu.memory_space<semaphore_mem>>) src(%31 : memref<16x16xf32, #tpu.memory_space<any>>) dst(%33 : memref<16x16xf32, #tpu.memory_space<vmem>>)
    %c1_i32_30 = arith.constant 1 : i32
    %c1_i32_31 = arith.constant 1 : i32
    %c0_i32_32 = arith.constant 0 : i32
    %c0_i32_33 = arith.constant 0 : i32
    %36 = tpu.memref_slice %arg3[%arg0, %5, %c0_i32_32, %c0_i32_33] : memref<2x16x16x16xf32, #tpu.memory_space<any>> -> memref<1x1x16x16xf32, #tpu.memory_space<any>>
    %37 = tpu.memref_squeeze %36 : memref<1x1x16x16xf32, #tpu.memory_space<any>> -> memref<16x16xf32, #tpu.memory_space<any>>
    %c0_i32_34 = arith.constant 0 : i32
    %c0_i32_35 = arith.constant 0 : i32
    %38 = tpu.memref_slice %arg11[%c1_i32_30, %c0_i32_34, %c0_i32_35] : memref<2x16x16xf32, #tpu.memory_space<vmem>> -> memref<1x16x16xf32, #tpu.memory_space<vmem>>
    %39 = tpu.memref_squeeze %38 : memref<1x16x16xf32, #tpu.memory_space<vmem>> -> memref<16x16xf32, #tpu.memory_space<vmem>>
    %40 = tpu.memref_slice %arg12[%c1_i32_31] : memref<2x!tpu.dma_semaphore, #tpu.memory_space<semaphore_mem>> -> memref<1x!tpu.dma_semaphore, #tpu.memory_space<semaphore_mem>>
    %41 = tpu.memref_squeeze %40 : memref<1x!tpu.dma_semaphore, #tpu.memory_space<semaphore_mem>> -> memref<!tpu.dma_semaphore, #tpu.memory_space<semaphore_mem>>
    tpu.wait_dma2 semaphore(%41 : memref<!tpu.dma_semaphore, #tpu.memory_space<semaphore_mem>>) src(%37 : memref<16x16xf32, #tpu.memory_space<any>>) dst(%39 : memref<16x16xf32, #tpu.memory_space<vmem>>)
    %c0_36 = arith.constant 0 : index
    %c0_37 = arith.constant 0 : index
    %c0_38 = arith.constant 0 : index
    %42 = vector.load %arg11[%c0_36, %c0_37, %c0_38] : memref<2x16x16xf32, #tpu.memory_space<vmem>>, vector<2x16x16xf32>
    %43 = vector.shape_cast %42 : vector<2x16x16xf32> to vector<32x16xf32>
    %c0_39 = arith.constant 0 : index
    %c0_40 = arith.constant 0 : index
    %44 = vector.load %arg4[%c0_39, %c0_40] : memref<16x4xf32, #tpu.memory_space<vmem>>, vector<16x4xf32>
    %cst_41 = arith.constant dense<0.000000e+00> : vector<32x4xf32>
    %45 = tpu.matmul %43, %44, %cst_41 {dimension_numbers = #tpu.dot_dimension_numbers<[1], [0], [0], [1], [0, 0, 1, 1], [], []>} : vector<32x16xf32>, vector<16x4xf32>, vector<32x4xf32> -> vector<32x4xf32>
    %c0_42 = arith.constant 0 : index
    %c0_43 = arith.constant 0 : index
    %46 = vector.load %arg5[%c0_42, %c0_43] : memref<1x4xf32, #tpu.memory_space<vmem>>, vector<1x4xf32>
    %47 = vector.broadcast %46 : vector<1x4xf32> to vector<32x4xf32>
    %48 = arith.addf %45, %47 : vector<32x4xf32>
    %cst_44 = arith.constant 0.000000e+00 : f32
    %49 = vector.broadcast %cst_44 : f32 to vector<32x4xf32>
    %50 = arith.maximumf %48, %49 : vector<32x4xf32>
    %51 = vector.shape_cast %50 : vector<32x4xf32> to vector<2x16x4xf32>
    %c0_i32_45 = arith.constant 0 : i32
    %52 = arith.cmpi eq, %arg1, %c0_i32_45 : i32
    %53 = vector.extract_strided_slice %51 {offsets = [0, 0, 0], sizes = [1, 16, 4], strides = [1, 1, 1]} : vector<2x16x4xf32> to vector<1x16x4xf32>
    %54 = vector.shape_cast %53 : vector<1x16x4xf32> to vector<16x4xf32>
    %cst_46 = arith.constant 0.000000e+00 : f32
    %55 = vector.broadcast %cst_46 : f32 to vector<16x4xf32>
    %56 = arith.select %52, %55, %54 : vector<16x4xf32>
    %c0_47 = arith.constant 0 : index
    %c0_48 = arith.constant 0 : index
    %c0_49 = arith.constant 0 : index
    %57 = vector.load %arg13[%c0_47, %c0_48, %c0_49] : memref<18x16x4xf32, #tpu.memory_space<vmem>>, vector<1x16x4xf32>
    %58 = vector.shape_cast %57 : vector<1x16x4xf32> to vector<16x4xf32>
    %59 = vector.shape_cast %56 : vector<16x4xf32> to vector<1x16x4xf32>
    tpu.vector_store %arg13[%c0_47, %c0_48, %c0_49], %59 {strides = array<i32>} : memref<18x16x4xf32, #tpu.memory_space<vmem>>, vector<1x16x4xf32>,
    %c0_i32_50 = arith.constant 0 : i32
    %60 = arith.cmpi eq, %arg1, %c0_i32_50 : i32
    %61 = vector.extract_strided_slice %51 {offsets = [1, 0, 0], sizes = [1, 16, 4], strides = [1, 1, 1]} : vector<2x16x4xf32> to vector<1x16x4xf32>
    %62 = vector.shape_cast %61 : vector<1x16x4xf32> to vector<16x4xf32>
    %cst_51 = arith.constant 0.000000e+00 : f32
    %63 = vector.broadcast %cst_51 : f32 to vector<16x4xf32>
    %64 = arith.select %60, %63, %62 : vector<16x4xf32>
    %c17 = arith.constant 17 : index
    %c0_52 = arith.constant 0 : index
    %c0_53 = arith.constant 0 : index
    %65 = vector.load %arg13[%c17, %c0_52, %c0_53] : memref<18x16x4xf32, #tpu.memory_space<vmem>>, vector<1x16x4xf32>
    %66 = vector.shape_cast %65 : vector<1x16x4xf32> to vector<16x4xf32>
    %67 = vector.shape_cast %64 : vector<16x4xf32> to vector<1x16x4xf32>
    tpu.vector_store %arg13[%c17, %c0_52, %c0_53], %67 {strides = array<i32>} : memref<18x16x4xf32, #tpu.memory_space<vmem>>, vector<1x16x4xf32>,
    %c0_54 = arith.constant 0 : index
    %c0_55 = arith.constant 0 : index
    %c0_56 = arith.constant 0 : index
    %68 = vector.load %arg13[%c0_54, %c0_55, %c0_56] : memref<18x16x4xf32, #tpu.memory_space<vmem>>, vector<18x16x4xf32>
    %69 = tpu.iota {dimensions = array<i32: 0>} : vector<16x4xi32>
    %c0_i32_57 = arith.constant 0 : i32
    %70 = vector.broadcast %c0_i32_57 : i32 to vector<16x4xi32>
    %71 = arith.cmpi eq, %69, %70 : vector<16x4xi32>
    %c1_i32_58 = arith.constant 1 : i32
    %72 = tpu.dynamic_rotate %68 by %c1_i32_58 dim 1 : vector<18x16x4xf32>, i32 -> vector<18x16x4xf32>
    %cst_59 = arith.constant 0.000000e+00 : f32
    %73 = vector.shape_cast %71 : vector<16x4xi1> to vector<1x16x4xi1>
    %74 = vector.broadcast %73 : vector<1x16x4xi1> to vector<18x16x4xi1>
    %75 = vector.broadcast %cst_59 : f32 to vector<18x16x4xf32>
    %76 = arith.select %74, %75, %72 : vector<18x16x4xi1>, vector<18x16x4xf32>
    %c15_i32_60 = arith.constant 15 : i32
    %77 = vector.broadcast %c15_i32_60 : i32 to vector<16x4xi32>
    %78 = arith.cmpi eq, %69, %77 : vector<16x4xi32>
    %c15_i32_61 = arith.constant 15 : i32
    %79 = tpu.dynamic_rotate %68 by %c15_i32_61 dim 1 : vector<18x16x4xf32>, i32 -> vector<18x16x4xf32>
    %cst_62 = arith.constant 0.000000e+00 : f32
    %80 = vector.shape_cast %78 : vector<16x4xi1> to vector<1x16x4xi1>
    %81 = vector.broadcast %80 : vector<1x16x4xi1> to vector<18x16x4xi1>
    %82 = vector.broadcast %cst_62 : f32 to vector<18x16x4xf32>
    %83 = arith.select %81, %82, %79 : vector<18x16x4xi1>, vector<18x16x4xf32>
    %84 = tpu.concatenate %76, %68, %83 in 2 : vector<18x16x4xf32>, vector<18x16x4xf32>, vector<18x16x4xf32> -> vector<18x16x12xf32>
    %85 = vector.extract_strided_slice %84 {offsets = [0, 0, 0], sizes = [16, 16, 12], strides = [1, 1, 1]} : vector<18x16x12xf32> to vector<16x16x12xf32>
    %86 = vector.shape_cast %85 : vector<16x16x12xf32> to vector<256x12xf32>
    %c0_63 = arith.constant 0 : index
    %c0_64 = arith.constant 0 : index
    %c0_65 = arith.constant 0 : index
    %87 = vector.load %arg6[%c0_63, %c0_64, %c0_65] : memref<3x12x4xf32, #tpu.memory_space<vmem>>, vector<1x12x4xf32>
    %88 = vector.shape_cast %87 : vector<1x12x4xf32> to vector<12x4xf32>
    %cst_66 = arith.constant dense<0.000000e+00> : vector<256x4xf32>
    %89 = tpu.matmul %86, %88, %cst_66 {dimension_numbers = #tpu.dot_dimension_numbers<[1], [0], [0], [1], [0, 0, 1, 1], [], []>} : vector<256x12xf32>, vector<12x4xf32>, vector<256x4xf32> -> vector<256x4xf32>
    %90 = vector.extract_strided_slice %84 {offsets = [1, 0, 0], sizes = [16, 16, 12], strides = [1, 1, 1]} : vector<18x16x12xf32> to vector<16x16x12xf32>
    %91 = vector.shape_cast %90 : vector<16x16x12xf32> to vector<256x12xf32>
    %c1_67 = arith.constant 1 : index
    %c0_68 = arith.constant 0 : index
    %c0_69 = arith.constant 0 : index
    %92 = vector.load %arg6[%c1_67, %c0_68, %c0_69] : memref<3x12x4xf32, #tpu.memory_space<vmem>>, vector<1x12x4xf32>
    %93 = vector.shape_cast %92 : vector<1x12x4xf32> to vector<12x4xf32>
    %cst_70 = arith.constant dense<0.000000e+00> : vector<256x4xf32>
    %94 = tpu.matmul %91, %93, %cst_70 {dimension_numbers = #tpu.dot_dimension_numbers<[1], [0], [0], [1], [0, 0, 1, 1], [], []>} : vector<256x12xf32>, vector<12x4xf32>, vector<256x4xf32> -> vector<256x4xf32>
    %95 = arith.addf %89, %94 : vector<256x4xf32>
    %96 = vector.extract_strided_slice %84 {offsets = [2, 0, 0], sizes = [16, 16, 12], strides = [1, 1, 1]} : vector<18x16x12xf32> to vector<16x16x12xf32>
    %97 = vector.shape_cast %96 : vector<16x16x12xf32> to vector<256x12xf32>
    %c2 = arith.constant 2 : index
    %c0_71 = arith.constant 0 : index
    %c0_72 = arith.constant 0 : index
    %98 = vector.load %arg6[%c2, %c0_71, %c0_72] : memref<3x12x4xf32, #tpu.memory_space<vmem>>, vector<1x12x4xf32>
    %99 = vector.shape_cast %98 : vector<1x12x4xf32> to vector<12x4xf32>
    %cst_73 = arith.constant dense<0.000000e+00> : vector<256x4xf32>
    %100 = tpu.matmul %97, %99, %cst_73 {dimension_numbers = #tpu.dot_dimension_numbers<[1], [0], [0], [1], [0, 0, 1, 1], [], []>} : vector<256x12xf32>, vector<12x4xf32>, vector<256x4xf32> -> vector<256x4xf32>
    %101 = arith.addf %95, %100 : vector<256x4xf32>
    %c0_74 = arith.constant 0 : index
    %c0_75 = arith.constant 0 : index
    %102 = vector.load %arg7[%c0_74, %c0_75] : memref<1x4xf32, #tpu.memory_space<vmem>>, vector<1x4xf32>
    %103 = vector.broadcast %102 : vector<1x4xf32> to vector<256x4xf32>
    %104 = arith.addf %101, %103 : vector<256x4xf32>
    %cst_76 = arith.constant 0.000000e+00 : f32
    %105 = vector.broadcast %cst_76 : f32 to vector<256x4xf32>
    %106 = arith.maximumf %104, %105 : vector<256x4xf32>
    %c0_77 = arith.constant 0 : index
    %c0_78 = arith.constant 0 : index
    %107 = vector.load %arg8[%c0_77, %c0_78] : memref<4x16xf32, #tpu.memory_space<vmem>>, vector<4x16xf32>
    %cst_79 = arith.constant dense<0.000000e+00> : vector<256x16xf32>
    %108 = tpu.matmul %106, %107, %cst_79 {dimension_numbers = #tpu.dot_dimension_numbers<[1], [0], [0], [1], [0, 0, 1, 1], [], []>} : vector<256x4xf32>, vector<4x16xf32>, vector<256x16xf32> -> vector<256x16xf32>
    %c0_80 = arith.constant 0 : index
    %c0_81 = arith.constant 0 : index
    %109 = vector.load %arg9[%c0_80, %c0_81] : memref<1x16xf32, #tpu.memory_space<vmem>>, vector<1x16xf32>
    %110 = vector.broadcast %109 : vector<1x16xf32> to vector<256x16xf32>
    %111 = arith.addf %108, %110 : vector<256x16xf32>
    %112 = arith.addf %111, %20 : vector<256x16xf32>
    %cst_82 = arith.constant 0.000000e+00 : f32
    %113 = vector.broadcast %cst_82 : f32 to vector<256x16xf32>
    %114 = arith.maximumf %112, %113 : vector<256x16xf32>
    %115 = vector.shape_cast %114 : vector<256x16xf32> to vector<16x16x16xf32>
    %c0_83 = arith.constant 0 : index
    %c0_84 = arith.constant 0 : index
    %c0_85 = arith.constant 0 : index
    %c0_86 = arith.constant 0 : index
    %116 = vector.load %arg10[%c0_83, %c0_84, %c0_85, %c0_86] : memref<1x16x16x16xf32, #tpu.memory_space<vmem>>, vector<1x16x16x16xf32>
    %117 = vector.shape_cast %116 : vector<1x16x16x16xf32> to vector<16x16x16xf32>
    %118 = vector.shape_cast %115 : vector<16x16x16xf32> to vector<1x16x16x16xf32>
    tpu.vector_store %arg10[%c0_83, %c0_84, %c0_85, %c0_86], %118 {strides = array<i32>} : memref<1x16x16x16xf32, #tpu.memory_space<vmem>>, vector<1x16x16x16xf32>,
    return
  }
  func.func @transform_0(%arg0: i32, %arg1: i32) -> (i32, i32, i32, i32) {
    %c0_i32 = arith.constant 0 : i32
    %c0_i32_0 = arith.constant 0 : i32
    %c0_i32_1 = arith.constant 0 : i32
    return %arg0, %arg1, %c0_i32, %c0_i32_0 : i32, i32, i32, i32
  }
  func.func @transform_2(%arg0: i32, %arg1: i32) -> (i32, i32) {
    %c0_i32 = arith.constant 0 : i32
    %c0_i32_0 = arith.constant 0 : i32
    %c0_i32_1 = arith.constant 0 : i32
    return %c0_i32, %c0_i32_0 : i32, i32
  }
  func.func @transform_3(%arg0: i32, %arg1: i32) -> (i32, i32) {
    %c0_i32 = arith.constant 0 : i32
    %c0_i32_0 = arith.constant 0 : i32
    %c0_i32_1 = arith.constant 0 : i32
    return %c0_i32, %c0_i32_0 : i32, i32
  }
  func.func @transform_4(%arg0: i32, %arg1: i32) -> (i32, i32, i32) {
    %c0_i32 = arith.constant 0 : i32
    %c0_i32_0 = arith.constant 0 : i32
    %c0_i32_1 = arith.constant 0 : i32
    %c0_i32_2 = arith.constant 0 : i32
    return %c0_i32, %c0_i32_0, %c0_i32_1 : i32, i32, i32
  }
  func.func @transform_5(%arg0: i32, %arg1: i32) -> (i32, i32) {
    %c0_i32 = arith.constant 0 : i32
    %c0_i32_0 = arith.constant 0 : i32
    %c0_i32_1 = arith.constant 0 : i32
    return %c0_i32, %c0_i32_0 : i32, i32
  }
  func.func @transform_6(%arg0: i32, %arg1: i32) -> (i32, i32) {
    %c0_i32 = arith.constant 0 : i32
    %c0_i32_0 = arith.constant 0 : i32
    %c0_i32_1 = arith.constant 0 : i32
    return %c0_i32, %c0_i32_0 : i32, i32
  }
  func.func @transform_7(%arg0: i32, %arg1: i32) -> (i32, i32) {
    %c0_i32 = arith.constant 0 : i32
    %c0_i32_0 = arith.constant 0 : i32
    %c0_i32_1 = arith.constant 0 : i32
    return %c0_i32, %c0_i32_0 : i32, i32
  }
  func.func @transform_8(%arg0: i32, %arg1: i32) -> (i32, i32, i32, i32) {
    %c0_i32 = arith.constant 0 : i32
    %c0_i32_0 = arith.constant 0 : i32
    %c0_i32_1 = arith.constant 0 : i32
    return %arg0, %arg1, %c0_i32, %c0_i32_0 : i32, i32, i32, i32
  }
}

</mosaic_0001>

<llo_original>
// kernel: tpu_custom_call.1
$region0: #{tpu_custom_call.1}
  #allocation0 [shape = 'u32[]', space=smem, size = 0x4, offset = 0x4, fixed_abs, tag = 'smem constant byte address 0x4 - core index']
  #allocation1 [shape = 'u32[144,128]{1,0:T(1,128)}', space=vmem, size = 0x12000, scoped, tag = 'internal scratch']
  #allocation2 [shape = 'f32[2,16,16]{2,1,0:T(8,128)}', space=vmem, size = 0x4000, scoped, tag = 'scratch operand']
  #allocation3 [shape = 's32[2]{0}', space=sflag, size = 0x8, scoped, tag = 'scratch operand']
  #allocation4 [shape = 'f32[18,16,4]{2,1,0:T(8,128)}', space=vmem, size = 0x24000, scoped, tag = 'scratch operand']
  #allocation9 [shape = 's32[]', space=sflag, size = 0x4, offset = 0, fixed_abs, tag = 'sflag constant byte address 0x0 - dummy sync flag']
  #allocation10 [shape = 's32[]', space=sflag, size = 0x4, offset = 0, fixed_abs, tag = 'sflag constant byte address 0x0 - dummy sync flag']
  #allocation11 [shape = 'u32[]', space=smem, size = 0x4, offset = 0x44, fixed_abs, tag = 'smem constant byte address 0x44 - assertion arg 0']
  #allocation12 [shape = 'u32[]', space=smem, size = 0x4, offset = 0x48, fixed_abs, tag = 'smem constant byte address 0x48 - assertion arg 1']
  #allocation13 [shape = 's32[]', space=sflag, size = 0x4, offset = 0, fixed_abs, tag = 'sflag constant byte address 0x0 - dummy sync flag']
  #allocation14 [shape = 's32[]', space=sflag, size = 0x4, offset = 0, fixed_abs, tag = 'sflag constant byte address 0x0 - dummy sync flag']
  %s0 = inlined_call_operand.hbm [shape: f32[2,16,16,16], index: 0, kind: input, shape index: {}]
  %s1 = inlined_call_operand.hbm [shape: f32[2,16,16,16], index: 1, kind: input, shape index: {}]
  %s2 = inlined_call_operand.vmem [shape: f32[16,4], index: 2, kind: input, shape index: {}]
  %s3 = inlined_call_operand.vmem [shape: f32[1,4], index: 3, kind: input, shape index: {}]
  %s4 = inlined_call_operand.vmem [shape: f32[3,12,4], index: 4, kind: input, shape index: {}]
  %s5 = inlined_call_operand.vmem [shape: f32[1,4], index: 5, kind: input, shape index: {}]
  %s6 = inlined_call_operand.vmem [shape: f32[4,16], index: 6, kind: input, shape index: {}]
  %s7 = inlined_call_operand.vmem [shape: f32[1,16], index: 7, kind: input, shape index: {}]
  %s8 = inlined_call_operand.hbm [shape: f32[2,16,16,16], index: 8, kind: output, shape index: {}]
  %s9 = sld [smem:[#allocation0]]
  $region73: #{tpu_custom_call.1} parent=0
    _
  %s11 = ssub.s32 1, %s9
  %s12 = scalar_select 0, %s11, %s9
  $region1: #{tpu_custom_call.1} parent=0
    #allocation5 [shape = 'u8[262144]{0}', space=vmem, size = 0x40000, scoped, tag = 'input window, operand 0']
    #allocation6 [shape = 's32[2]{0}', space=sflag, size = 0x8, scoped, tag = 'scoped memory for tpu_custom_call.1']
    #allocation7 [shape = 's32[2]{0}', space=sflag, size = 0x8, scoped, tag = 'scoped memory for tpu_custom_call.1']
    #allocation8 [shape = 'u8[262144]{0}', space=vmem, size = 0x40000, scoped, tag = 'output window, operand 0']
    %13 = vsyncpa [#allocation6], 0
    %s14 = scalar_lea.sflag [#allocation6], 1
    %15 = vsyncpa %s14, 0
    %16 = vsyncpa [#allocation7], 0
    %s17 = scalar_lea.sflag [#allocation7], 1
    %18 = vsyncpa %s17, 0
    loop: start=0, step=1, limit=4
    $region2: #{tpu_custom_call.1} parent=1 // loop_pre_header
      _
    $region3: #{tpu_custom_call.1} parent=1 // loop_header
      %s20 = sphi 0, %s24
      %p21 = scmp.ge.s32.totalorder %s20, 4
      %s27 = sphi 0, %s39
      %s28 = sphi 0, %s35
      %s29 = sphi 0, %s27
      %s30 = sphi 0, %s28
      %s31 = sphi 0, %s29
      %s32 = sphi 0, %s30
      %s44 = sphi 0, %s46
      %s47 = sphi 0, %s44
      %s48 = sphi 0, %s47
      %s64 = sphi 0, %s48
      %s68 = sphi 0, %s68
      %s70 = sphi 0, %s68
      %s71 = sphi 0, %s70
      %s85 = sphi 0, %s71
      %s89 = sphi 0, %s89
      %s91 = sphi 0, %s89
      %s92 = sphi 0, %s91
      %s106 = sphi 0, %s92
      %s110 = sphi 0, %s110
      %s112 = sphi 0, %s110
      %s113 = sphi 0, %s112
      %s127 = sphi 0, %s113
      %s131 = sphi 0, %s131
      %s133 = sphi 0, %s131
      %s134 = sphi 0, %s133
      %s148 = sphi 0, %s134
      %s152 = sphi 0, %s152
      %s154 = sphi 0, %s152
      %s155 = sphi 0, %s154
      %s169 = sphi 0, %s155
      %s173 = sphi 0, %s173
      %s175 = sphi 0, %s173
      %s176 = sphi 0, %s175
      %s190 = sphi 0, %s176
      %s198 = sphi 0, %s200
      %s201 = sphi 0, %s198
      %s202 = sphi 0, %s201
      %s218 = sphi 0, %s202
    $region4: #{tpu_custom_call.1} parent=1 // loop_header_branch
      %23 = sbr.rel (%p21) target = $region8
    $region5: #{tpu_custom_call.1} parent=1 // loop_body
      %s25 = ssub.s32 %s20, 1
      %s26 = ssub.s32 %s20, 2
      %s33 = sadd.s32 1, %s28
      %p34 = scmp.ge.s32.totalorder %s33, 1
      %s35 = scalar_select %p34, 0, %s33
      %s36 = sadd.s32 1, %s27
      %s37 = scalar_select %p34, %s36, %s27
      %p38 = scmp.ge.s32.totalorder %s37, 2
      %s39 = scalar_select %p38, 0, %s37
      %s40 = ssub.s32 %s27, %s39
      %s41 = ssub.s32 %s28, %s35
      %s42 = sor.u32 %s40, %s41
      %p43 = scmp.eq.s32.totalorder %s42, 0
      %s45 = sadd.s32 %s44, 1
      %s46 = scalar_select %p43, %s44, %s45
      %p49 = pneg %p43
      %p50 = scmp.eq.s32.totalorder %s20, 1
      %p51 = por %p49, %p50
      %p52 = scmp.ne.s32.totalorder %s44, %s47
      %p53 = scmp.eq.s32.totalorder %s20, 0
      %p54 = por %p52, %p53
      %p55 = scmp.ne.s32.totalorder %s44, %s47
      %p56 = scmp.eq.s32.totalorder %s25, 1
      %p57 = por %p55, %p56
      %p58 = scmp.ne.s32.totalorder %s47, %s48
      %p59 = scmp.eq.s32.totalorder %s25, 0
      %p60 = por %p58, %p59
      %p61 = scmp.ne.s32.totalorder %s47, %s48
      %p62 = scmp.eq.s32.totalorder %s26, 1
      %p63 = por %p61, %p62
      %p65 = scmp.ne.s32.totalorder %s48, %s64
      %p66 = scmp.eq.s32.totalorder %s26, 0
      %p67 = por %p65, %p66
      %s69 = sadd.s32 %s68, 1
      %p72 = scmp.eq.s32.totalorder %s20, 1
      %p73 = scmp.ne.s32.totalorder %s68, %s70
      %p74 = scmp.eq.s32.totalorder %s20, 0
      %p75 = por %p73, %p74
      %p76 = scmp.ne.s32.totalorder %s68, %s70
      %p77 = scmp.eq.s32.totalorder %s25, 1
      %p78 = por %p76, %p77
      %p79 = scmp.ne.s32.totalorder %s70, %s71
      %p80 = scmp.eq.s32.totalorder %s25, 0
      %p81 = por %p79, %p80
      %p82 = scmp.ne.s32.totalorder %s70, %s71
      %p83 = scmp.eq.s32.totalorder %s26, 1
      %p84 = por %p82, %p83
      %p86 = scmp.ne.s32.totalorder %s71, %s85
      %p87 = scmp.eq.s32.totalorder %s26, 0
      %p88 = por %p86, %p87
      %s90 = sadd.s32 %s89, 1
      %p93 = scmp.eq.s32.totalorder %s20, 1
      %p94 = scmp.ne.s32.totalorder %s89, %s91
      %p95 = scmp.eq.s32.totalorder %s20, 0
      %p96 = por %p94, %p95
      %p97 = scmp.ne.s32.totalorder %s89, %s91
      %p98 = scmp.eq.s32.totalorder %s25, 1
      %p99 = por %p97, %p98
      %p100 = scmp.ne.s32.totalorder %s91, %s92
      %p101 = scmp.eq.s32.totalorder %s25, 0
      %p102 = por %p100, %p101
      %p103 = scmp.ne.s32.totalorder %s91, %s92
      %p104 = scmp.eq.s32.totalorder %s26, 1
      %p105 = por %p103, %p104
      %p107 = scmp.ne.s32.totalorder %s92, %s106
      %p108 = scmp.eq.s32.totalorder %s26, 0
      %p109 = por %p107, %p108
      %s111 = sadd.s32 %s110, 1
      %p114 = scmp.eq.s32.totalorder %s20, 1
      %p115 = scmp.ne.s32.totalorder %s110, %s112
      %p116 = scmp.eq.s32.totalorder %s20, 0
      %p117 = por %p115, %p116
      %p118 = scmp.ne.s32.totalorder %s110, %s112
      %p119 = scmp.eq.s32.totalorder %s25, 1
      %p120 = por %p118, %p119
      %p121 = scmp.ne.s32.totalorder %s112, %s113
      %p122 = scmp.eq.s32.totalorder %s25, 0
      %p123 = por %p121, %p122
      %p124 = scmp.ne.s32.totalorder %s112, %s113
      %p125 = scmp.eq.s32.totalorder %s26, 1
      %p126 = por %p124, %p125
      %p128 = scmp.ne.s32.totalorder %s113, %s127
      %p129 = scmp.eq.s32.totalorder %s26, 0
      %p130 = por %p128, %p129
      %s132 = sadd.s32 %s131, 1
      %p135 = scmp.eq.s32.totalorder %s20, 1
      %p136 = scmp.ne.s32.totalorder %s131, %s133
      %p137 = scmp.eq.s32.totalorder %s20, 0
      %p138 = por %p136, %p137
      %p139 = scmp.ne.s32.totalorder %s131, %s133
      %p140 = scmp.eq.s32.totalorder %s25, 1
      %p141 = por %p139, %p140
      %p142 = scmp.ne.s32.totalorder %s133, %s134
      %p143 = scmp.eq.s32.totalorder %s25, 0
      %p144 = por %p142, %p143
      %p145 = scmp.ne.s32.totalorder %s133, %s134
      %p146 = scmp.eq.s32.totalorder %s26, 1
      %p147 = por %p145, %p146
      %p149 = scmp.ne.s32.totalorder %s134, %s148
      %p150 = scmp.eq.s32.totalorder %s26, 0
      %p151 = por %p149, %p150
      %s153 = sadd.s32 %s152, 1
      %p156 = scmp.eq.s32.totalorder %s20, 1
      %p157 = scmp.ne.s32.totalorder %s152, %s154
      %p158 = scmp.eq.s32.totalorder %s20, 0
      %p159 = por %p157, %p158
      %p160 = scmp.ne.s32.totalorder %s152, %s154
      %p161 = scmp.eq.s32.totalorder %s25, 1
      %p162 = por %p160, %p161
      %p163 = scmp.ne.s32.totalorder %s154, %s155
      %p164 = scmp.eq.s32.totalorder %s25, 0
      %p165 = por %p163, %p164
      %p166 = scmp.ne.s32.totalorder %s154, %s155
      %p167 = scmp.eq.s32.totalorder %s26, 1
      %p168 = por %p166, %p167
      %p170 = scmp.ne.s32.totalorder %s155, %s169
      %p171 = scmp.eq.s32.totalorder %s26, 0
      %p172 = por %p170, %p171
      %s174 = sadd.s32 %s173, 1
      %p177 = scmp.eq.s32.totalorder %s20, 1
      %p178 = scmp.ne.s32.totalorder %s173, %s175
      %p179 = scmp.eq.s32.totalorder %s20, 0
      %p180 = por %p178, %p179
      %p181 = scmp.ne.s32.totalorder %s173, %s175
      %p182 = scmp.eq.s32.totalorder %s25, 1
      %p183 = por %p181, %p182
      %p184 = scmp.ne.s32.totalorder %s175, %s176
      %p185 = scmp.eq.s32.totalorder %s25, 0
      %p186 = por %p184, %p185
      %p187 = scmp.ne.s32.totalorder %s175, %s176
      %p188 = scmp.eq.s32.totalorder %s26, 1
      %p189 = por %p187, %p188
      %p191 = scmp.ne.s32.totalorder %s176, %s190
      %p192 = scmp.eq.s32.totalorder %s26, 0
      %p193 = por %p191, %p192
      %s194 = ssub.s32 %s27, %s39
      %s195 = ssub.s32 %s28, %s35
      %s196 = sor.u32 %s194, %s195
      %p197 = scmp.eq.s32.totalorder %s196, 0
      %s199 = sadd.s32 %s198, 1
      %s200 = scalar_select %p197, %s198, %s199
      %p203 = pneg %p197
      %p204 = scmp.eq.s32.totalorder %s20, 1
      %p205 = por %p203, %p204
      %p206 = scmp.ne.s32.totalorder %s198, %s201
      %p207 = scmp.eq.s32.totalorder %s20, 0
      %p208 = por %p206, %p207
      %p209 = scmp.ne.s32.totalorder %s198, %s201
      %p210 = scmp.eq.s32.totalorder %s25, 1
      %p211 = por %p209, %p210
      %p212 = scmp.ne.s32.totalorder %s201, %s202
      %p213 = scmp.eq.s32.totalorder %s25, 0
      %p214 = por %p212, %p213
      %p215 = scmp.ne.s32.totalorder %s201, %s202
      %p216 = scmp.eq.s32.totalorder %s26, 1
      %p217 = por %p215, %p216
      %p219 = scmp.ne.s32.totalorder %s202, %s218
      %p220 = scmp.eq.s32.totalorder %s26, 0
      %p221 = por %p219, %p220
      %p222 = scmp.le.s32.totalorder 1, %s20
      %p223 = scmp.lt.s32.totalorder %s20, 3
      %p224 = pnand %p222, %p223
      %p225 = pneg %p224
      // Predicated region
      $region9: #{tpu_custom_call.1} parent=5 // pred_check
        _
      $region10: #{tpu_custom_call.1} parent=5 // pred_check_branch
        %227 = sbr.rel (%p224) target = $region12
      $region11: #{tpu_custom_call.1} parent=5 // pred_region
        %s228 = ssub.s32 %s20, 1
        // Predicated region
        $region13: #{tpu_custom_call.1} parent=11 // pred_check
          %p229 = pneg %p81
        $region14: #{tpu_custom_call.1} parent=11 // pred_check_branch
          %231 = sbr.rel (%p229) target = $region16
        $region15: #{tpu_custom_call.1} parent=11 // pred_region
          _
        $region16: #{tpu_custom_call.1} parent=11 // pred_fallthru
          _
        // Predicated region
        $region17: #{tpu_custom_call.1} parent=11 // pred_check
          %p232 = pneg %p102
        $region18: #{tpu_custom_call.1} parent=11 // pred_check_branch
          %234 = sbr.rel (%p232) target = $region20
        $region19: #{tpu_custom_call.1} parent=11 // pred_region
          _
        $region20: #{tpu_custom_call.1} parent=11 // pred_fallthru
          _
        // Predicated region
        $region21: #{tpu_custom_call.1} parent=11 // pred_check
          %p235 = pneg %p123
        $region22: #{tpu_custom_call.1} parent=11 // pred_check_branch
          %237 = sbr.rel (%p235) target = $region24
        $region23: #{tpu_custom_call.1} parent=11 // pred_region
          _
        $region24: #{tpu_custom_call.1} parent=11 // pred_fallthru
          _
        // Predicated region
        $region25: #{tpu_custom_call.1} parent=11 // pred_check
          %p238 = pneg %p144
        $region26: #{tpu_custom_call.1} parent=11 // pred_check_branch
          %240 = sbr.rel (%p238) target = $region28
        $region27: #{tpu_custom_call.1} parent=11 // pred_region
          _
        $region28: #{tpu_custom_call.1} parent=11 // pred_fallthru
          _
        // Predicated region
        $region29: #{tpu_custom_call.1} parent=11 // pred_check
          %p241 = pneg %p165
        $region30: #{tpu_custom_call.1} parent=11 // pred_check_branch
          %243 = sbr.rel (%p241) target = $region32
        $region31: #{tpu_custom_call.1} parent=11 // pred_region
          _
        $region32: #{tpu_custom_call.1} parent=11 // pred_fallthru
          _
        // Predicated region
        $region33: #{tpu_custom_call.1} parent=11 // pred_check
          %p244 = pneg %p186
        $region34: #{tpu_custom_call.1} parent=11 // pred_check_branch
          %246 = sbr.rel (%p244) target = $region36
        $region35: #{tpu_custom_call.1} parent=11 // pred_region
          _
        $region36: #{tpu_custom_call.1} parent=11 // pred_fallthru
          _
      $region12: #{tpu_custom_call.1} parent=5 // pred_fallthru
        _
      %p247 = scmp.lt.s32.totalorder %s20, 2
      // Predicated region
      $region37: #{tpu_custom_call.1} parent=5 // pred_check
        %p248 = pneg %p247
      $region38: #{tpu_custom_call.1} parent=5 // pred_check_branch
        %250 = sbr.rel (%p248) target = $region40
      $region39: #{tpu_custom_call.1} parent=5 // pred_region
        // Predicated region
        $region41: #{tpu_custom_call.1} parent=39 // pred_check
          %p251 = pneg %p54
        $region42: #{tpu_custom_call.1} parent=39 // pred_check_branch
          %253 = sbr.rel (%p251) target = $region44
        $region43: #{tpu_custom_call.1} parent=39 // pred_region
          %s254 = sand.u32 %s44, 1
          %s255 = scalar_lea.sflag [#allocation6], %s254
          %s256 = sand.u32 %s44, 1
          %s257 = smul.addr %s256, 256
          %s258 = scalar_lea.vmem [#allocation5], %s257
          %s259 = smul.u32 16, %s28
          %s261 = ssub.s32 4096, 4096
          %262 = vsyncadd %s255, %s261
          %s263 = smul.addr %s259, 2
          %s264 = smul.addr %s27, 32
          %s265 = sadd.s32 %s263, %s264
          %s266 = smul.addr %s265, 128
          %s267 = scalar_lea.hbm %s0, %s266
          %s268 = sshll.u32 %s258, 4
          %s269 = int_to_ptr.vmem [resolvable:$true] %s268
          %274 = dma.hbm_to_vmem [thread:$0]  %s267, 4096, %s269, %s255, 128, 128, 8
        $region44: #{tpu_custom_call.1} parent=39 // pred_fallthru
          _
      $region40: #{tpu_custom_call.1} parent=5 // pred_fallthru
        _
      %p275 = scmp.le.s32.totalorder 1, %s20
      %p276 = scmp.lt.s32.totalorder %s20, 3
      %p277 = pnand %p275, %p276
      %p278 = pneg %p277
      // Predicated region
      $region45: #{tpu_custom_call.1} parent=5 // pred_check
        _
      $region46: #{tpu_custom_call.1} parent=5 // pred_check_branch
        %280 = sbr.rel (%p277) target = $region48
      $region47: #{tpu_custom_call.1} parent=5 // pred_region
        %s281 = ssub.s32 %s20, 1
        %s282 = sand.u32 %s47, 1
        %s283 = scalar_lea.sflag [#allocation6], %s282
        %s284 = sand.u32 %s47, 1
        %s285 = smul.addr %s284, 256
        %s286 = scalar_lea.vmem [#allocation5], %s285
        // Predicated region
        $region49: #{tpu_custom_call.1} parent=47 // pred_check
          %p287 = pneg %p60
        $region50: #{tpu_custom_call.1} parent=47 // pred_check_branch
          %289 = sbr.rel (%p287) target = $region52
        $region51: #{tpu_custom_call.1} parent=47 // pred_region
          %290 = dma.done %s283, 4096
        $region52: #{tpu_custom_call.1} parent=47 // pred_fallthru
          _
        %s291 = sand.u32 %s47, 1
        %s292 = scalar_lea.sflag [#allocation6], %s291
        %s293 = sand.u32 %s47, 1
        %s294 = smul.addr %s293, 256
        %s295 = scalar_lea.vmem [#allocation5], %s294
        %p296 = pneg %p60
        %p297 = pneg %p57
        %p298 = pneg %p81
        %p299 = pneg %p78
        %p300 = pneg %p102
        %p301 = pneg %p99
        %p302 = pneg %p123
        %p303 = pneg %p120
        %p304 = pneg %p144
        %p305 = pneg %p141
        %p306 = pneg %p165
        %p307 = pneg %p162
        %p308 = pneg %p186
        %p309 = pneg %p183
        %p310 = pneg %p214
        %p311 = pneg %p211
        %s312 = sand.u32 %s201, 1
        %s313 = scalar_lea.sflag [#allocation7], %s312
        %s314 = sand.u32 %s201, 1
        %s315 = smul.addr %s314, 256
        %s316 = scalar_lea.vmem [#allocation8], %s315
        %s317 = smul.u32 16, %s30
        %s318 = smul.u32 16, %s30
        %s319 = smul.u32 %s30, 16
        %s320 = ssub.s32 %s319, 1
        %p321 = scmp.gt.s32.totalorder %s320, 0
        %s322 = scalar_select %p321, %s320, 0
        %s323 = sadd.s32 %s30, 1
        %s324 = smul.u32 %s323, 16
        %p325 = scmp.lt.s32.totalorder %s324, 15
        %s326 = scalar_select %p325, %s324, 15
        %s327 = smul.u32 %s322, 16
        %s328 = smul.u32 %s29, 256
        %s329 = sadd.s32 %s327, %s328
        %s330 = smul.addr %s329, 16
        %s331 = scalar_lea.hbm %s1, %s330
        // Predicated region
        $region53: #{tpu_custom_call.1} parent=47 // pred_check
          _
        $region54: #{tpu_custom_call.1} parent=47 // pred_check_branch
          %333 = sbr.rel target = $region56
        $region55: #{tpu_custom_call.1} parent=47 // pred_region
          %334 = sst [smem:[#allocation11]] [#allocation10]
          %335 = sst [smem:[#allocation12]] [#allocation9]
        $region56: #{tpu_custom_call.1} parent=47 // pred_fallthru
          _
        %337 = shalt.err (0)
        %s339 = sshll.u32 [#allocation2], 4
        %s340 = int_to_ptr.vmem [resolvable:$true] %s339
        %342 = dma.hbm_to_vmem [thread:$0]  %s331, 256, %s340, [#allocation3]
        %s343 = smul.u32 %s326, 16
        %s344 = sadd.s32 %s343, %s328
        %s345 = smul.addr %s344, 16
        %s346 = scalar_lea.hbm %s1, %s345
        %s347 = scalar_lea.vmem [#allocation2], 16
        %s348 = scalar_lea.sflag [#allocation3], 1
        // Predicated region
        $region57: #{tpu_custom_call.1} parent=47 // pred_check
          _
        $region58: #{tpu_custom_call.1} parent=47 // pred_check_branch
          %350 = sbr.rel target = $region60
        $region59: #{tpu_custom_call.1} parent=47 // pred_region
          %351 = sst [smem:[#allocation11]] [#allocation14]
          %352 = sst [smem:[#allocation12]] [#allocation13]
        $region60: #{tpu_custom_call.1} parent=47 // pred_fallthru
          _
        %354 = shalt.err (0)
        %s356 = sshll.u32 %s347, 4
        %s357 = int_to_ptr.vmem [resolvable:$true] %s356
        %359 = dma.hbm_to_vmem [thread:$0]  %s346, 256, %s357, %s348
        %v360 = vld [vmem:[%s286] sm:$0xff]
        %v361 = vld [vmem:[%s286 + $0x8] sm:$0xff]
        %v362 = vld [vmem:[%s286 + $0x10] sm:$0xff]
        %v363 = vld [vmem:[%s286 + $0x18] sm:$0xff]
        %v364 = vld [vmem:[%s286 + $0x20] sm:$0xff]
        %v365 = vld [vmem:[%s286 + $0x28] sm:$0xff]
        %v366 = vld [vmem:[%s286 + $0x30] sm:$0xff]
        %v367 = vld [vmem:[%s286 + $0x38] sm:$0xff]
        %v368 = vld [vmem:[%s286 + $0x40] sm:$0xff]
        %v369 = vld [vmem:[%s286 + $0x48] sm:$0xff]
        %v370 = vld [vmem:[%s286 + $0x50] sm:$0xff]
        %v371 = vld [vmem:[%s286 + $0x58] sm:$0xff]
        %v372 = vld [vmem:[%s286 + $0x60] sm:$0xff]
        %v373 = vld [vmem:[%s286 + $0x68] sm:$0xff]
        %v374 = vld [vmem:[%s286 + $0x70] sm:$0xff]
        %v375 = vld [vmem:[%s286 + $0x78] sm:$0xff]
        %v376 = vld [vmem:[%s286 + $0x80] sm:$0xff]
        %v377 = vld [vmem:[%s286 + $0x88] sm:$0xff]
        %v378 = vld [vmem:[%s286 + $0x90] sm:$0xff]
        %v379 = vld [vmem:[%s286 + $0x98] sm:$0xff]
        %v380 = vld [vmem:[%s286 + $0xa0] sm:$0xff]
        %v381 = vld [vmem:[%s286 + $0xa8] sm:$0xff]
        %v382 = vld [vmem:[%s286 + $0xb0] sm:$0xff]
        %v383 = vld [vmem:[%s286 + $0xb8] sm:$0xff]
        %v384 = vld [vmem:[%s286 + $0xc0] sm:$0xff]
        %v385 = vld [vmem:[%s286 + $0xc8] sm:$0xff]
        %v386 = vld [vmem:[%s286 + $0xd0] sm:$0xff]
        %v387 = vld [vmem:[%s286 + $0xd8] sm:$0xff]
        %v388 = vld [vmem:[%s286 + $0xe0] sm:$0xff]
        %v389 = vld [vmem:[%s286 + $0xe8] sm:$0xff]
        %v390 = vld [vmem:[%s286 + $0xf0] sm:$0xff]
        %v391 = vld [vmem:[%s286 + $0xf8] sm:$0xff]
        %v392 = vld [vmem:[%s2] sm:$0xff]
        %v393 = vld [vmem:[%s2 + $0x8] sm:$0xff]
        %v394 = vld [vmem:[%s3] sm:$0x1]
        %v396 = vlaneseq
        %v397 = vshrl.u32 %v396, 7
        %v398 = vsub.s32 0, %v397
        %v399 = vrot.slane %v394, %v398
        %vm401 = vcmask 130048
        %v403 = vsel %vm401, %v360, 0
        %v406 = vsel %vm401, %v361, 0
        %v409 = vsel %vm401, %v362, 0
        %v412 = vsel %vm401, %v363, 0
        %v415 = vsel %vm401, %v364, 0
        %v418 = vsel %vm401, %v365, 0
        %v421 = vsel %vm401, %v366, 0
        %v424 = vsel %vm401, %v367, 0
        %v427 = vsel %vm401, %v368, 0
        %v430 = vsel %vm401, %v369, 0
        %v433 = vsel %vm401, %v370, 0
        %v436 = vsel %vm401, %v371, 0
        %v439 = vsel %vm401, %v372, 0
        %v442 = vsel %vm401, %v373, 0
        %v445 = vsel %vm401, %v374, 0
        %v448 = vsel %vm401, %v375, 0
        %v451 = vsel %vm401, %v376, 0
        %v454 = vsel %vm401, %v377, 0
        %v457 = vsel %vm401, %v378, 0
        %v460 = vsel %vm401, %v379, 0
        %v463 = vsel %vm401, %v380, 0
        %v466 = vsel %vm401, %v381, 0
        %v469 = vsel %vm401, %v382, 0
        %v472 = vsel %vm401, %v383, 0
        %v475 = vsel %vm401, %v384, 0
        %v478 = vsel %vm401, %v385, 0
        %v481 = vsel %vm401, %v386, 0
        %v484 = vsel %vm401, %v387, 0
        %v487 = vsel %vm401, %v388, 0
        %v490 = vsel %vm401, %v389, 0
        %v493 = vsel %vm401, %v390, 0
        %v496 = vsel %vm401, %v391, 0
        %498 = vmatprep.subr.mxu0 0.0
        %499 = vmatpush1.msra.mxu0 %v392
        %500 = vmatprep.subr.mxu0 0.0
        %501 = vmatpush1.msra.mxu0 %v393
        %502 = vmatprep.subr.mxu0 0.0
        %503 = vmatpush1.msra.mxu0 0.0
        %504 = vmatprep.subr.mxu0 0.0
        %505 = vmatpush1.msra.mxu0 0.0
        %506 = vmatprep.subr.mxu0 0.0
        %507 = vmatpush1.msra.mxu0 0.0
        %508 = vmatprep.subr.mxu0 0.0
        %509 = vmatpush1.msra.mxu0 0.0
        %510 = vmatprep.subr.mxu0 0.0
        %511 = vmatpush1.msra.mxu0 0.0
        %512 = vmatprep.subr.mxu0 0.0
        %513 = vmatpush1.msra.mxu0 0.0
        %514 = vmatprep.subr.mxu0 0.0
        %515 = vmatpush1.msra.mxu0 0.0
        %516 = vmatprep.subr.mxu0 0.0
        %517 = vmatpush1.msra.mxu0 0.0
        %518 = vmatprep.subr.mxu0 0.0
        %519 = vmatpush1.msra.mxu0 0.0
        %520 = vmatprep.subr.mxu0 0.0
        %521 = vmatpush1.msra.mxu0 0.0
        %522 = vmatprep.subr.mxu0 0.0
        %523 = vmatpush1.msra.mxu0 0.0
        %524 = vmatprep.subr.mxu0 0.0
        %525 = vmatpush1.msra.mxu0 0.0
        %526 = vmatprep.subr.mxu0 0.0
        %527 = vmatpush1.msra.mxu0 0.0
        %528 = vmatprep.subr.mxu0 0.0
        %529 = vmatpush1.msra.mxu0 0.0
        %530 = vmatprep.subr.mxu0 0.0
        %531 = vmatpush1.msra.mxu0 0.0
        %532 = vmatprep.subr.mxu0 0.0
        %533 = vmatpush1.msra.mxu0 0.0
        %534 = vmatprep.subr.mxu0 0.0
        %535 = vmatpush1.msra.mxu0 0.0
        %536 = vmatprep.subr.mxu0 0.0
        %537 = vmatpush1.msra.mxu0 0.0
        %538 = vmatprep.subr.mxu0 0.0
        %539 = vmatpush1.msra.mxu0 0.0
        %540 = vmatprep.subr.mxu0 0.0
        %541 = vmatpush1.msra.mxu0 0.0
        %542 = vmatprep.subr.mxu0 0.0
        %543 = vmatpush1.msra.mxu0 0.0
        %544 = vmatprep.subr.mxu0 0.0
        %545 = vmatpush1.msra.mxu0 0.0
        %546 = vmatprep.subr.mxu0 0.0
        %547 = vmatpush1.msra.mxu0 0.0
        %548 = vmatprep.subr.mxu0 0.0
        %549 = vmatpush1.msra.mxu0 0.0
        %550 = vmatprep.subr.mxu0 0.0
        %551 = vmatpush1.msra.mxu0 0.0
        %552 = vmatprep.subr.mxu0 0.0
        %553 = vmatpush1.msra.mxu0 0.0
        %554 = vmatprep.subr.mxu0 0.0
        %555 = vmatpush1.msra.mxu0 0.0
        %556 = vmatprep.subr.mxu0 0.0
        %557 = vmatpush1.msra.mxu0 0.0
        %558 = vmatprep.subr.mxu0 0.0
        %559 = vmatpush1.msra.mxu0 0.0
        %560 = vmatprep.subr.mxu0 0.0
        %561 = vmatpush1.msra.mxu0 0.0
        %562 = vmatprep.mubr.f32.mxu0 0.0
        %563 = vmatmul.mubr.f32.gmra.mrb[0].mxu0 %v403
        %v564 = vpop.f32.mrb[0].mxu0
        %v565 = vadd.f32 %v399, %v564
        %v566 = vpop.f32.mrb[0].mxu0
        %567 = vmatprep.mubr.f32.mxu0 0.0
        %568 = vmatmul.mubr.f32.gmra.mrb[0].mxu0 %v406
        %v569 = vpop.f32.mrb[0].mxu0
        %v570 = vadd.f32 %v399, %v569
        %v571 = vpop.f32.mrb[0].mxu0
        %572 = vmatprep.mubr.f32.mxu0 0.0
        %573 = vmatmul.mubr.f32.gmra.mrb[0].mxu0 %v409
        %v574 = vpop.f32.mrb[0].mxu0
        %v575 = vadd.f32 %v399, %v574
        %v576 = vpop.f32.mrb[0].mxu0
        %577 = vmatprep.mubr.f32.mxu0 0.0
        %578 = vmatmul.mubr.f32.gmra.mrb[0].mxu0 %v412
        %v579 = vpop.f32.mrb[0].mxu0
        %v580 = vadd.f32 %v399, %v579
        %v581 = vpop.f32.mrb[0].mxu0
        %582 = vmatprep.mubr.f32.mxu0 0.0
        %583 = vmatmul.mubr.f32.gmra.mrb[0].mxu0 %v415
        %v584 = vpop.f32.mrb[0].mxu0
        %v585 = vadd.f32 %v399, %v584
        %v586 = vpop.f32.mrb[0].mxu0
        %587 = vmatprep.mubr.f32.mxu0 0.0
        %588 = vmatmul.mubr.f32.gmra.mrb[0].mxu0 %v418
        %v589 = vpop.f32.mrb[0].mxu0
        %v590 = vadd.f32 %v399, %v589
        %v591 = vpop.f32.mrb[0].mxu0
        %592 = vmatprep.mubr.f32.mxu0 0.0
        %593 = vmatmul.mubr.f32.gmra.mrb[0].mxu0 %v421
        %v594 = vpop.f32.mrb[0].mxu0
        %v595 = vadd.f32 %v399, %v594
        %v596 = vpop.f32.mrb[0].mxu0
        %597 = vmatprep.mubr.f32.mxu0 0.0
        %598 = vmatmul.mubr.f32.gmra.mrb[0].mxu0 %v424
        %v599 = vpop.f32.mrb[0].mxu0
        %v600 = vadd.f32 %v399, %v599
        %v601 = vpop.f32.mrb[0].mxu0
        %602 = vmatprep.mubr.f32.mxu0 0.0
        %603 = vmatmul.mubr.f32.gmra.mrb[0].mxu0 %v427
        %v604 = vpop.f32.mrb[0].mxu0
        %v605 = vadd.f32 %v399, %v604
        %v606 = vpop.f32.mrb[0].mxu0
        %607 = vmatprep.mubr.f32.mxu0 0.0
        %608 = vmatmul.mubr.f32.gmra.mrb[0].mxu0 %v430
        %v609 = vpop.f32.mrb[0].mxu0
        %v610 = vadd.f32 %v399, %v609
        %v611 = vpop.f32.mrb[0].mxu0
        %612 = vmatprep.mubr.f32.mxu0 0.0
        %613 = vmatmul.mubr.f32.gmra.mrb[0].mxu0 %v433
        %v614 = vpop.f32.mrb[0].mxu0
        %v615 = vadd.f32 %v399, %v614
        %v616 = vpop.f32.mrb[0].mxu0
        %617 = vmatprep.mubr.f32.mxu0 0.0
        %618 = vmatmul.mubr.f32.gmra.mrb[0].mxu0 %v436
        %v619 = vpop.f32.mrb[0].mxu0
        %v620 = vadd.f32 %v399, %v619
        %v621 = vpop.f32.mrb[0].mxu0
        %622 = vmatprep.mubr.f32.mxu0 0.0
        %623 = vmatmul.mubr.f32.gmra.mrb[0].mxu0 %v439
        %v624 = vpop.f32.mrb[0].mxu0
        %v625 = vadd.f32 %v399, %v624
        %v626 = vpop.f32.mrb[0].mxu0
        %627 = vmatprep.mubr.f32.mxu0 0.0
        %628 = vmatmul.mubr.f32.gmra.mrb[0].mxu0 %v442
        %v629 = vpop.f32.mrb[0].mxu0
        %v630 = vadd.f32 %v399, %v629
        %v631 = vpop.f32.mrb[0].mxu0
        %632 = vmatprep.mubr.f32.mxu0 0.0
        %633 = vmatmul.mubr.f32.gmra.mrb[0].mxu0 %v445
        %v634 = vpop.f32.mrb[0].mxu0
        %v635 = vadd.f32 %v399, %v634
        %v636 = vpop.f32.mrb[0].mxu0
        %637 = vmatprep.mubr.f32.mxu0 0.0
        %638 = vmatmul.mubr.f32.gmra.mrb[0].mxu0 %v448
        %v639 = vpop.f32.mrb[0].mxu0
        %v640 = vadd.f32 %v399, %v639
        %v641 = vpop.f32.mrb[0].mxu0
        %642 = vmatprep.mubr.f32.mxu0 0.0
        %643 = vmatmul.mubr.f32.gmra.mrb[0].mxu0 %v451
        %v644 = vpop.f32.mrb[0].mxu0
        %v645 = vadd.f32 %v399, %v644
        %v646 = vpop.f32.mrb[0].mxu0
        %647 = vmatprep.mubr.f32.mxu0 0.0
        %648 = vmatmul.mubr.f32.gmra.mrb[0].mxu0 %v454
        %v649 = vpop.f32.mrb[0].mxu0
        %v650 = vadd.f32 %v399, %v649
        %v651 = vpop.f32.mrb[0].mxu0
        %652 = vmatprep.mubr.f32.mxu0 0.0
        %653 = vmatmul.mubr.f32.gmra.mrb[0].mxu0 %v457
        %v654 = vpop.f32.mrb[0].mxu0
        %v655 = vadd.f32 %v399, %v654
        %v656 = vpop.f32.mrb[0].mxu0
        %657 = vmatprep.mubr.f32.mxu0 0.0
        %658 = vmatmul.mubr.f32.gmra.mrb[0].mxu0 %v460
        %v659 = vpop.f32.mrb[0].mxu0
        %v660 = vadd.f32 %v399, %v659
        %v661 = vpop.f32.mrb[0].mxu0
        %662 = vmatprep.mubr.f32.mxu0 0.0
        %663 = vmatmul.mubr.f32.gmra.mrb[0].mxu0 %v463
        %v664 = vpop.f32.mrb[0].mxu0
        %v665 = vadd.f32 %v399, %v664
        %v666 = vpop.f32.mrb[0].mxu0
        %667 = vmatprep.mubr.f32.mxu0 0.0
        %668 = vmatmul.mubr.f32.gmra.mrb[0].mxu0 %v466
        %v669 = vpop.f32.mrb[0].mxu0
        %v670 = vadd.f32 %v399, %v669
        %v671 = vpop.f32.mrb[0].mxu0
        %672 = vmatprep.mubr.f32.mxu0 0.0
        %673 = vmatmul.mubr.f32.gmra.mrb[0].mxu0 %v469
        %v674 = vpop.f32.mrb[0].mxu0
        %v675 = vadd.f32 %v399, %v674
        %v676 = vpop.f32.mrb[0].mxu0
        %677 = vmatprep.mubr.f32.mxu0 0.0
        %678 = vmatmul.mubr.f32.gmra.mrb[0].mxu0 %v472
        %v679 = vpop.f32.mrb[0].mxu0
        %v680 = vadd.f32 %v399, %v679
        %v681 = vpop.f32.mrb[0].mxu0
        %682 = vmatprep.mubr.f32.mxu0 0.0
        %683 = vmatmul.mubr.f32.gmra.mrb[0].mxu0 %v475
        %v684 = vpop.f32.mrb[0].mxu0
        %v685 = vadd.f32 %v399, %v684
        %v686 = vpop.f32.mrb[0].mxu0
        %687 = vmatprep.mubr.f32.mxu0 0.0
        %688 = vmatmul.mubr.f32.gmra.mrb[0].mxu0 %v478
        %v689 = vpop.f32.mrb[0].mxu0
        %v690 = vadd.f32 %v399, %v689
        %v691 = vpop.f32.mrb[0].mxu0
        %692 = vmatprep.mubr.f32.mxu0 0.0
        %693 = vmatmul.mubr.f32.gmra.mrb[0].mxu0 %v481
        %v694 = vpop.f32.mrb[0].mxu0
        %v695 = vadd.f32 %v399, %v694
        %v696 = vpop.f32.mrb[0].mxu0
        %697 = vmatprep.mubr.f32.mxu0 0.0
        %698 = vmatmul.mubr.f32.gmra.mrb[0].mxu0 %v484
        %v699 = vpop.f32.mrb[0].mxu0
        %v700 = vadd.f32 %v399, %v699
        %v701 = vpop.f32.mrb[0].mxu0
        %702 = vmatprep.mubr.f32.mxu0 0.0
        %703 = vmatmul.mubr.f32.gmra.mrb[0].mxu0 %v487
        %v704 = vpop.f32.mrb[0].mxu0
        %v705 = vadd.f32 %v399, %v704
        %v706 = vpop.f32.mrb[0].mxu0
        %707 = vmatprep.mubr.f32.mxu0 0.0
        %708 = vmatmul.mubr.f32.gmra.mrb[0].mxu0 %v490
        %v709 = vpop.f32.mrb[0].mxu0
        %v710 = vadd.f32 %v399, %v709
        %v711 = vpop.f32.mrb[0].mxu0
        %712 = vmatprep.mubr.f32.mxu0 0.0
        %713 = vmatmul.mubr.f32.gmra.mrb[0].mxu0 %v493
        %v714 = vpop.f32.mrb[0].mxu0
        %v715 = vadd.f32 %v399, %v714
        %v716 = vpop.f32.mrb[0].mxu0
        %717 = vmatprep.mubr.f32.mxu0 0.0
        %718 = vmatmul.mubr.f32.gmra.mrb[0].mxu0 %v496
        %v719 = vpop.f32.mrb[0].mxu0
        %v720 = vadd.f32 %v399, %v719
        %v721 = vpop.f32.mrb[0].mxu0
        %722 = vdwg.mxu0
        %v723 = vmax.f32 %v565, 0.0
        %v724 = vmax.f32 %v570, 0.0
        %v725 = vmax.f32 %v575, 0.0
        %v726 = vmax.f32 %v580, 0.0
        %v727 = vmax.f32 %v585, 0.0
        %v728 = vmax.f32 %v590, 0.0
        %v729 = vmax.f32 %v595, 0.0
        %v730 = vmax.f32 %v600, 0.0
        %v731 = vmax.f32 %v605, 0.0
        %v732 = vmax.f32 %v610, 0.0
        %v733 = vmax.f32 %v615, 0.0
        %v734 = vmax.f32 %v620, 0.0
        %v735 = vmax.f32 %v625, 0.0
        %v736 = vmax.f32 %v630, 0.0
        %v737 = vmax.f32 %v635, 0.0
        %v738 = vmax.f32 %v640, 0.0
        %v739 = vmax.f32 %v645, 0.0
        %v740 = vmax.f32 %v650, 0.0
        %v741 = vmax.f32 %v655, 0.0
        %v742 = vmax.f32 %v660, 0.0
        %v743 = vmax.f32 %v665, 0.0
        %v744 = vmax.f32 %v670, 0.0
        %v745 = vmax.f32 %v675, 0.0
        %v746 = vmax.f32 %v680, 0.0
        %v747 = vmax.f32 %v685, 0.0
        %v748 = vmax.f32 %v690, 0.0
        %v749 = vmax.f32 %v695, 0.0
        %v750 = vmax.f32 %v700, 0.0
        %v751 = vmax.f32 %v705, 0.0
        %v752 = vmax.f32 %v710, 0.0
        %v753 = vmax.f32 %v715, 0.0
        %v754 = vmax.f32 %v720, 0.0
        %s755 = scalar_lea.vmem [#allocation4], 16
        %vm756 = vcmask 31744
        %757 = vst.msk [vmem:[%s755] sm:$0xff] %vm756, %v723
        %758 = vst.msk [vmem:[%s755 + $0x8] sm:$0xff] %vm756, %v724
        %759 = vst.msk [vmem:[%s755 + $0x10] sm:$0xff] %vm756, %v725
        %760 = vst.msk [vmem:[%s755 + $0x18] sm:$0xff] %vm756, %v726
        %761 = vst.msk [vmem:[%s755 + $0x20] sm:$0xff] %vm756, %v727
        %762 = vst.msk [vmem:[%s755 + $0x28] sm:$0xff] %vm756, %v728
        %763 = vst.msk [vmem:[%s755 + $0x30] sm:$0xff] %vm756, %v729
        %764 = vst.msk [vmem:[%s755 + $0x38] sm:$0xff] %vm756, %v730
        %765 = vst.msk [vmem:[%s755 + $0x40] sm:$0xff] %vm756, %v731
        %766 = vst.msk [vmem:[%s755 + $0x48] sm:$0xff] %vm756, %v732
        %767 = vst.msk [vmem:[%s755 + $0x50] sm:$0xff] %vm756, %v733
        %768 = vst.msk [vmem:[%s755 + $0x58] sm:$0xff] %vm756, %v734
        %769 = vst.msk [vmem:[%s755 + $0x60] sm:$0xff] %vm756, %v735
        %770 = vst.msk [vmem:[%s755 + $0x68] sm:$0xff] %vm756, %v736
        %771 = vst.msk [vmem:[%s755 + $0x70] sm:$0xff] %vm756, %v737
        %772 = vst.msk [vmem:[%s755 + $0x78] sm:$0xff] %vm756, %v738
        %773 = vst.msk [vmem:[%s755 + $0x80] sm:$0xff] %vm756, %v739
        %774 = vst.msk [vmem:[%s755 + $0x88] sm:$0xff] %vm756, %v740
        %775 = vst.msk [vmem:[%s755 + $0x90] sm:$0xff] %vm756, %v741
        %776 = vst.msk [vmem:[%s755 + $0x98] sm:$0xff] %vm756, %v742
        %777 = vst.msk [vmem:[%s755 + $0xa0] sm:$0xff] %vm756, %v743
        %778 = vst.msk [vmem:[%s755 + $0xa8] sm:$0xff] %vm756, %v744
        %779 = vst.msk [vmem:[%s755 + $0xb0] sm:$0xff] %vm756, %v745
        %780 = vst.msk [vmem:[%s755 + $0xb8] sm:$0xff] %vm756, %v746
        %781 = vst.msk [vmem:[%s755 + $0xc0] sm:$0xff] %vm756, %v747
        %782 = vst.msk [vmem:[%s755 + $0xc8] sm:$0xff] %vm756, %v748
        %783 = vst.msk [vmem:[%s755 + $0xd0] sm:$0xff] %vm756, %v749
        %784 = vst.msk [vmem:[%s755 + $0xd8] sm:$0xff] %vm756, %v750
        %785 = vst.msk [vmem:[%s755 + $0xe0] sm:$0xff] %vm756, %v751
        %786 = vst.msk [vmem:[%s755 + $0xe8] sm:$0xff] %vm756, %v752
        %787 = vst.msk [vmem:[%s755 + $0xf0] sm:$0xff] %vm756, %v753
        %788 = vst.msk [vmem:[%s755 + $0xf8] sm:$0xff] %vm756, %v754
        %s789 = smul.u32 16, 1
        %s790 = sshll.u32 %s789, 4
        %791 = dma.done [#allocation3], %s790
        %s792 = sshll.u32 %s789, 4
        %793 = dma.done %s348, %s792
        %v794 = vld [vmem:[#allocation2] sm:$0xff]
        %v795 = vld [vmem:[#allocation2 + $0x8] sm:$0xff]
        %v796 = vld [vmem:[#allocation2 + $0x10] sm:$0xff]
        %v797 = vld [vmem:[#allocation2 + $0x18] sm:$0xff]
        %v798 = vld [vmem:[%s2] sm:$0xff]
        %v799 = vld [vmem:[%s2 + $0x8] sm:$0xff]
        %v800 = vld [vmem:[%s3] sm:$0x1]
        %v802 = vlaneseq
        %v803 = vshrl.u32 %v802, 7
        %v804 = vsub.s32 0, %v803
        %v805 = vrot.slane %v800, %v804
        %v808 = vsel %vm401, %v794, 0
        %v811 = vsel %vm401, %v795, 0
        %v814 = vsel %vm401, %v796, 0
        %v817 = vsel %vm401, %v797, 0
        %819 = vmatprep.subr.mxu0 0.0
        %820 = vmatpush1.msra.mxu0 %v798
        %821 = vmatprep.subr.mxu0 0.0
        %822 = vmatpush1.msra.mxu0 %v799
        %823 = vmatprep.subr.mxu0 0.0
        %824 = vmatpush1.msra.mxu0 0.0
        %825 = vmatprep.subr.mxu0 0.0
        %826 = vmatpush1.msra.mxu0 0.0
        %827 = vmatprep.subr.mxu0 0.0
        %828 = vmatpush1.msra.mxu0 0.0
        %829 = vmatprep.subr.mxu0 0.0
        %830 = vmatpush1.msra.mxu0 0.0
        %831 = vmatprep.subr.mxu0 0.0
        %832 = vmatpush1.msra.mxu0 0.0
        %833 = vmatprep.subr.mxu0 0.0
        %834 = vmatpush1.msra.mxu0 0.0
        %835 = vmatprep.subr.mxu0 0.0
        %836 = vmatpush1.msra.mxu0 0.0
        %837 = vmatprep.subr.mxu0 0.0
        %838 = vmatpush1.msra.mxu0 0.0
        %839 = vmatprep.subr.mxu0 0.0
        %840 = vmatpush1.msra.mxu0 0.0
        %841 = vmatprep.subr.mxu0 0.0
        %842 = vmatpush1.msra.mxu0 0.0
        %843 = vmatprep.subr.mxu0 0.0
        %844 = vmatpush1.msra.mxu0 0.0
        %845 = vmatprep.subr.mxu0 0.0
        %846 = vmatpush1.msra.mxu0 0.0
        %847 = vmatprep.subr.mxu0 0.0
        %848 = vmatpush1.msra.mxu0 0.0
        %849 = vmatprep.subr.mxu0 0.0
        %850 = vmatpush1.msra.mxu0 0.0
        %851 = vmatprep.subr.mxu0 0.0
        %852 = vmatpush1.msra.mxu0 0.0
        %853 = vmatprep.subr.mxu0 0.0
        %854 = vmatpush1.msra.mxu0 0.0
        %855 = vmatprep.subr.mxu0 0.0
        %856 = vmatpush1.msra.mxu0 0.0
        %857 = vmatprep.subr.mxu0 0.0
        %858 = vmatpush1.msra.mxu0 0.0
        %859 = vmatprep.subr.mxu0 0.0
        %860 = vmatpush1.msra.mxu0 0.0
        %861 = vmatprep.subr.mxu0 0.0
        %862 = vmatpush1.msra.mxu0 0.0
        %863 = vmatprep.subr.mxu0 0.0
        %864 = vmatpush1.msra.mxu0 0.0
        %865 = vmatprep.subr.mxu0 0.0
        %866 = vmatpush1.msra.mxu0 0.0
        %867 = vmatprep.subr.mxu0 0.0
        %868 = vmatpush1.msra.mxu0 0.0
        %869 = vmatprep.subr.mxu0 0.0
        %870 = vmatpush1.msra.mxu0 0.0
        %871 = vmatprep.subr.mxu0 0.0
        %872 = vmatpush1.msra.mxu0 0.0
        %873 = vmatprep.subr.mxu0 0.0
        %874 = vmatpush1.msra.mxu0 0.0
        %875 = vmatprep.subr.mxu0 0.0
        %876 = vmatpush1.msra.mxu0 0.0
        %877 = vmatprep.subr.mxu0 0.0
        %878 = vmatpush1.msra.mxu0 0.0
        %879 = vmatprep.subr.mxu0 0.0
        %880 = vmatpush1.msra.mxu0 0.0
        %881 = vmatprep.subr.mxu0 0.0
        %882 = vmatpush1.msra.mxu0 0.0
        %883 = vmatprep.mubr.f32.mxu0 0.0
        %884 = vmatmul.mubr.f32.gmra.mrb[0].mxu0 %v808
        %v885 = vpop.f32.mrb[0].mxu0
        %v886 = vadd.f32 %v805, %v885
        %v887 = vpop.f32.mrb[0].mxu0
        %888 = vmatprep.mubr.f32.mxu0 0.0
        %889 = vmatmul.mubr.f32.gmra.mrb[0].mxu0 %v811
        %v890 = vpop.f32.mrb[0].mxu0
        %v891 = vadd.f32 %v805, %v890
        %v892 = vpop.f32.mrb[0].mxu0
        %893 = vmatprep.mubr.f32.mxu0 0.0
        %894 = vmatmul.mubr.f32.gmra.mrb[0].mxu0 %v814
        %v895 = vpop.f32.mrb[0].mxu0
        %v896 = vadd.f32 %v805, %v895
        %v897 = vpop.f32.mrb[0].mxu0
        %898 = vmatprep.mubr.f32.mxu0 0.0
        %899 = vmatmul.mubr.f32.gmra.mrb[0].mxu0 %v817
        %v900 = vpop.f32.mrb[0].mxu0
        %v901 = vadd.f32 %v805, %v900
        %v902 = vpop.f32.mrb[0].mxu0
        %903 = vdwg.mxu0
        %v904 = vmax.f32 %v886, 0.0
        %v905 = vmax.f32 %v891, 0.0
        %v906 = vmax.f32 %v896, 0.0
        %v907 = vmax.f32 %v901, 0.0
        %p908 = scmp.eq.s32.totalorder %s30, 0
        %s909 = scalar_select %p908, 1, 0
        %v910 = vstv %s909
        %vm911 = vcmp.eq.s32.totalorder %v910, 1
        %v912 = vsel %vm911, 0.0, %v904
        %v913 = vsel %vm911, 0.0, %v905
        %914 = vst.msk [vmem:[#allocation4] sm:$0xff] %vm756, %v912
        %915 = vst.msk [vmem:[#allocation4 + $0x8] sm:$0xff] %vm756, %v913
        %v916 = vsel %vm911, 0.0, %v906
        %v917 = vsel %vm911, 0.0, %v907
        %s918 = scalar_lea.vmem [#allocation4], 272
        %919 = vst.msk [vmem:[%s918] sm:$0xff] %vm756, %v916
        %920 = vst.msk [vmem:[%s918 + $0x8] sm:$0xff] %vm756, %v917
        %v921 = vld [vmem:[#allocation4] sm:$0xff]
        %v922 = vld [vmem:[#allocation4 + $0x8] sm:$0xff]
        %v923 = vld [vmem:[#allocation4 + $0x10] sm:$0xff]
        %v924 = vld [vmem:[#allocation4 + $0x18] sm:$0xff]
        %v925 = vld [vmem:[#allocation4 + $0x20] sm:$0xff]
        %v926 = vld [vmem:[#allocation4 + $0x28] sm:$0xff]
        %v927 = vld [vmem:[#allocation4 + $0x30] sm:$0xff]
        %v928 = vld [vmem:[#allocation4 + $0x38] sm:$0xff]
        %v929 = vld [vmem:[#allocation4 + $0x40] sm:$0xff]
        %v930 = vld [vmem:[#allocation4 + $0x48] sm:$0xff]
        %v931 = vld [vmem:[#allocation4 + $0x50] sm:$0xff]
        %v932 = vld [vmem:[#allocation4 + $0x58] sm:$0xff]
        %v933 = vld [vmem:[#allocation4 + $0x60] sm:$0xff]
        %v934 = vld [vmem:[#allocation4 + $0x68] sm:$0xff]
        %v935 = vld [vmem:[#allocation4 + $0x70] sm:$0xff]
        %v936 = vld [vmem:[#allocation4 + $0x78] sm:$0xff]
        %v937 = vld [vmem:[#allocation4 + $0x80] sm:$0xff]
        %v938 = vld [vmem:[#allocation4 + $0x88] sm:$0xff]
        %v939 = vld [vmem:[#allocation4 + $0x90] sm:$0xff]
        %v940 = vld [vmem:[#allocation4 + $0x98] sm:$0xff]
        %v941 = vld [vmem:[#allocation4 + $0xa0] sm:$0xff]
        %v942 = vld [vmem:[#allocation4 + $0xa8] sm:$0xff]
        %v943 = vld [vmem:[#allocation4 + $0xb0] sm:$0xff]
        %v944 = vld [vmem:[#allocation4 + $0xb8] sm:$0xff]
        %v945 = vld [vmem:[#allocation4 + $0xc0] sm:$0xff]
        %v946 = vld [vmem:[#allocation4 + $0xc8] sm:$0xff]
        %v947 = vld [vmem:[#allocation4 + $0xd0] sm:$0xff]
        %v948 = vld [vmem:[#allocation4 + $0xd8] sm:$0xff]
        %v949 = vld [vmem:[#allocation4 + $0xe0] sm:$0xff]
        %v950 = vld [vmem:[#allocation4 + $0xe8] sm:$0xff]
        %v951 = vld [vmem:[#allocation4 + $0xf0] sm:$0xff]
        %v952 = vld [vmem:[#allocation4 + $0xf8] sm:$0xff]
        %v953 = vld [vmem:[#allocation4 + $0x100] sm:$0xff]
        %v954 = vld [vmem:[#allocation4 + $0x108] sm:$0xff]
        %v955 = vld [vmem:[#allocation4 + $0x110] sm:$0xff]
        %v956 = vld [vmem:[#allocation4 + $0x118] sm:$0xff]
        %v957 = vlaneseq
        %v958 = vshrl.u32 %v957, 7
        %v959 = vadd.s32 %v958, 8
        %vm960 = vcmp.eq.s32.totalorder %v958, 0
        %vm961 = vcmp.eq.s32.totalorder %v959, 0
        %v962 = vrot.slane %v921, 7
        %v963 = vrot.slane %v923, 7
        %v964 = vrot.slane %v925, 7
        %v965 = vrot.slane %v927, 7
        %v966 = vrot.slane %v929, 7
        %v967 = vrot.slane %v931, 7
        %v968 = vrot.slane %v933, 7
        %v969 = vrot.slane %v935, 7
        %v970 = vrot.slane %v937, 7
        %v971 = vrot.slane %v939, 7
        %v972 = vrot.slane %v941, 7
        %v973 = vrot.slane %v943, 7
        %v974 = vrot.slane %v945, 7
        %v975 = vrot.slane %v947, 7
        %v976 = vrot.slane %v949, 7
        %v977 = vrot.slane %v951, 7
        %v978 = vrot.slane %v953, 7
        %v979 = vrot.slane %v955, 7
        %v980 = vrot.slane %v922, 7
        %v981 = vrot.slane %v924, 7
        %v982 = vrot.slane %v926, 7
        %v983 = vrot.slane %v928, 7
        %v984 = vrot.slane %v930, 7
        %v985 = vrot.slane %v932, 7
        %v986 = vrot.slane %v934, 7
        %v987 = vrot.slane %v936, 7
        %v988 = vrot.slane %v938, 7
        %v989 = vrot.slane %v940, 7
        %v990 = vrot.slane %v942, 7
        %v991 = vrot.slane %v944, 7
        %v992 = vrot.slane %v946, 7
        %v993 = vrot.slane %v948, 7
        %v994 = vrot.slane %v950, 7
        %v995 = vrot.slane %v952, 7
        %v996 = vrot.slane %v954, 7
        %v997 = vrot.slane %v956, 7
        %vm998 = vcmp.lt.s32.totalorder %v958, 1
        %v999 = vsel %vm998, %v962, %v980
        %v1000 = vsel %vm998, %v963, %v981
        %v1001 = vsel %vm998, %v964, %v982
        %v1002 = vsel %vm998, %v965, %v983
        %v1003 = vsel %vm998, %v966, %v984
        %v1004 = vsel %vm998, %v967, %v985
        %v1005 = vsel %vm998, %v968, %v986
        %v1006 = vsel %vm998, %v969, %v987
        %v1007 = vsel %vm998, %v970, %v988
        %v1008 = vsel %vm998, %v971, %v989
        %v1009 = vsel %vm998, %v972, %v990
        %v1010 = vsel %vm998, %v973, %v991
        %v1011 = vsel %vm998, %v974, %v992
        %v1012 = vsel %vm998, %v975, %v993
        %v1013 = vsel %vm998, %v976, %v994
        %v1014 = vsel %vm998, %v977, %v995
        %v1015 = vsel %vm998, %v978, %v996
        %v1016 = vsel %vm998, %v979, %v997
        %v1017 = vsel %vm998, %v980, %v962
        %v1018 = vsel %vm998, %v981, %v963
        %v1019 = vsel %vm998, %v982, %v964
        %v1020 = vsel %vm998, %v983, %v965
        %v1021 = vsel %vm998, %v984, %v966
        %v1022 = vsel %vm998, %v985, %v967
        %v1023 = vsel %vm998, %v986, %v968
        %v1024 = vsel %vm998, %v987, %v969
        %v1025 = vsel %vm998, %v988, %v970
        %v1026 = vsel %vm998, %v989, %v971
        %v1027 = vsel %vm998, %v990, %v972
        %v1028 = vsel %vm998, %v991, %v973
        %v1029 = vsel %vm998, %v992, %v974
        %v1030 = vsel %vm998, %v993, %v975
        %v1031 = vsel %vm998, %v994, %v976
        %v1032 = vsel %vm998, %v995, %v977
        %v1033 = vsel %vm998, %v996, %v978
        %v1034 = vsel %vm998, %v997, %v979
        %v1035 = vsel %vm960, 1, 0
        %v1036 = vsel %vm961, 1, 0
        %vm1037 = vcmp.eq.s32.totalorder %v1035, 1
        %vm1038 = vcmp.eq.s32.totalorder %v1036, 1
        %v1039 = vsel %vm1037, 0.0, %v1017
        %v1040 = vsel %vm1038, 0.0, %v999
        %v1041 = vsel %vm1037, 0.0, %v1018
        %v1042 = vsel %vm1038, 0.0, %v1000
        %v1043 = vsel %vm1037, 0.0, %v1019
        %v1044 = vsel %vm1038, 0.0, %v1001
        %v1045 = vsel %vm1037, 0.0, %v1020
        %v1046 = vsel %vm1038, 0.0, %v1002
        %v1047 = vsel %vm1037, 0.0, %v1021
        %v1048 = vsel %vm1038, 0.0, %v1003
        %v1049 = vsel %vm1037, 0.0, %v1022
        %v1050 = vsel %vm1038, 0.0, %v1004
        %v1051 = vsel %vm1037, 0.0, %v1023
        %v1052 = vsel %vm1038, 0.0, %v1005
        %v1053 = vsel %vm1037, 0.0, %v1024
        %v1054 = vsel %vm1038, 0.0, %v1006
        %v1055 = vsel %vm1037, 0.0, %v1025
        %v1056 = vsel %vm1038, 0.0, %v1007
        %v1057 = vsel %vm1037, 0.0, %v1026
        %v1058 = vsel %vm1038, 0.0, %v1008
        %v1059 = vsel %vm1037, 0.0, %v1027
        %v1060 = vsel %vm1038, 0.0, %v1009
        %v1061 = vsel %vm1037, 0.0, %v1028
        %v1062 = vsel %vm1038, 0.0, %v1010
        %v1063 = vsel %vm1037, 0.0, %v1029
        %v1064 = vsel %vm1038, 0.0, %v1011
        %v1065 = vsel %vm1037, 0.0, %v1030
        %v1066 = vsel %vm1038, 0.0, %v1012
        %v1067 = vsel %vm1037, 0.0, %v1031
        %v1068 = vsel %vm1038, 0.0, %v1013
        %v1069 = vsel %vm1037, 0.0, %v1032
        %v1070 = vsel %vm1038, 0.0, %v1014
        %v1071 = vsel %vm1037, 0.0, %v1033
        %v1072 = vsel %vm1038, 0.0, %v1015
        %v1073 = vsel %vm1037, 0.0, %v1034
        %v1074 = vsel %vm1038, 0.0, %v1016
        %vm1075 = vcmp.eq.s32.totalorder %v958, 15
        %vm1076 = vcmp.eq.s32.totalorder %v959, 15
        %v1077 = vrot.slane %v921, 1
        %v1078 = vrot.slane %v923, 1
        %v1079 = vrot.slane %v925, 1
        %v1080 = vrot.slane %v927, 1
        %v1081 = vrot.slane %v929, 1
        %v1082 = vrot.slane %v931, 1
        %v1083 = vrot.slane %v933, 1
        %v1084 = vrot.slane %v935, 1
        %v1085 = vrot.slane %v937, 1
        %v1086 = vrot.slane %v939, 1
        %v1087 = vrot.slane %v941, 1
        %v1088 = vrot.slane %v943, 1
        %v1089 = vrot.slane %v945, 1
        %v1090 = vrot.slane %v947, 1
        %v1091 = vrot.slane %v949, 1
        %v1092 = vrot.slane %v951, 1
        %v1093 = vrot.slane %v953, 1
        %v1094 = vrot.slane %v955, 1
        %v1095 = vrot.slane %v922, 1
        %v1096 = vrot.slane %v924, 1
        %v1097 = vrot.slane %v926, 1
        %v1098 = vrot.slane %v928, 1
        %v1099 = vrot.slane %v930, 1
        %v1100 = vrot.slane %v932, 1
        %v1101 = vrot.slane %v934, 1
        %v1102 = vrot.slane %v936, 1
        %v1103 = vrot.slane %v938, 1
        %v1104 = vrot.slane %v940, 1
        %v1105 = vrot.slane %v942, 1
        %v1106 = vrot.slane %v944, 1
        %v1107 = vrot.slane %v946, 1
        %v1108 = vrot.slane %v948, 1
        %v1109 = vrot.slane %v950, 1
        %v1110 = vrot.slane %v952, 1
        %v1111 = vrot.slane %v954, 1
        %v1112 = vrot.slane %v956, 1
        %vm1113 = vcmp.lt.s32.totalorder %v958, 7
        %v1114 = vsel %vm1113, %v1077, %v1095
        %v1115 = vsel %vm1113, %v1078, %v1096
        %v1116 = vsel %vm1113, %v1079, %v1097
        %v1117 = vsel %vm1113, %v1080, %v1098
        %v1118 = vsel %vm1113, %v1081, %v1099
        %v1119 = vsel %vm1113, %v1082, %v1100
        %v1120 = vsel %vm1113, %v1083, %v1101
        %v1121 = vsel %vm1113, %v1084, %v1102
        %v1122 = vsel %vm1113, %v1085, %v1103
        %v1123 = vsel %vm1113, %v1086, %v1104
        %v1124 = vsel %vm1113, %v1087, %v1105
        %v1125 = vsel %vm1113, %v1088, %v1106
        %v1126 = vsel %vm1113, %v1089, %v1107
        %v1127 = vsel %vm1113, %v1090, %v1108
        %v1128 = vsel %vm1113, %v1091, %v1109
        %v1129 = vsel %vm1113, %v1092, %v1110
        %v1130 = vsel %vm1113, %v1093, %v1111
        %v1131 = vsel %vm1113, %v1094, %v1112
        %v1132 = vsel %vm1113, %v1095, %v1077
        %v1133 = vsel %vm1113, %v1096, %v1078
        %v1134 = vsel %vm1113, %v1097, %v1079
        %v1135 = vsel %vm1113, %v1098, %v1080
        %v1136 = vsel %vm1113, %v1099, %v1081
        %v1137 = vsel %vm1113, %v1100, %v1082
        %v1138 = vsel %vm1113, %v1101, %v1083
        %v1139 = vsel %vm1113, %v1102, %v1084
        %v1140 = vsel %vm1113, %v1103, %v1085
        %v1141 = vsel %vm1113, %v1104, %v1086
        %v1142 = vsel %vm1113, %v1105, %v1087
        %v1143 = vsel %vm1113, %v1106, %v1088
        %v1144 = vsel %vm1113, %v1107, %v1089
        %v1145 = vsel %vm1113, %v1108, %v1090
        %v1146 = vsel %vm1113, %v1109, %v1091
        %v1147 = vsel %vm1113, %v1110, %v1092
        %v1148 = vsel %vm1113, %v1111, %v1093
        %v1149 = vsel %vm1113, %v1112, %v1094
        %v1150 = vsel %vm1075, 1, 0
        %v1151 = vsel %vm1076, 1, 0
        %vm1152 = vcmp.eq.s32.totalorder %v1150, 1
        %vm1153 = vcmp.eq.s32.totalorder %v1151, 1
        %v1154 = vsel %vm1152, 0.0, %v1114
        %v1155 = vsel %vm1153, 0.0, %v1132
        %v1156 = vsel %vm1152, 0.0, %v1115
        %v1157 = vsel %vm1153, 0.0, %v1133
        %v1158 = vsel %vm1152, 0.0, %v1116
        %v1159 = vsel %vm1153, 0.0, %v1134
        %v1160 = vsel %vm1152, 0.0, %v1117
        %v1161 = vsel %vm1153, 0.0, %v1135
        %v1162 = vsel %vm1152, 0.0, %v1118
        %v1163 = vsel %vm1153, 0.0, %v1136
        %v1164 = vsel %vm1152, 0.0, %v1119
        %v1165 = vsel %vm1153, 0.0, %v1137
        %v1166 = vsel %vm1152, 0.0, %v1120
        %v1167 = vsel %vm1153, 0.0, %v1138
        %v1168 = vsel %vm1152, 0.0, %v1121
        %v1169 = vsel %vm1153, 0.0, %v1139
        %v1170 = vsel %vm1152, 0.0, %v1122
        %v1171 = vsel %vm1153, 0.0, %v1140
        %v1172 = vsel %vm1152, 0.0, %v1123
        %v1173 = vsel %vm1153, 0.0, %v1141
        %v1174 = vsel %vm1152, 0.0, %v1124
        %v1175 = vsel %vm1153, 0.0, %v1142
        %v1176 = vsel %vm1152, 0.0, %v1125
        %v1177 = vsel %vm1153, 0.0, %v1143
        %v1178 = vsel %vm1152, 0.0, %v1126
        %v1179 = vsel %vm1153, 0.0, %v1144
        %v1180 = vsel %vm1152, 0.0, %v1127
        %v1181 = vsel %vm1153, 0.0, %v1145
        %v1182 = vsel %vm1152, 0.0, %v1128
        %v1183 = vsel %vm1153, 0.0, %v1146
        %v1184 = vsel %vm1152, 0.0, %v1129
        %v1185 = vsel %vm1153, 0.0, %v1147
        %v1186 = vsel %vm1152, 0.0, %v1130
        %v1187 = vsel %vm1153, 0.0, %v1148
        %v1188 = vsel %vm1152, 0.0, %v1131
        %v1189 = vsel %vm1153, 0.0, %v1149
        %1226 = vrot.lane.b32.xlu0 %v921, 4
        %v1227 = vpop.permute.xlu0 %1226
        %1228 = vrot.lane.b32.xlu0 %v922, 4
        %v1229 = vpop.permute.xlu0 %1228
        %1230 = vrot.lane.b32.xlu0 %v923, 4
        %v1231 = vpop.permute.xlu0 %1230
        %1232 = vrot.lane.b32.xlu0 %v924, 4
        %v1233 = vpop.permute.xlu0 %1232
        %1234 = vrot.lane.b32.xlu0 %v925, 4
        %v1235 = vpop.permute.xlu0 %1234
        %1236 = vrot.lane.b32.xlu0 %v926, 4
        %v1237 = vpop.permute.xlu0 %1236
        %1238 = vrot.lane.b32.xlu0 %v927, 4
        %v1239 = vpop.permute.xlu0 %1238
        %1240 = vrot.lane.b32.xlu0 %v928, 4
        %v1241 = vpop.permute.xlu0 %1240
        %1242 = vrot.lane.b32.xlu0 %v929, 4
        %v1243 = vpop.permute.xlu0 %1242
        %1244 = vrot.lane.b32.xlu0 %v930, 4
        %v1245 = vpop.permute.xlu0 %1244
        %1246 = vrot.lane.b32.xlu0 %v931, 4
        %v1247 = vpop.permute.xlu0 %1246
        %1248 = vrot.lane.b32.xlu0 %v932, 4
        %v1249 = vpop.permute.xlu0 %1248
        %1250 = vrot.lane.b32.xlu0 %v933, 4
        %v1251 = vpop.permute.xlu0 %1250
        %1252 = vrot.lane.b32.xlu0 %v934, 4
        %v1253 = vpop.permute.xlu0 %1252
        %1254 = vrot.lane.b32.xlu0 %v935, 4
        %v1255 = vpop.permute.xlu0 %1254
        %1256 = vrot.lane.b32.xlu0 %v936, 4
        %v1257 = vpop.permute.xlu0 %1256
        %1258 = vrot.lane.b32.xlu0 %v937, 4
        %v1259 = vpop.permute.xlu0 %1258
        %1260 = vrot.lane.b32.xlu0 %v938, 4
        %v1261 = vpop.permute.xlu0 %1260
        %1262 = vrot.lane.b32.xlu0 %v939, 4
        %v1263 = vpop.permute.xlu0 %1262
        %1264 = vrot.lane.b32.xlu0 %v940, 4
        %v1265 = vpop.permute.xlu0 %1264
        %1266 = vrot.lane.b32.xlu0 %v941, 4
        %v1267 = vpop.permute.xlu0 %1266
        %1268 = vrot.lane.b32.xlu0 %v942, 4
        %v1269 = vpop.permute.xlu0 %1268
        %1270 = vrot.lane.b32.xlu0 %v943, 4
        %v1271 = vpop.permute.xlu0 %1270
        %1272 = vrot.lane.b32.xlu0 %v944, 4
        %v1273 = vpop.permute.xlu0 %1272
        %1274 = vrot.lane.b32.xlu0 %v945, 4
        %v1275 = vpop.permute.xlu0 %1274
        %1276 = vrot.lane.b32.xlu0 %v946, 4
        %v1277 = vpop.permute.xlu0 %1276
        %1278 = vrot.lane.b32.xlu0 %v947, 4
        %v1279 = vpop.permute.xlu0 %1278
        %1280 = vrot.lane.b32.xlu0 %v948, 4
        %v1281 = vpop.permute.xlu0 %1280
        %1282 = vrot.lane.b32.xlu0 %v949, 4
        %v1283 = vpop.permute.xlu0 %1282
        %1284 = vrot.lane.b32.xlu0 %v950, 4
        %v1285 = vpop.permute.xlu0 %1284
        %1286 = vrot.lane.b32.xlu0 %v951, 4
        %v1287 = vpop.permute.xlu0 %1286
        %1288 = vrot.lane.b32.xlu0 %v952, 4
        %v1289 = vpop.permute.xlu0 %1288
        %1290 = vrot.lane.b32.xlu0 %v953, 4
        %v1291 = vpop.permute.xlu0 %1290
        %1292 = vrot.lane.b32.xlu0 %v954, 4
        %v1293 = vpop.permute.xlu0 %1292
        %1294 = vrot.lane.b32.xlu0 %v955, 4
        %v1295 = vpop.permute.xlu0 %1294
        %1296 = vrot.lane.b32.xlu0 %v956, 4
        %v1297 = vpop.permute.xlu0 %1296
        %1370 = vrot.lane.b32.xlu0 %v1154, 8
        %v1371 = vpop.permute.xlu0 %1370
        %1372 = vrot.lane.b32.xlu0 %v1155, 8
        %v1373 = vpop.permute.xlu0 %1372
        %1374 = vrot.lane.b32.xlu0 %v1156, 8
        %v1375 = vpop.permute.xlu0 %1374
        %1376 = vrot.lane.b32.xlu0 %v1157, 8
        %v1377 = vpop.permute.xlu0 %1376
        %1378 = vrot.lane.b32.xlu0 %v1158, 8
        %v1379 = vpop.permute.xlu0 %1378
        %1380 = vrot.lane.b32.xlu0 %v1159, 8
        %v1381 = vpop.permute.xlu0 %1380
        %1382 = vrot.lane.b32.xlu0 %v1160, 8
        %v1383 = vpop.permute.xlu0 %1382
        %1384 = vrot.lane.b32.xlu0 %v1161, 8
        %v1385 = vpop.permute.xlu0 %1384
        %1386 = vrot.lane.b32.xlu0 %v1162, 8
        %v1387 = vpop.permute.xlu0 %1386
        %1388 = vrot.lane.b32.xlu0 %v1163, 8
        %v1389 = vpop.permute.xlu0 %1388
        %1390 = vrot.lane.b32.xlu0 %v1164, 8
        %v1391 = vpop.permute.xlu0 %1390
        %1392 = vrot.lane.b32.xlu0 %v1165, 8
        %v1393 = vpop.permute.xlu0 %1392
        %1394 = vrot.lane.b32.xlu0 %v1166, 8
        %v1395 = vpop.permute.xlu0 %1394
        %1396 = vrot.lane.b32.xlu0 %v1167, 8
        %v1397 = vpop.permute.xlu0 %1396
        %1398 = vrot.lane.b32.xlu0 %v1168, 8
        %v1399 = vpop.permute.xlu0 %1398
        %1400 = vrot.lane.b32.xlu0 %v1169, 8
        %v1401 = vpop.permute.xlu0 %1400
        %1402 = vrot.lane.b32.xlu0 %v1170, 8
        %v1403 = vpop.permute.xlu0 %1402
        %1404 = vrot.lane.b32.xlu0 %v1171, 8
        %v1405 = vpop.permute.xlu0 %1404
        %1406 = vrot.lane.b32.xlu0 %v1172, 8
        %v1407 = vpop.permute.xlu0 %1406
        %1408 = vrot.lane.b32.xlu0 %v1173, 8
        %v1409 = vpop.permute.xlu0 %1408
        %1410 = vrot.lane.b32.xlu0 %v1174, 8
        %v1411 = vpop.permute.xlu0 %1410
        %1412 = vrot.lane.b32.xlu0 %v1175, 8
        %v1413 = vpop.permute.xlu0 %1412
        %1414 = vrot.lane.b32.xlu0 %v1176, 8
        %v1415 = vpop.permute.xlu0 %1414
        %1416 = vrot.lane.b32.xlu0 %v1177, 8
        %v1417 = vpop.permute.xlu0 %1416
        %1418 = vrot.lane.b32.xlu0 %v1178, 8
        %v1419 = vpop.permute.xlu0 %1418
        %1420 = vrot.lane.b32.xlu0 %v1179, 8
        %v1421 = vpop.permute.xlu0 %1420
        %1422 = vrot.lane.b32.xlu0 %v1180, 8
        %v1423 = vpop.permute.xlu0 %1422
        %1424 = vrot.lane.b32.xlu0 %v1181, 8
        %v1425 = vpop.permute.xlu0 %1424
        %1426 = vrot.lane.b32.xlu0 %v1182, 8
        %v1427 = vpop.permute.xlu0 %1426
        %1428 = vrot.lane.b32.xlu0 %v1183, 8
        %v1429 = vpop.permute.xlu0 %1428
        %1430 = vrot.lane.b32.xlu0 %v1184, 8
        %v1431 = vpop.permute.xlu0 %1430
        %1432 = vrot.lane.b32.xlu0 %v1185, 8
        %v1433 = vpop.permute.xlu0 %1432
        %1434 = vrot.lane.b32.xlu0 %v1186, 8
        %v1435 = vpop.permute.xlu0 %1434
        %1436 = vrot.lane.b32.xlu0 %v1187, 8
        %v1437 = vpop.permute.xlu0 %1436
        %1438 = vrot.lane.b32.xlu0 %v1188, 8
        %v1439 = vpop.permute.xlu0 %1438
        %1440 = vrot.lane.b32.xlu0 %v1189, 8
        %v1441 = vpop.permute.xlu0 %1440
        %v1478 = vsel %vm756, %v1039, %v1227
        %v1479 = vsel %vm756, %v1040, %v1229
        %v1480 = vsel %vm756, %v1041, %v1231
        %v1481 = vsel %vm756, %v1042, %v1233
        %v1482 = vsel %vm756, %v1043, %v1235
        %v1483 = vsel %vm756, %v1044, %v1237
        %v1484 = vsel %vm756, %v1045, %v1239
        %v1485 = vsel %vm756, %v1046, %v1241
        %v1486 = vsel %vm756, %v1047, %v1243
        %v1487 = vsel %vm756, %v1048, %v1245
        %v1488 = vsel %vm756, %v1049, %v1247
        %v1489 = vsel %vm756, %v1050, %v1249
        %v1490 = vsel %vm756, %v1051, %v1251
        %v1491 = vsel %vm756, %v1052, %v1253
        %v1492 = vsel %vm756, %v1053, %v1255
        %v1493 = vsel %vm756, %v1054, %v1257
        %v1494 = vsel %vm756, %v1055, %v1259
        %v1495 = vsel %vm756, %v1056, %v1261
        %v1496 = vsel %vm756, %v1057, %v1263
        %v1497 = vsel %vm756, %v1058, %v1265
        %v1498 = vsel %vm756, %v1059, %v1267
        %v1499 = vsel %vm756, %v1060, %v1269
        %v1500 = vsel %vm756, %v1061, %v1271
        %v1501 = vsel %vm756, %v1062, %v1273
        %v1502 = vsel %vm756, %v1063, %v1275
        %v1503 = vsel %vm756, %v1064, %v1277
        %v1504 = vsel %vm756, %v1065, %v1279
        %v1505 = vsel %vm756, %v1066, %v1281
        %v1506 = vsel %vm756, %v1067, %v1283
        %v1507 = vsel %vm756, %v1068, %v1285
        %v1508 = vsel %vm756, %v1069, %v1287
        %v1509 = vsel %vm756, %v1070, %v1289
        %v1510 = vsel %vm756, %v1071, %v1291
        %v1511 = vsel %vm756, %v1072, %v1293
        %v1512 = vsel %vm756, %v1073, %v1295
        %v1513 = vsel %vm756, %v1074, %v1297
        %vm1514 = vcmask 64512
        %v1515 = vsel %vm1514, %v1478, %v1371
        %v1516 = vsel %vm1514, %v1479, %v1373
        %v1517 = vsel %vm1514, %v1480, %v1375
        %v1518 = vsel %vm1514, %v1481, %v1377
        %v1519 = vsel %vm1514, %v1482, %v1379
        %v1520 = vsel %vm1514, %v1483, %v1381
        %v1521 = vsel %vm1514, %v1484, %v1383
        %v1522 = vsel %vm1514, %v1485, %v1385
        %v1523 = vsel %vm1514, %v1486, %v1387
        %v1524 = vsel %vm1514, %v1487, %v1389
        %v1525 = vsel %vm1514, %v1488, %v1391
        %v1526 = vsel %vm1514, %v1489, %v1393
        %v1527 = vsel %vm1514, %v1490, %v1395
        %v1528 = vsel %vm1514, %v1491, %v1397
        %v1529 = vsel %vm1514, %v1492, %v1399
        %v1530 = vsel %vm1514, %v1493, %v1401
        %v1531 = vsel %vm1514, %v1494, %v1403
        %v1532 = vsel %vm1514, %v1495, %v1405
        %v1533 = vsel %vm1514, %v1496, %v1407
        %v1534 = vsel %vm1514, %v1497, %v1409
        %v1535 = vsel %vm1514, %v1498, %v1411
        %v1536 = vsel %vm1514, %v1499, %v1413
        %v1537 = vsel %vm1514, %v1500, %v1415
        %v1538 = vsel %vm1514, %v1501, %v1417
        %v1539 = vsel %vm1514, %v1502, %v1419
        %v1540 = vsel %vm1514, %v1503, %v1421
        %v1541 = vsel %vm1514, %v1504, %v1423
        %v1542 = vsel %vm1514, %v1505, %v1425
        %v1543 = vsel %vm1514, %v1506, %v1427
        %v1544 = vsel %vm1514, %v1507, %v1429
        %v1545 = vsel %vm1514, %v1508, %v1431
        %v1546 = vsel %vm1514, %v1509, %v1433
        %v1547 = vsel %vm1514, %v1510, %v1435
        %v1548 = vsel %vm1514, %v1511, %v1437
        %v1549 = vsel %vm1514, %v1512, %v1439
        %v1550 = vsel %vm1514, %v1513, %v1441
        %v1551 = vld [vmem:[%s4] sm:$0xff]
        %v1552 = vld [vmem:[%s4 + $0x8] sm:$0xf]
        %s1553 = scalar_lea.vmem %s4, 16
        %v1554 = vld [vmem:[%s1553] sm:$0xff]
        %v1555 = vld [vmem:[%s1553 + $0x8] sm:$0xf]
        %vm1556 = vcmask 97280
        %v1558 = vsel %vm1556, %v1517, 0
        %v1561 = vsel %vm1556, %v1518, 0
        %v1564 = vsel %vm1556, %v1519, 0
        %v1567 = vsel %vm1556, %v1520, 0
        %v1570 = vsel %vm1556, %v1521, 0
        %v1573 = vsel %vm1556, %v1522, 0
        %v1576 = vsel %vm1556, %v1523, 0
        %v1579 = vsel %vm1556, %v1524, 0
        %v1582 = vsel %vm1556, %v1525, 0
        %v1585 = vsel %vm1556, %v1526, 0
        %v1588 = vsel %vm1556, %v1527, 0
        %v1591 = vsel %vm1556, %v1528, 0
        %v1594 = vsel %vm1556, %v1529, 0
        %v1597 = vsel %vm1556, %v1530, 0
        %v1600 = vsel %vm1556, %v1531, 0
        %v1603 = vsel %vm1556, %v1532, 0
        %v1606 = vsel %vm1556, %v1533, 0
        %v1609 = vsel %vm1556, %v1534, 0
        %v1612 = vsel %vm1556, %v1535, 0
        %v1615 = vsel %vm1556, %v1536, 0
        %v1618 = vsel %vm1556, %v1537, 0
        %v1621 = vsel %vm1556, %v1538, 0
        %v1624 = vsel %vm1556, %v1539, 0
        %v1627 = vsel %vm1556, %v1540, 0
        %v1630 = vsel %vm1556, %v1541, 0
        %v1633 = vsel %vm1556, %v1542, 0
        %v1636 = vsel %vm1556, %v1543, 0
        %v1639 = vsel %vm1556, %v1544, 0
        %v1642 = vsel %vm1556, %v1545, 0
        %v1645 = vsel %vm1556, %v1546, 0
        %v1648 = vsel %vm1556, %v1547, 0
        %v1651 = vsel %vm1556, %v1548, 0
        %vm1653 = vcmask 1043456
        %v1655 = vsel %vm1653, %v1555, 0
        %1657 = vmatprep.subr.mxu0 0.0
        %1658 = vmatpush1.msra.mxu0 %v1554
        %1659 = vmatprep.subr.mxu0 0.0
        %1660 = vmatpush1.msra.mxu0 %v1655
        %1661 = vmatprep.subr.mxu0 0.0
        %1662 = vmatpush1.msra.mxu0 0.0
        %1663 = vmatprep.subr.mxu0 0.0
        %1664 = vmatpush1.msra.mxu0 0.0
        %1665 = vmatprep.subr.mxu0 0.0
        %1666 = vmatpush1.msra.mxu0 0.0
        %1667 = vmatprep.subr.mxu0 0.0
        %1668 = vmatpush1.msra.mxu0 0.0
        %1669 = vmatprep.subr.mxu0 0.0
        %1670 = vmatpush1.msra.mxu0 0.0
        %1671 = vmatprep.subr.mxu0 0.0
        %1672 = vmatpush1.msra.mxu0 0.0
        %1673 = vmatprep.subr.mxu0 0.0
        %1674 = vmatpush1.msra.mxu0 0.0
        %1675 = vmatprep.subr.mxu0 0.0
        %1676 = vmatpush1.msra.mxu0 0.0
        %1677 = vmatprep.subr.mxu0 0.0
        %1678 = vmatpush1.msra.mxu0 0.0
        %1679 = vmatprep.subr.mxu0 0.0
        %1680 = vmatpush1.msra.mxu0 0.0
        %1681 = vmatprep.subr.mxu0 0.0
        %1682 = vmatpush1.msra.mxu0 0.0
        %1683 = vmatprep.subr.mxu0 0.0
        %1684 = vmatpush1.msra.mxu0 0.0
        %1685 = vmatprep.subr.mxu0 0.0
        %1686 = vmatpush1.msra.mxu0 0.0
        %1687 = vmatprep.subr.mxu0 0.0
        %1688 = vmatpush1.msra.mxu0 0.0
        %1689 = vmatprep.subr.mxu0 0.0
        %1690 = vmatpush1.msra.mxu0 0.0
        %1691 = vmatprep.subr.mxu0 0.0
        %1692 = vmatpush1.msra.mxu0 0.0
        %1693 = vmatprep.subr.mxu0 0.0
        %1694 = vmatpush1.msra.mxu0 0.0
        %1695 = vmatprep.subr.mxu0 0.0
        %1696 = vmatpush1.msra.mxu0 0.0
        %1697 = vmatprep.subr.mxu0 0.0
        %1698 = vmatpush1.msra.mxu0 0.0
        %1699 = vmatprep.subr.mxu0 0.0
        %1700 = vmatpush1.msra.mxu0 0.0
        %1701 = vmatprep.subr.mxu0 0.0
        %1702 = vmatpush1.msra.mxu0 0.0
        %1703 = vmatprep.subr.mxu0 0.0
        %1704 = vmatpush1.msra.mxu0 0.0
        %1705 = vmatprep.subr.mxu0 0.0
        %1706 = vmatpush1.msra.mxu0 0.0
        %1707 = vmatprep.subr.mxu0 0.0
        %1708 = vmatpush1.msra.mxu0 0.0
        %1709 = vmatprep.subr.mxu0 0.0
        %1710 = vmatpush1.msra.mxu0 0.0
        %1711 = vmatprep.subr.mxu0 0.0
        %1712 = vmatpush1.msra.mxu0 0.0
        %1713 = vmatprep.subr.mxu0 0.0
        %1714 = vmatpush1.msra.mxu0 0.0
        %1715 = vmatprep.subr.mxu0 0.0
        %1716 = vmatpush1.msra.mxu0 0.0
        %1717 = vmatprep.subr.mxu0 0.0
        %1718 = vmatpush1.msra.mxu0 0.0
        %1719 = vmatprep.subr.mxu0 0.0
        %1720 = vmatpush1.msra.mxu0 0.0
        %1721 = vmatprep.mubr.f32.mxu0 0.0
        %1722 = vmatmul.mubr.f32.gmra.mrb[0].mxu0 %v1558
        %v1723 = vpop.f32.mrb[0].mxu0
        %v1724 = vadd.f32 0.0, %v1723
        %v1725 = vpop.f32.mrb[0].mxu0
        %1726 = vmatprep.mubr.f32.mxu0 0.0
        %1727 = vmatmul.mubr.f32.gmra.mrb[0].mxu0 %v1561
        %v1728 = vpop.f32.mrb[0].mxu0
        %v1729 = vadd.f32 0.0, %v1728
        %v1730 = vpop.f32.mrb[0].mxu0
        %1731 = vmatprep.mubr.f32.mxu0 0.0
        %1732 = vmatmul.mubr.f32.gmra.mrb[0].mxu0 %v1564
        %v1733 = vpop.f32.mrb[0].mxu0
        %v1734 = vadd.f32 0.0, %v1733
        %v1735 = vpop.f32.mrb[0].mxu0
        %1736 = vmatprep.mubr.f32.mxu0 0.0
        %1737 = vmatmul.mubr.f32.gmra.mrb[0].mxu0 %v1567
        %v1738 = vpop.f32.mrb[0].mxu0
        %v1739 = vadd.f32 0.0, %v1738
        %v1740 = vpop.f32.mrb[0].mxu0
        %1741 = vmatprep.mubr.f32.mxu0 0.0
        %1742 = vmatmul.mubr.f32.gmra.mrb[0].mxu0 %v1570
        %v1743 = vpop.f32.mrb[0].mxu0
        %v1744 = vadd.f32 0.0, %v1743
        %v1745 = vpop.f32.mrb[0].mxu0
        %1746 = vmatprep.mubr.f32.mxu0 0.0
        %1747 = vmatmul.mubr.f32.gmra.mrb[0].mxu0 %v1573
        %v1748 = vpop.f32.mrb[0].mxu0
        %v1749 = vadd.f32 0.0, %v1748
        %v1750 = vpop.f32.mrb[0].mxu0
        %1751 = vmatprep.mubr.f32.mxu0 0.0
        %1752 = vmatmul.mubr.f32.gmra.mrb[0].mxu0 %v1576
        %v1753 = vpop.f32.mrb[0].mxu0
        %v1754 = vadd.f32 0.0, %v1753
        %v1755 = vpop.f32.mrb[0].mxu0
        %1756 = vmatprep.mubr.f32.mxu0 0.0
        %1757 = vmatmul.mubr.f32.gmra.mrb[0].mxu0 %v1579
        %v1758 = vpop.f32.mrb[0].mxu0
        %v1759 = vadd.f32 0.0, %v1758
        %v1760 = vpop.f32.mrb[0].mxu0
        %1761 = vmatprep.mubr.f32.mxu0 0.0
        %1762 = vmatmul.mubr.f32.gmra.mrb[0].mxu0 %v1582
        %v1763 = vpop.f32.mrb[0].mxu0
        %v1764 = vadd.f32 0.0, %v1763
        %v1765 = vpop.f32.mrb[0].mxu0
        %1766 = vmatprep.mubr.f32.mxu0 0.0
        %1767 = vmatmul.mubr.f32.gmra.mrb[0].mxu0 %v1585
        %v1768 = vpop.f32.mrb[0].mxu0
        %v1769 = vadd.f32 0.0, %v1768
        %v1770 = vpop.f32.mrb[0].mxu0
        %1771 = vmatprep.mubr.f32.mxu0 0.0
        %1772 = vmatmul.mubr.f32.gmra.mrb[0].mxu0 %v1588
        %v1773 = vpop.f32.mrb[0].mxu0
        %v1774 = vadd.f32 0.0, %v1773
        %v1775 = vpop.f32.mrb[0].mxu0
        %1776 = vmatprep.mubr.f32.mxu0 0.0
        %1777 = vmatmul.mubr.f32.gmra.mrb[0].mxu0 %v1591
        %v1778 = vpop.f32.mrb[0].mxu0
        %v1779 = vadd.f32 0.0, %v1778
        %v1780 = vpop.f32.mrb[0].mxu0
        %1781 = vmatprep.mubr.f32.mxu0 0.0
        %1782 = vmatmul.mubr.f32.gmra.mrb[0].mxu0 %v1594
        %v1783 = vpop.f32.mrb[0].mxu0
        %v1784 = vadd.f32 0.0, %v1783
        %v1785 = vpop.f32.mrb[0].mxu0
        %1786 = vmatprep.mubr.f32.mxu0 0.0
        %1787 = vmatmul.mubr.f32.gmra.mrb[0].mxu0 %v1597
        %v1788 = vpop.f32.mrb[0].mxu0
        %v1789 = vadd.f32 0.0, %v1788
        %v1790 = vpop.f32.mrb[0].mxu0
        %1791 = vmatprep.mubr.f32.mxu0 0.0
        %1792 = vmatmul.mubr.f32.gmra.mrb[0].mxu0 %v1600
        %v1793 = vpop.f32.mrb[0].mxu0
        %v1794 = vadd.f32 0.0, %v1793
        %v1795 = vpop.f32.mrb[0].mxu0
        %1796 = vmatprep.mubr.f32.mxu0 0.0
        %1797 = vmatmul.mubr.f32.gmra.mrb[0].mxu0 %v1603
        %v1798 = vpop.f32.mrb[0].mxu0
        %v1799 = vadd.f32 0.0, %v1798
        %v1800 = vpop.f32.mrb[0].mxu0
        %1801 = vmatprep.mubr.f32.mxu0 0.0
        %1802 = vmatmul.mubr.f32.gmra.mrb[0].mxu0 %v1606
        %v1803 = vpop.f32.mrb[0].mxu0
        %v1804 = vadd.f32 0.0, %v1803
        %v1805 = vpop.f32.mrb[0].mxu0
        %1806 = vmatprep.mubr.f32.mxu0 0.0
        %1807 = vmatmul.mubr.f32.gmra.mrb[0].mxu0 %v1609
        %v1808 = vpop.f32.mrb[0].mxu0
        %v1809 = vadd.f32 0.0, %v1808
        %v1810 = vpop.f32.mrb[0].mxu0
        %1811 = vmatprep.mubr.f32.mxu0 0.0
        %1812 = vmatmul.mubr.f32.gmra.mrb[0].mxu0 %v1612
        %v1813 = vpop.f32.mrb[0].mxu0
        %v1814 = vadd.f32 0.0, %v1813
        %v1815 = vpop.f32.mrb[0].mxu0
        %1816 = vmatprep.mubr.f32.mxu0 0.0
        %1817 = vmatmul.mubr.f32.gmra.mrb[0].mxu0 %v1615
        %v1818 = vpop.f32.mrb[0].mxu0
        %v1819 = vadd.f32 0.0, %v1818
        %v1820 = vpop.f32.mrb[0].mxu0
        %1821 = vmatprep.mubr.f32.mxu0 0.0
        %1822 = vmatmul.mubr.f32.gmra.mrb[0].mxu0 %v1618
        %v1823 = vpop.f32.mrb[0].mxu0
        %v1824 = vadd.f32 0.0, %v1823
        %v1825 = vpop.f32.mrb[0].mxu0
        %1826 = vmatprep.mubr.f32.mxu0 0.0
        %1827 = vmatmul.mubr.f32.gmra.mrb[0].mxu0 %v1621
        %v1828 = vpop.f32.mrb[0].mxu0
        %v1829 = vadd.f32 0.0, %v1828
        %v1830 = vpop.f32.mrb[0].mxu0
        %1831 = vmatprep.mubr.f32.mxu0 0.0
        %1832 = vmatmul.mubr.f32.gmra.mrb[0].mxu0 %v1624
        %v1833 = vpop.f32.mrb[0].mxu0
        %v1834 = vadd.f32 0.0, %v1833
        %v1835 = vpop.f32.mrb[0].mxu0
        %1836 = vmatprep.mubr.f32.mxu0 0.0
        %1837 = vmatmul.mubr.f32.gmra.mrb[0].mxu0 %v1627
        %v1838 = vpop.f32.mrb[0].mxu0
        %v1839 = vadd.f32 0.0, %v1838
        %v1840 = vpop.f32.mrb[0].mxu0
        %1841 = vmatprep.mubr.f32.mxu0 0.0
        %1842 = vmatmul.mubr.f32.gmra.mrb[0].mxu0 %v1630
        %v1843 = vpop.f32.mrb[0].mxu0
        %v1844 = vadd.f32 0.0, %v1843
        %v1845 = vpop.f32.mrb[0].mxu0
        %1846 = vmatprep.mubr.f32.mxu0 0.0
        %1847 = vmatmul.mubr.f32.gmra.mrb[0].mxu0 %v1633
        %v1848 = vpop.f32.mrb[0].mxu0
        %v1849 = vadd.f32 0.0, %v1848
        %v1850 = vpop.f32.mrb[0].mxu0
        %1851 = vmatprep.mubr.f32.mxu0 0.0
        %1852 = vmatmul.mubr.f32.gmra.mrb[0].mxu0 %v1636
        %v1853 = vpop.f32.mrb[0].mxu0
        %v1854 = vadd.f32 0.0, %v1853
        %v1855 = vpop.f32.mrb[0].mxu0
        %1856 = vmatprep.mubr.f32.mxu0 0.0
        %1857 = vmatmul.mubr.f32.gmra.mrb[0].mxu0 %v1639
        %v1858 = vpop.f32.mrb[0].mxu0
        %v1859 = vadd.f32 0.0, %v1858
        %v1860 = vpop.f32.mrb[0].mxu0
        %1861 = vmatprep.mubr.f32.mxu0 0.0
        %1862 = vmatmul.mubr.f32.gmra.mrb[0].mxu0 %v1642
        %v1863 = vpop.f32.mrb[0].mxu0
        %v1864 = vadd.f32 0.0, %v1863
        %v1865 = vpop.f32.mrb[0].mxu0
        %1866 = vmatprep.mubr.f32.mxu0 0.0
        %1867 = vmatmul.mubr.f32.gmra.mrb[0].mxu0 %v1645
        %v1868 = vpop.f32.mrb[0].mxu0
        %v1869 = vadd.f32 0.0, %v1868
        %v1870 = vpop.f32.mrb[0].mxu0
        %1871 = vmatprep.mubr.f32.mxu0 0.0
        %1872 = vmatmul.mubr.f32.gmra.mrb[0].mxu0 %v1648
        %v1873 = vpop.f32.mrb[0].mxu0
        %v1874 = vadd.f32 0.0, %v1873
        %v1875 = vpop.f32.mrb[0].mxu0
        %1876 = vmatprep.mubr.f32.mxu0 0.0
        %1877 = vmatmul.mubr.f32.gmra.mrb[0].mxu0 %v1651
        %v1878 = vpop.f32.mrb[0].mxu0
        %v1879 = vadd.f32 0.0, %v1878
        %v1880 = vpop.f32.mrb[0].mxu0
        %1881 = vdwg.mxu0
        %v1883 = vsel %vm1556, %v1515, 0
        %v1886 = vsel %vm1556, %v1516, 0
        %v1889 = vsel %vm1653, %v1552, 0
        %1891 = vmatprep.subr.mxu0 0.0
        %1892 = vmatpush1.msra.mxu0 %v1551
        %1893 = vmatprep.subr.mxu0 0.0
        %1894 = vmatpush1.msra.mxu0 %v1889
        %1895 = vmatprep.subr.mxu0 0.0
        %1896 = vmatpush1.msra.mxu0 0.0
        %1897 = vmatprep.subr.mxu0 0.0
        %1898 = vmatpush1.msra.mxu0 0.0
        %1899 = vmatprep.subr.mxu0 0.0
        %1900 = vmatpush1.msra.mxu0 0.0
        %1901 = vmatprep.subr.mxu0 0.0
        %1902 = vmatpush1.msra.mxu0 0.0
        %1903 = vmatprep.subr.mxu0 0.0
        %1904 = vmatpush1.msra.mxu0 0.0
        %1905 = vmatprep.subr.mxu0 0.0
        %1906 = vmatpush1.msra.mxu0 0.0
        %1907 = vmatprep.subr.mxu0 0.0
        %1908 = vmatpush1.msra.mxu0 0.0
        %1909 = vmatprep.subr.mxu0 0.0
        %1910 = vmatpush1.msra.mxu0 0.0
        %1911 = vmatprep.subr.mxu0 0.0
        %1912 = vmatpush1.msra.mxu0 0.0
        %1913 = vmatprep.subr.mxu0 0.0
        %1914 = vmatpush1.msra.mxu0 0.0
        %1915 = vmatprep.subr.mxu0 0.0
        %1916 = vmatpush1.msra.mxu0 0.0
        %1917 = vmatprep.subr.mxu0 0.0
        %1918 = vmatpush1.msra.mxu0 0.0
        %1919 = vmatprep.subr.mxu0 0.0
        %1920 = vmatpush1.msra.mxu0 0.0
        %1921 = vmatprep.subr.mxu0 0.0
        %1922 = vmatpush1.msra.mxu0 0.0
        %1923 = vmatprep.subr.mxu0 0.0
        %1924 = vmatpush1.msra.mxu0 0.0
        %1925 = vmatprep.subr.mxu0 0.0
        %1926 = vmatpush1.msra.mxu0 0.0
        %1927 = vmatprep.subr.mxu0 0.0
        %1928 = vmatpush1.msra.mxu0 0.0
        %1929 = vmatprep.subr.mxu0 0.0
        %1930 = vmatpush1.msra.mxu0 0.0
        %1931 = vmatprep.subr.mxu0 0.0
        %1932 = vmatpush1.msra.mxu0 0.0
        %1933 = vmatprep.subr.mxu0 0.0
        %1934 = vmatpush1.msra.mxu0 0.0
        %1935 = vmatprep.subr.mxu0 0.0
        %1936 = vmatpush1.msra.mxu0 0.0
        %1937 = vmatprep.subr.mxu0 0.0
        %1938 = vmatpush1.msra.mxu0 0.0
        %1939 = vmatprep.subr.mxu0 0.0
        %1940 = vmatpush1.msra.mxu0 0.0
        %1941 = vmatprep.subr.mxu0 0.0
        %1942 = vmatpush1.msra.mxu0 0.0
        %1943 = vmatprep.subr.mxu0 0.0
        %1944 = vmatpush1.msra.mxu0 0.0
        %1945 = vmatprep.subr.mxu0 0.0
        %1946 = vmatpush1.msra.mxu0 0.0
        %1947 = vmatprep.subr.mxu0 0.0
        %1948 = vmatpush1.msra.mxu0 0.0
        %1949 = vmatprep.subr.mxu0 0.0
        %1950 = vmatpush1.msra.mxu0 0.0
        %1951 = vmatprep.subr.mxu0 0.0
        %1952 = vmatpush1.msra.mxu0 0.0
        %1953 = vmatprep.subr.mxu0 0.0
        %1954 = vmatpush1.msra.mxu0 0.0
        %1955 = vmatprep.mubr.f32.mxu0 0.0
        %1956 = vmatmul.mubr.f32.gmra.mrb[0].mxu0 %v1883
        %v1957 = vpop.f32.mrb[0].mxu0
        %v1958 = vadd.f32 %v1724, %v1957
        %v1959 = vpop.f32.mrb[0].mxu0
        %1960 = vmatprep.mubr.f32.mxu0 0.0
        %1961 = vmatmul.mubr.f32.gmra.mrb[0].mxu0 %v1886
        %v1962 = vpop.f32.mrb[0].mxu0
        %v1963 = vadd.f32 %v1729, %v1962
        %v1964 = vpop.f32.mrb[0].mxu0
        %1965 = vmatprep.mubr.f32.mxu0 0.0
        %1966 = vmatmul.mubr.f32.gmra.mrb[0].mxu0 %v1558
        %v1967 = vpop.f32.mrb[0].mxu0
        %v1968 = vadd.f32 %v1734, %v1967
        %v1969 = vpop.f32.mrb[0].mxu0
        %1970 = vmatprep.mubr.f32.mxu0 0.0
        %1971 = vmatmul.mubr.f32.gmra.mrb[0].mxu0 %v1561
        %v1972 = vpop.f32.mrb[0].mxu0
        %v1973 = vadd.f32 %v1739, %v1972
        %v1974 = vpop.f32.mrb[0].mxu0
        %1975 = vmatprep.mubr.f32.mxu0 0.0
        %1976 = vmatmul.mubr.f32.gmra.mrb[0].mxu0 %v1564
        %v1977 = vpop.f32.mrb[0].mxu0
        %v1978 = vadd.f32 %v1744, %v1977
        %v1979 = vpop.f32.mrb[0].mxu0
        %1980 = vmatprep.mubr.f32.mxu0 0.0
        %1981 = vmatmul.mubr.f32.gmra.mrb[0].mxu0 %v1567
        %v1982 = vpop.f32.mrb[0].mxu0
        %v1983 = vadd.f32 %v1749, %v1982
        %v1984 = vpop.f32.mrb[0].mxu0
        %1985 = vmatprep.mubr.f32.mxu0 0.0
        %1986 = vmatmul.mubr.f32.gmra.mrb[0].mxu0 %v1570
        %v1987 = vpop.f32.mrb[0].mxu0
        %v1988 = vadd.f32 %v1754, %v1987
        %v1989 = vpop.f32.mrb[0].mxu0
        %1990 = vmatprep.mubr.f32.mxu0 0.0
        %1991 = vmatmul.mubr.f32.gmra.mrb[0].mxu0 %v1573
        %v1992 = vpop.f32.mrb[0].mxu0
        %v1993 = vadd.f32 %v1759, %v1992
        %v1994 = vpop.f32.mrb[0].mxu0
        %1995 = vmatprep.mubr.f32.mxu0 0.0
        %1996 = vmatmul.mubr.f32.gmra.mrb[0].mxu0 %v1576
        %v1997 = vpop.f32.mrb[0].mxu0
        %v1998 = vadd.f32 %v1764, %v1997
        %v1999 = vpop.f32.mrb[0].mxu0
        %2000 = vmatprep.mubr.f32.mxu0 0.0
        %2001 = vmatmul.mubr.f32.gmra.mrb[0].mxu0 %v1579
        %v2002 = vpop.f32.mrb[0].mxu0
        %v2003 = vadd.f32 %v1769, %v2002
        %v2004 = vpop.f32.mrb[0].mxu0
        %2005 = vmatprep.mubr.f32.mxu0 0.0
        %2006 = vmatmul.mubr.f32.gmra.mrb[0].mxu0 %v1582
        %v2007 = vpop.f32.mrb[0].mxu0
        %v2008 = vadd.f32 %v1774, %v2007
        %v2009 = vpop.f32.mrb[0].mxu0
        %2010 = vmatprep.mubr.f32.mxu0 0.0
        %2011 = vmatmul.mubr.f32.gmra.mrb[0].mxu0 %v1585
        %v2012 = vpop.f32.mrb[0].mxu0
        %v2013 = vadd.f32 %v1779, %v2012
        %v2014 = vpop.f32.mrb[0].mxu0
        %2015 = vmatprep.mubr.f32.mxu0 0.0
        %2016 = vmatmul.mubr.f32.gmra.mrb[0].mxu0 %v1588
        %v2017 = vpop.f32.mrb[0].mxu0
        %v2018 = vadd.f32 %v1784, %v2017
        %v2019 = vpop.f32.mrb[0].mxu0
        %2020 = vmatprep.mubr.f32.mxu0 0.0
        %2021 = vmatmul.mubr.f32.gmra.mrb[0].mxu0 %v1591
        %v2022 = vpop.f32.mrb[0].mxu0
        %v2023 = vadd.f32 %v1789, %v2022
        %v2024 = vpop.f32.mrb[0].mxu0
        %2025 = vmatprep.mubr.f32.mxu0 0.0
        %2026 = vmatmul.mubr.f32.gmra.mrb[0].mxu0 %v1594
        %v2027 = vpop.f32.mrb[0].mxu0
        %v2028 = vadd.f32 %v1794, %v2027
        %v2029 = vpop.f32.mrb[0].mxu0
        %2030 = vmatprep.mubr.f32.mxu0 0.0
        %2031 = vmatmul.mubr.f32.gmra.mrb[0].mxu0 %v1597
        %v2032 = vpop.f32.mrb[0].mxu0
        %v2033 = vadd.f32 %v1799, %v2032
        %v2034 = vpop.f32.mrb[0].mxu0
        %2035 = vmatprep.mubr.f32.mxu0 0.0
        %2036 = vmatmul.mubr.f32.gmra.mrb[0].mxu0 %v1600
        %v2037 = vpop.f32.mrb[0].mxu0
        %v2038 = vadd.f32 %v1804, %v2037
        %v2039 = vpop.f32.mrb[0].mxu0
        %2040 = vmatprep.mubr.f32.mxu0 0.0
        %2041 = vmatmul.mubr.f32.gmra.mrb[0].mxu0 %v1603
        %v2042 = vpop.f32.mrb[0].mxu0
        %v2043 = vadd.f32 %v1809, %v2042
        %v2044 = vpop.f32.mrb[0].mxu0
        %2045 = vmatprep.mubr.f32.mxu0 0.0
        %2046 = vmatmul.mubr.f32.gmra.mrb[0].mxu0 %v1606
        %v2047 = vpop.f32.mrb[0].mxu0
        %v2048 = vadd.f32 %v1814, %v2047
        %v2049 = vpop.f32.mrb[0].mxu0
        %2050 = vmatprep.mubr.f32.mxu0 0.0
        %2051 = vmatmul.mubr.f32.gmra.mrb[0].mxu0 %v1609
        %v2052 = vpop.f32.mrb[0].mxu0
        %v2053 = vadd.f32 %v1819, %v2052
        %v2054 = vpop.f32.mrb[0].mxu0
        %2055 = vmatprep.mubr.f32.mxu0 0.0
        %2056 = vmatmul.mubr.f32.gmra.mrb[0].mxu0 %v1612
        %v2057 = vpop.f32.mrb[0].mxu0
        %v2058 = vadd.f32 %v1824, %v2057
        %v2059 = vpop.f32.mrb[0].mxu0
        %2060 = vmatprep.mubr.f32.mxu0 0.0
        %2061 = vmatmul.mubr.f32.gmra.mrb[0].mxu0 %v1615
        %v2062 = vpop.f32.mrb[0].mxu0
        %v2063 = vadd.f32 %v1829, %v2062
        %v2064 = vpop.f32.mrb[0].mxu0
        %2065 = vmatprep.mubr.f32.mxu0 0.0
        %2066 = vmatmul.mubr.f32.gmra.mrb[0].mxu0 %v1618
        %v2067 = vpop.f32.mrb[0].mxu0
        %v2068 = vadd.f32 %v1834, %v2067
        %v2069 = vpop.f32.mrb[0].mxu0
        %2070 = vmatprep.mubr.f32.mxu0 0.0
        %2071 = vmatmul.mubr.f32.gmra.mrb[0].mxu0 %v1621
        %v2072 = vpop.f32.mrb[0].mxu0
        %v2073 = vadd.f32 %v1839, %v2072
        %v2074 = vpop.f32.mrb[0].mxu0
        %2075 = vmatprep.mubr.f32.mxu0 0.0
        %2076 = vmatmul.mubr.f32.gmra.mrb[0].mxu0 %v1624
        %v2077 = vpop.f32.mrb[0].mxu0
        %v2078 = vadd.f32 %v1844, %v2077
        %v2079 = vpop.f32.mrb[0].mxu0
        %2080 = vmatprep.mubr.f32.mxu0 0.0
        %2081 = vmatmul.mubr.f32.gmra.mrb[0].mxu0 %v1627
        %v2082 = vpop.f32.mrb[0].mxu0
        %v2083 = vadd.f32 %v1849, %v2082
        %v2084 = vpop.f32.mrb[0].mxu0
        %2085 = vmatprep.mubr.f32.mxu0 0.0
        %2086 = vmatmul.mubr.f32.gmra.mrb[0].mxu0 %v1630
        %v2087 = vpop.f32.mrb[0].mxu0
        %v2088 = vadd.f32 %v1854, %v2087
        %v2089 = vpop.f32.mrb[0].mxu0
        %2090 = vmatprep.mubr.f32.mxu0 0.0
        %2091 = vmatmul.mubr.f32.gmra.mrb[0].mxu0 %v1633
        %v2092 = vpop.f32.mrb[0].mxu0
        %v2093 = vadd.f32 %v1859, %v2092
        %v2094 = vpop.f32.mrb[0].mxu0
        %2095 = vmatprep.mubr.f32.mxu0 0.0
        %2096 = vmatmul.mubr.f32.gmra.mrb[0].mxu0 %v1636
        %v2097 = vpop.f32.mrb[0].mxu0
        %v2098 = vadd.f32 %v1864, %v2097
        %v2099 = vpop.f32.mrb[0].mxu0
        %2100 = vmatprep.mubr.f32.mxu0 0.0
        %2101 = vmatmul.mubr.f32.gmra.mrb[0].mxu0 %v1639
        %v2102 = vpop.f32.mrb[0].mxu0
        %v2103 = vadd.f32 %v1869, %v2102
        %v2104 = vpop.f32.mrb[0].mxu0
        %2105 = vmatprep.mubr.f32.mxu0 0.0
        %2106 = vmatmul.mubr.f32.gmra.mrb[0].mxu0 %v1642
        %v2107 = vpop.f32.mrb[0].mxu0
        %v2108 = vadd.f32 %v1874, %v2107
        %v2109 = vpop.f32.mrb[0].mxu0
        %2110 = vmatprep.mubr.f32.mxu0 0.0
        %2111 = vmatmul.mubr.f32.gmra.mrb[0].mxu0 %v1645
        %v2112 = vpop.f32.mrb[0].mxu0
        %v2113 = vadd.f32 %v1879, %v2112
        %v2114 = vpop.f32.mrb[0].mxu0
        %2115 = vdwg.mxu0
        %s2116 = scalar_lea.vmem %s4, 32
        %v2117 = vld [vmem:[%s2116] sm:$0xff]
        %v2118 = vld [vmem:[%s2116 + $0x8] sm:$0xf]
        %v2120 = vsel %vm1556, %v1549, 0
        %v2123 = vsel %vm1556, %v1550, 0
        %v2126 = vsel %vm1653, %v2118, 0
        %2128 = vmatprep.subr.mxu0 0.0
        %2129 = vmatpush1.msra.mxu0 %v2117
        %2130 = vmatprep.subr.mxu0 0.0
        %2131 = vmatpush1.msra.mxu0 %v2126
        %2132 = vmatprep.subr.mxu0 0.0
        %2133 = vmatpush1.msra.mxu0 0.0
        %2134 = vmatprep.subr.mxu0 0.0
        %2135 = vmatpush1.msra.mxu0 0.0
        %2136 = vmatprep.subr.mxu0 0.0
        %2137 = vmatpush1.msra.mxu0 0.0
        %2138 = vmatprep.subr.mxu0 0.0
        %2139 = vmatpush1.msra.mxu0 0.0
        %2140 = vmatprep.subr.mxu0 0.0
        %2141 = vmatpush1.msra.mxu0 0.0
        %2142 = vmatprep.subr.mxu0 0.0
        %2143 = vmatpush1.msra.mxu0 0.0
        %2144 = vmatprep.subr.mxu0 0.0
        %2145 = vmatpush1.msra.mxu0 0.0
        %2146 = vmatprep.subr.mxu0 0.0
        %2147 = vmatpush1.msra.mxu0 0.0
        %2148 = vmatprep.subr.mxu0 0.0
        %2149 = vmatpush1.msra.mxu0 0.0
        %2150 = vmatprep.subr.mxu0 0.0
        %2151 = vmatpush1.msra.mxu0 0.0
        %2152 = vmatprep.subr.mxu0 0.0
        %2153 = vmatpush1.msra.mxu0 0.0
        %2154 = vmatprep.subr.mxu0 0.0
        %2155 = vmatpush1.msra.mxu0 0.0
        %2156 = vmatprep.subr.mxu0 0.0
        %2157 = vmatpush1.msra.mxu0 0.0
        %2158 = vmatprep.subr.mxu0 0.0
        %2159 = vmatpush1.msra.mxu0 0.0
        %2160 = vmatprep.subr.mxu0 0.0
        %2161 = vmatpush1.msra.mxu0 0.0
        %2162 = vmatprep.subr.mxu0 0.0
        %2163 = vmatpush1.msra.mxu0 0.0
        %2164 = vmatprep.subr.mxu0 0.0
        %2165 = vmatpush1.msra.mxu0 0.0
        %2166 = vmatprep.subr.mxu0 0.0
        %2167 = vmatpush1.msra.mxu0 0.0
        %2168 = vmatprep.subr.mxu0 0.0
        %2169 = vmatpush1.msra.mxu0 0.0
        %2170 = vmatprep.subr.mxu0 0.0
        %2171 = vmatpush1.msra.mxu0 0.0
        %2172 = vmatprep.subr.mxu0 0.0
        %2173 = vmatpush1.msra.mxu0 0.0
        %2174 = vmatprep.subr.mxu0 0.0
        %2175 = vmatpush1.msra.mxu0 0.0
        %2176 = vmatprep.subr.mxu0 0.0
        %2177 = vmatpush1.msra.mxu0 0.0
        %2178 = vmatprep.subr.mxu0 0.0
        %2179 = vmatpush1.msra.mxu0 0.0
        %2180 = vmatprep.subr.mxu0 0.0
        %2181 = vmatpush1.msra.mxu0 0.0
        %2182 = vmatprep.subr.mxu0 0.0
        %2183 = vmatpush1.msra.mxu0 0.0
        %2184 = vmatprep.subr.mxu0 0.0
        %2185 = vmatpush1.msra.mxu0 0.0
        %2186 = vmatprep.subr.mxu0 0.0
        %2187 = vmatpush1.msra.mxu0 0.0
        %2188 = vmatprep.subr.mxu0 0.0
        %2189 = vmatpush1.msra.mxu0 0.0
        %2190 = vmatprep.subr.mxu0 0.0
        %2191 = vmatpush1.msra.mxu0 0.0
        %2192 = vmatprep.mubr.f32.mxu0 0.0
        %2193 = vmatmul.mubr.f32.gmra.mrb[0].mxu0 %v1564
        %v2194 = vpop.f32.mrb[0].mxu0
        %v2195 = vadd.f32 0.0, %v2194
        %v2196 = vpop.f32.mrb[0].mxu0
        %2197 = vmatprep.mubr.f32.mxu0 0.0
        %2198 = vmatmul.mubr.f32.gmra.mrb[0].mxu0 %v1567
        %v2199 = vpop.f32.mrb[0].mxu0
        %v2200 = vadd.f32 0.0, %v2199
        %v2201 = vpop.f32.mrb[0].mxu0
        %2202 = vmatprep.mubr.f32.mxu0 0.0
        %2203 = vmatmul.mubr.f32.gmra.mrb[0].mxu0 %v1570
        %v2204 = vpop.f32.mrb[0].mxu0
        %v2205 = vadd.f32 0.0, %v2204
        %v2206 = vpop.f32.mrb[0].mxu0
        %2207 = vmatprep.mubr.f32.mxu0 0.0
        %2208 = vmatmul.mubr.f32.gmra.mrb[0].mxu0 %v1573
        %v2209 = vpop.f32.mrb[0].mxu0
        %v2210 = vadd.f32 0.0, %v2209
        %v2211 = vpop.f32.mrb[0].mxu0
        %2212 = vmatprep.mubr.f32.mxu0 0.0
        %2213 = vmatmul.mubr.f32.gmra.mrb[0].mxu0 %v1576
        %v2214 = vpop.f32.mrb[0].mxu0
        %v2215 = vadd.f32 0.0, %v2214
        %v2216 = vpop.f32.mrb[0].mxu0
        %2217 = vmatprep.mubr.f32.mxu0 0.0
        %2218 = vmatmul.mubr.f32.gmra.mrb[0].mxu0 %v1579
        %v2219 = vpop.f32.mrb[0].mxu0
        %v2220 = vadd.f32 0.0, %v2219
        %v2221 = vpop.f32.mrb[0].mxu0
        %2222 = vmatprep.mubr.f32.mxu0 0.0
        %2223 = vmatmul.mubr.f32.gmra.mrb[0].mxu0 %v1582
        %v2224 = vpop.f32.mrb[0].mxu0
        %v2225 = vadd.f32 0.0, %v2224
        %v2226 = vpop.f32.mrb[0].mxu0
        %2227 = vmatprep.mubr.f32.mxu0 0.0
        %2228 = vmatmul.mubr.f32.gmra.mrb[0].mxu0 %v1585
        %v2229 = vpop.f32.mrb[0].mxu0
        %v2230 = vadd.f32 0.0, %v2229
        %v2231 = vpop.f32.mrb[0].mxu0
        %2232 = vmatprep.mubr.f32.mxu0 0.0
        %2233 = vmatmul.mubr.f32.gmra.mrb[0].mxu0 %v1588
        %v2234 = vpop.f32.mrb[0].mxu0
        %v2235 = vadd.f32 0.0, %v2234
        %v2236 = vpop.f32.mrb[0].mxu0
        %2237 = vmatprep.mubr.f32.mxu0 0.0
        %2238 = vmatmul.mubr.f32.gmra.mrb[0].mxu0 %v1591
        %v2239 = vpop.f32.mrb[0].mxu0
        %v2240 = vadd.f32 0.0, %v2239
        %v2241 = vpop.f32.mrb[0].mxu0
        %2242 = vmatprep.mubr.f32.mxu0 0.0
        %2243 = vmatmul.mubr.f32.gmra.mrb[0].mxu0 %v1594
        %v2244 = vpop.f32.mrb[0].mxu0
        %v2245 = vadd.f32 0.0, %v2244
        %v2246 = vpop.f32.mrb[0].mxu0
        %2247 = vmatprep.mubr.f32.mxu0 0.0
        %2248 = vmatmul.mubr.f32.gmra.mrb[0].mxu0 %v1597
        %v2249 = vpop.f32.mrb[0].mxu0
        %v2250 = vadd.f32 0.0, %v2249
        %v2251 = vpop.f32.mrb[0].mxu0
        %2252 = vmatprep.mubr.f32.mxu0 0.0
        %2253 = vmatmul.mubr.f32.gmra.mrb[0].mxu0 %v1600
        %v2254 = vpop.f32.mrb[0].mxu0
        %v2255 = vadd.f32 0.0, %v2254
        %v2256 = vpop.f32.mrb[0].mxu0
        %2257 = vmatprep.mubr.f32.mxu0 0.0
        %2258 = vmatmul.mubr.f32.gmra.mrb[0].mxu0 %v1603
        %v2259 = vpop.f32.mrb[0].mxu0
        %v2260 = vadd.f32 0.0, %v2259
        %v2261 = vpop.f32.mrb[0].mxu0
        %2262 = vmatprep.mubr.f32.mxu0 0.0
        %2263 = vmatmul.mubr.f32.gmra.mrb[0].mxu0 %v1606
        %v2264 = vpop.f32.mrb[0].mxu0
        %v2265 = vadd.f32 0.0, %v2264
        %v2266 = vpop.f32.mrb[0].mxu0
        %2267 = vmatprep.mubr.f32.mxu0 0.0
        %2268 = vmatmul.mubr.f32.gmra.mrb[0].mxu0 %v1609
        %v2269 = vpop.f32.mrb[0].mxu0
        %v2270 = vadd.f32 0.0, %v2269
        %v2271 = vpop.f32.mrb[0].mxu0
        %2272 = vmatprep.mubr.f32.mxu0 0.0
        %2273 = vmatmul.mubr.f32.gmra.mrb[0].mxu0 %v1612
        %v2274 = vpop.f32.mrb[0].mxu0
        %v2275 = vadd.f32 0.0, %v2274
        %v2276 = vpop.f32.mrb[0].mxu0
        %2277 = vmatprep.mubr.f32.mxu0 0.0
        %2278 = vmatmul.mubr.f32.gmra.mrb[0].mxu0 %v1615
        %v2279 = vpop.f32.mrb[0].mxu0
        %v2280 = vadd.f32 0.0, %v2279
        %v2281 = vpop.f32.mrb[0].mxu0
        %2282 = vmatprep.mubr.f32.mxu0 0.0
        %2283 = vmatmul.mubr.f32.gmra.mrb[0].mxu0 %v1618
        %v2284 = vpop.f32.mrb[0].mxu0
        %v2285 = vadd.f32 0.0, %v2284
        %v2286 = vpop.f32.mrb[0].mxu0
        %2287 = vmatprep.mubr.f32.mxu0 0.0
        %2288 = vmatmul.mubr.f32.gmra.mrb[0].mxu0 %v1621
        %v2289 = vpop.f32.mrb[0].mxu0
        %v2290 = vadd.f32 0.0, %v2289
        %v2291 = vpop.f32.mrb[0].mxu0
        %2292 = vmatprep.mubr.f32.mxu0 0.0
        %2293 = vmatmul.mubr.f32.gmra.mrb[0].mxu0 %v1624
        %v2294 = vpop.f32.mrb[0].mxu0
        %v2295 = vadd.f32 0.0, %v2294
        %v2296 = vpop.f32.mrb[0].mxu0
        %2297 = vmatprep.mubr.f32.mxu0 0.0
        %2298 = vmatmul.mubr.f32.gmra.mrb[0].mxu0 %v1627
        %v2299 = vpop.f32.mrb[0].mxu0
        %v2300 = vadd.f32 0.0, %v2299
        %v2301 = vpop.f32.mrb[0].mxu0
        %2302 = vmatprep.mubr.f32.mxu0 0.0
        %2303 = vmatmul.mubr.f32.gmra.mrb[0].mxu0 %v1630
        %v2304 = vpop.f32.mrb[0].mxu0
        %v2305 = vadd.f32 0.0, %v2304
        %v2306 = vpop.f32.mrb[0].mxu0
        %2307 = vmatprep.mubr.f32.mxu0 0.0
        %2308 = vmatmul.mubr.f32.gmra.mrb[0].mxu0 %v1633
        %v2309 = vpop.f32.mrb[0].mxu0
        %v2310 = vadd.f32 0.0, %v2309
        %v2311 = vpop.f32.mrb[0].mxu0
        %2312 = vmatprep.mubr.f32.mxu0 0.0
        %2313 = vmatmul.mubr.f32.gmra.mrb[0].mxu0 %v1636
        %v2314 = vpop.f32.mrb[0].mxu0
        %v2315 = vadd.f32 0.0, %v2314
        %v2316 = vpop.f32.mrb[0].mxu0
        %2317 = vmatprep.mubr.f32.mxu0 0.0
        %2318 = vmatmul.mubr.f32.gmra.mrb[0].mxu0 %v1639
        %v2319 = vpop.f32.mrb[0].mxu0
        %v2320 = vadd.f32 0.0, %v2319
        %v2321 = vpop.f32.mrb[0].mxu0
        %2322 = vmatprep.mubr.f32.mxu0 0.0
        %2323 = vmatmul.mubr.f32.gmra.mrb[0].mxu0 %v1642
        %v2324 = vpop.f32.mrb[0].mxu0
        %v2325 = vadd.f32 0.0, %v2324
        %v2326 = vpop.f32.mrb[0].mxu0
        %2327 = vmatprep.mubr.f32.mxu0 0.0
        %2328 = vmatmul.mubr.f32.gmra.mrb[0].mxu0 %v1645
        %v2329 = vpop.f32.mrb[0].mxu0
        %v2330 = vadd.f32 0.0, %v2329
        %v2331 = vpop.f32.mrb[0].mxu0
        %2332 = vmatprep.mubr.f32.mxu0 0.0
        %2333 = vmatmul.mubr.f32.gmra.mrb[0].mxu0 %v1648
        %v2334 = vpop.f32.mrb[0].mxu0
        %v2335 = vadd.f32 0.0, %v2334
        %v2336 = vpop.f32.mrb[0].mxu0
        %2337 = vmatprep.mubr.f32.mxu0 0.0
        %2338 = vmatmul.mubr.f32.gmra.mrb[0].mxu0 %v1651
        %v2339 = vpop.f32.mrb[0].mxu0
        %v2340 = vadd.f32 0.0, %v2339
        %v2341 = vpop.f32.mrb[0].mxu0
        %2342 = vmatprep.mubr.f32.mxu0 0.0
        %2343 = vmatmul.mubr.f32.gmra.mrb[0].mxu0 %v2120
        %v2344 = vpop.f32.mrb[0].mxu0
        %v2345 = vadd.f32 0.0, %v2344
        %v2346 = vpop.f32.mrb[0].mxu0
        %2347 = vmatprep.mubr.f32.mxu0 0.0
        %2348 = vmatmul.mubr.f32.gmra.mrb[0].mxu0 %v2123
        %v2349 = vpop.f32.mrb[0].mxu0
        %v2350 = vadd.f32 0.0, %v2349
        %v2351 = vpop.f32.mrb[0].mxu0
        %2352 = vdwg.mxu0
        %v2353 = vadd.f32 %v1958, %v2195
        %v2354 = vadd.f32 %v1963, %v2200
        %v2355 = vadd.f32 %v1968, %v2205
        %v2356 = vadd.f32 %v1973, %v2210
        %v2357 = vadd.f32 %v1978, %v2215
        %v2358 = vadd.f32 %v1983, %v2220
        %v2359 = vadd.f32 %v1988, %v2225
        %v2360 = vadd.f32 %v1993, %v2230
        %v2361 = vadd.f32 %v1998, %v2235
        %v2362 = vadd.f32 %v2003, %v2240
        %v2363 = vadd.f32 %v2008, %v2245
        %v2364 = vadd.f32 %v2013, %v2250
        %v2365 = vadd.f32 %v2018, %v2255
        %v2366 = vadd.f32 %v2023, %v2260
        %v2367 = vadd.f32 %v2028, %v2265
        %v2368 = vadd.f32 %v2033, %v2270
        %v2369 = vadd.f32 %v2038, %v2275
        %v2370 = vadd.f32 %v2043, %v2280
        %v2371 = vadd.f32 %v2048, %v2285
        %v2372 = vadd.f32 %v2053, %v2290
        %v2373 = vadd.f32 %v2058, %v2295
        %v2374 = vadd.f32 %v2063, %v2300
        %v2375 = vadd.f32 %v2068, %v2305
        %v2376 = vadd.f32 %v2073, %v2310
        %v2377 = vadd.f32 %v2078, %v2315
        %v2378 = vadd.f32 %v2083, %v2320
        %v2379 = vadd.f32 %v2088, %v2325
        %v2380 = vadd.f32 %v2093, %v2330
        %v2381 = vadd.f32 %v2098, %v2335
        %v2382 = vadd.f32 %v2103, %v2340
        %v2383 = vadd.f32 %v2108, %v2345
        %v2384 = vadd.f32 %v2113, %v2350
        %v2385 = vld [vmem:[%s5] sm:$0x1]
        %v2387 = vlaneseq
        %v2388 = vshrl.u32 %v2387, 7
        %v2389 = vsub.s32 0, %v2388
        %v2390 = vrot.slane %v2385, %v2389
        %v2392 = vadd.f32 %v2353, %v2390
        %v2393 = vadd.f32 %v2354, %v2390
        %v2394 = vadd.f32 %v2355, %v2390
        %v2395 = vadd.f32 %v2356, %v2390
        %v2396 = vadd.f32 %v2357, %v2390
        %v2397 = vadd.f32 %v2358, %v2390
        %v2398 = vadd.f32 %v2359, %v2390
        %v2399 = vadd.f32 %v2360, %v2390
        %v2400 = vadd.f32 %v2361, %v2390
        %v2401 = vadd.f32 %v2362, %v2390
        %v2402 = vadd.f32 %v2363, %v2390
        %v2403 = vadd.f32 %v2364, %v2390
        %v2404 = vadd.f32 %v2365, %v2390
        %v2405 = vadd.f32 %v2366, %v2390
        %v2406 = vadd.f32 %v2367, %v2390
        %v2407 = vadd.f32 %v2368, %v2390
        %v2408 = vadd.f32 %v2369, %v2390
        %v2409 = vadd.f32 %v2370, %v2390
        %v2410 = vadd.f32 %v2371, %v2390
        %v2411 = vadd.f32 %v2372, %v2390
        %v2412 = vadd.f32 %v2373, %v2390
        %v2413 = vadd.f32 %v2374, %v2390
        %v2414 = vadd.f32 %v2375, %v2390
        %v2415 = vadd.f32 %v2376, %v2390
        %v2416 = vadd.f32 %v2377, %v2390
        %v2417 = vadd.f32 %v2378, %v2390
        %v2418 = vadd.f32 %v2379, %v2390
        %v2419 = vadd.f32 %v2380, %v2390
        %v2420 = vadd.f32 %v2381, %v2390
        %v2421 = vadd.f32 %v2382, %v2390
        %v2422 = vadd.f32 %v2383, %v2390
        %v2423 = vadd.f32 %v2384, %v2390
        %v2424 = vmax.f32 %v2392, 0.0
        %v2425 = vmax.f32 %v2393, 0.0
        %v2426 = vmax.f32 %v2394, 0.0
        %v2427 = vmax.f32 %v2395, 0.0
        %v2428 = vmax.f32 %v2396, 0.0
        %v2429 = vmax.f32 %v2397, 0.0
        %v2430 = vmax.f32 %v2398, 0.0
        %v2431 = vmax.f32 %v2399, 0.0
        %v2432 = vmax.f32 %v2400, 0.0
        %v2433 = vmax.f32 %v2401, 0.0
        %v2434 = vmax.f32 %v2402, 0.0
        %v2435 = vmax.f32 %v2403, 0.0
        %v2436 = vmax.f32 %v2404, 0.0
        %v2437 = vmax.f32 %v2405, 0.0
        %v2438 = vmax.f32 %v2406, 0.0
        %v2439 = vmax.f32 %v2407, 0.0
        %v2440 = vmax.f32 %v2408, 0.0
        %v2441 = vmax.f32 %v2409, 0.0
        %v2442 = vmax.f32 %v2410, 0.0
        %v2443 = vmax.f32 %v2411, 0.0
        %v2444 = vmax.f32 %v2412, 0.0
        %v2445 = vmax.f32 %v2413, 0.0
        %v2446 = vmax.f32 %v2414, 0.0
        %v2447 = vmax.f32 %v2415, 0.0
        %v2448 = vmax.f32 %v2416, 0.0
        %v2449 = vmax.f32 %v2417, 0.0
        %v2450 = vmax.f32 %v2418, 0.0
        %v2451 = vmax.f32 %v2419, 0.0
        %v2452 = vmax.f32 %v2420, 0.0
        %v2453 = vmax.f32 %v2421, 0.0
        %v2454 = vmax.f32 %v2422, 0.0
        %v2455 = vmax.f32 %v2423, 0.0
        %v2456 = vld [vmem:[%s6] sm:$0xf]
        %v2457 = vld [vmem:[%s7] sm:$0x1]
        %v2459 = vlaneseq
        %v2460 = vshrl.u32 %v2459, 7
        %v2461 = vsub.s32 0, %v2460
        %v2462 = vrot.slane %v2457, %v2461
        %v2465 = vsel %vm756, %v2424, 0
        %v2468 = vsel %vm756, %v2425, 0
        %v2471 = vsel %vm756, %v2426, 0
        %v2474 = vsel %vm756, %v2427, 0
        %v2477 = vsel %vm756, %v2428, 0
        %v2480 = vsel %vm756, %v2429, 0
        %v2483 = vsel %vm756, %v2430, 0
        %v2486 = vsel %vm756, %v2431, 0
        %v2489 = vsel %vm756, %v2432, 0
        %v2492 = vsel %vm756, %v2433, 0
        %v2495 = vsel %vm756, %v2434, 0
        %v2498 = vsel %vm756, %v2435, 0
        %v2501 = vsel %vm756, %v2436, 0
        %v2504 = vsel %vm756, %v2437, 0
        %v2507 = vsel %vm756, %v2438, 0
        %v2510 = vsel %vm756, %v2439, 0
        %v2513 = vsel %vm756, %v2440, 0
        %v2516 = vsel %vm756, %v2441, 0
        %v2519 = vsel %vm756, %v2442, 0
        %v2522 = vsel %vm756, %v2443, 0
        %v2525 = vsel %vm756, %v2444, 0
        %v2528 = vsel %vm756, %v2445, 0
        %v2531 = vsel %vm756, %v2446, 0
        %v2534 = vsel %vm756, %v2447, 0
        %v2537 = vsel %vm756, %v2448, 0
        %v2540 = vsel %vm756, %v2449, 0
        %v2543 = vsel %vm756, %v2450, 0
        %v2546 = vsel %vm756, %v2451, 0
        %v2549 = vsel %vm756, %v2452, 0
        %v2552 = vsel %vm756, %v2453, 0
        %v2555 = vsel %vm756, %v2454, 0
        %v2558 = vsel %vm756, %v2455, 0
        %v2561 = vsel %vm1653, %v2456, 0
        %2563 = vmatprep.subr.mxu0 0.0
        %2564 = vmatpush1.msra.mxu0 %v2561
        %2565 = vmatprep.subr.mxu0 0.0
        %2566 = vmatpush1.msra.mxu0 0.0
        %2567 = vmatprep.subr.mxu0 0.0
        %2568 = vmatpush1.msra.mxu0 0.0
        %2569 = vmatprep.subr.mxu0 0.0
        %2570 = vmatpush1.msra.mxu0 0.0
        %2571 = vmatprep.subr.mxu0 0.0
        %2572 = vmatpush1.msra.mxu0 0.0
        %2573 = vmatprep.subr.mxu0 0.0
        %2574 = vmatpush1.msra.mxu0 0.0
        %2575 = vmatprep.subr.mxu0 0.0
        %2576 = vmatpush1.msra.mxu0 0.0
        %2577 = vmatprep.subr.mxu0 0.0
        %2578 = vmatpush1.msra.mxu0 0.0
        %2579 = vmatprep.subr.mxu0 0.0
        %2580 = vmatpush1.msra.mxu0 0.0
        %2581 = vmatprep.subr.mxu0 0.0
        %2582 = vmatpush1.msra.mxu0 0.0
        %2583 = vmatprep.subr.mxu0 0.0
        %2584 = vmatpush1.msra.mxu0 0.0
        %2585 = vmatprep.subr.mxu0 0.0
        %2586 = vmatpush1.msra.mxu0 0.0
        %2587 = vmatprep.subr.mxu0 0.0
        %2588 = vmatpush1.msra.mxu0 0.0
        %2589 = vmatprep.subr.mxu0 0.0
        %2590 = vmatpush1.msra.mxu0 0.0
        %2591 = vmatprep.subr.mxu0 0.0
        %2592 = vmatpush1.msra.mxu0 0.0
        %2593 = vmatprep.subr.mxu0 0.0
        %2594 = vmatpush1.msra.mxu0 0.0
        %2595 = vmatprep.subr.mxu0 0.0
        %2596 = vmatpush1.msra.mxu0 0.0
        %2597 = vmatprep.subr.mxu0 0.0
        %2598 = vmatpush1.msra.mxu0 0.0
        %2599 = vmatprep.subr.mxu0 0.0
        %2600 = vmatpush1.msra.mxu0 0.0
        %2601 = vmatprep.subr.mxu0 0.0
        %2602 = vmatpush1.msra.mxu0 0.0
        %2603 = vmatprep.subr.mxu0 0.0
        %2604 = vmatpush1.msra.mxu0 0.0
        %2605 = vmatprep.subr.mxu0 0.0
        %2606 = vmatpush1.msra.mxu0 0.0
        %2607 = vmatprep.subr.mxu0 0.0
        %2608 = vmatpush1.msra.mxu0 0.0
        %2609 = vmatprep.subr.mxu0 0.0
        %2610 = vmatpush1.msra.mxu0 0.0
        %2611 = vmatprep.subr.mxu0 0.0
        %2612 = vmatpush1.msra.mxu0 0.0
        %2613 = vmatprep.subr.mxu0 0.0
        %2614 = vmatpush1.msra.mxu0 0.0
        %2615 = vmatprep.subr.mxu0 0.0
        %2616 = vmatpush1.msra.mxu0 0.0
        %2617 = vmatprep.subr.mxu0 0.0
        %2618 = vmatpush1.msra.mxu0 0.0
        %2619 = vmatprep.subr.mxu0 0.0
        %2620 = vmatpush1.msra.mxu0 0.0
        %2621 = vmatprep.subr.mxu0 0.0
        %2622 = vmatpush1.msra.mxu0 0.0
        %2623 = vmatprep.subr.mxu0 0.0
        %2624 = vmatpush1.msra.mxu0 0.0
        %2625 = vmatprep.subr.mxu0 0.0
        %2626 = vmatpush1.msra.mxu0 0.0
        %2627 = vmatprep.mubr.f32.mxu0 0.0
        %2628 = vmatmul.mubr.f32.gmra.mrb[0].mxu0 %v2465
        %v2629 = vpop.f32.mrb[0].mxu0
        %v2630 = vadd.f32 %v2462, %v2629
        %v2631 = vpop.f32.mrb[0].mxu0
        %2632 = vmatprep.mubr.f32.mxu0 0.0
        %2633 = vmatmul.mubr.f32.gmra.mrb[0].mxu0 %v2468
        %v2634 = vpop.f32.mrb[0].mxu0
        %v2635 = vadd.f32 %v2462, %v2634
        %v2636 = vpop.f32.mrb[0].mxu0
        %2637 = vmatprep.mubr.f32.mxu0 0.0
        %2638 = vmatmul.mubr.f32.gmra.mrb[0].mxu0 %v2471
        %v2639 = vpop.f32.mrb[0].mxu0
        %v2640 = vadd.f32 %v2462, %v2639
        %v2641 = vpop.f32.mrb[0].mxu0
        %2642 = vmatprep.mubr.f32.mxu0 0.0
        %2643 = vmatmul.mubr.f32.gmra.mrb[0].mxu0 %v2474
        %v2644 = vpop.f32.mrb[0].mxu0
        %v2645 = vadd.f32 %v2462, %v2644
        %v2646 = vpop.f32.mrb[0].mxu0
        %2647 = vmatprep.mubr.f32.mxu0 0.0
        %2648 = vmatmul.mubr.f32.gmra.mrb[0].mxu0 %v2477
        %v2649 = vpop.f32.mrb[0].mxu0
        %v2650 = vadd.f32 %v2462, %v2649
        %v2651 = vpop.f32.mrb[0].mxu0
        %2652 = vmatprep.mubr.f32.mxu0 0.0
        %2653 = vmatmul.mubr.f32.gmra.mrb[0].mxu0 %v2480
        %v2654 = vpop.f32.mrb[0].mxu0
        %v2655 = vadd.f32 %v2462, %v2654
        %v2656 = vpop.f32.mrb[0].mxu0
        %2657 = vmatprep.mubr.f32.mxu0 0.0
        %2658 = vmatmul.mubr.f32.gmra.mrb[0].mxu0 %v2483
        %v2659 = vpop.f32.mrb[0].mxu0
        %v2660 = vadd.f32 %v2462, %v2659
        %v2661 = vpop.f32.mrb[0].mxu0
        %2662 = vmatprep.mubr.f32.mxu0 0.0
        %2663 = vmatmul.mubr.f32.gmra.mrb[0].mxu0 %v2486
        %v2664 = vpop.f32.mrb[0].mxu0
        %v2665 = vadd.f32 %v2462, %v2664
        %v2666 = vpop.f32.mrb[0].mxu0
        %2667 = vmatprep.mubr.f32.mxu0 0.0
        %2668 = vmatmul.mubr.f32.gmra.mrb[0].mxu0 %v2489
        %v2669 = vpop.f32.mrb[0].mxu0
        %v2670 = vadd.f32 %v2462, %v2669
        %v2671 = vpop.f32.mrb[0].mxu0
        %2672 = vmatprep.mubr.f32.mxu0 0.0
        %2673 = vmatmul.mubr.f32.gmra.mrb[0].mxu0 %v2492
        %v2674 = vpop.f32.mrb[0].mxu0
        %v2675 = vadd.f32 %v2462, %v2674
        %v2676 = vpop.f32.mrb[0].mxu0
        %2677 = vmatprep.mubr.f32.mxu0 0.0
        %2678 = vmatmul.mubr.f32.gmra.mrb[0].mxu0 %v2495
        %v2679 = vpop.f32.mrb[0].mxu0
        %v2680 = vadd.f32 %v2462, %v2679
        %v2681 = vpop.f32.mrb[0].mxu0
        %2682 = vmatprep.mubr.f32.mxu0 0.0
        %2683 = vmatmul.mubr.f32.gmra.mrb[0].mxu0 %v2498
        %v2684 = vpop.f32.mrb[0].mxu0
        %v2685 = vadd.f32 %v2462, %v2684
        %v2686 = vpop.f32.mrb[0].mxu0
        %2687 = vmatprep.mubr.f32.mxu0 0.0
        %2688 = vmatmul.mubr.f32.gmra.mrb[0].mxu0 %v2501
        %v2689 = vpop.f32.mrb[0].mxu0
        %v2690 = vadd.f32 %v2462, %v2689
        %v2691 = vpop.f32.mrb[0].mxu0
        %2692 = vmatprep.mubr.f32.mxu0 0.0
        %2693 = vmatmul.mubr.f32.gmra.mrb[0].mxu0 %v2504
        %v2694 = vpop.f32.mrb[0].mxu0
        %v2695 = vadd.f32 %v2462, %v2694
        %v2696 = vpop.f32.mrb[0].mxu0
        %2697 = vmatprep.mubr.f32.mxu0 0.0
        %2698 = vmatmul.mubr.f32.gmra.mrb[0].mxu0 %v2507
        %v2699 = vpop.f32.mrb[0].mxu0
        %v2700 = vadd.f32 %v2462, %v2699
        %v2701 = vpop.f32.mrb[0].mxu0
        %2702 = vmatprep.mubr.f32.mxu0 0.0
        %2703 = vmatmul.mubr.f32.gmra.mrb[0].mxu0 %v2510
        %v2704 = vpop.f32.mrb[0].mxu0
        %v2705 = vadd.f32 %v2462, %v2704
        %v2706 = vpop.f32.mrb[0].mxu0
        %2707 = vmatprep.mubr.f32.mxu0 0.0
        %2708 = vmatmul.mubr.f32.gmra.mrb[0].mxu0 %v2513
        %v2709 = vpop.f32.mrb[0].mxu0
        %v2710 = vadd.f32 %v2462, %v2709
        %v2711 = vpop.f32.mrb[0].mxu0
        %2712 = vmatprep.mubr.f32.mxu0 0.0
        %2713 = vmatmul.mubr.f32.gmra.mrb[0].mxu0 %v2516
        %v2714 = vpop.f32.mrb[0].mxu0
        %v2715 = vadd.f32 %v2462, %v2714
        %v2716 = vpop.f32.mrb[0].mxu0
        %2717 = vmatprep.mubr.f32.mxu0 0.0
        %2718 = vmatmul.mubr.f32.gmra.mrb[0].mxu0 %v2519
        %v2719 = vpop.f32.mrb[0].mxu0
        %v2720 = vadd.f32 %v2462, %v2719
        %v2721 = vpop.f32.mrb[0].mxu0
        %2722 = vmatprep.mubr.f32.mxu0 0.0
        %2723 = vmatmul.mubr.f32.gmra.mrb[0].mxu0 %v2522
        %v2724 = vpop.f32.mrb[0].mxu0
        %v2725 = vadd.f32 %v2462, %v2724
        %v2726 = vpop.f32.mrb[0].mxu0
        %2727 = vmatprep.mubr.f32.mxu0 0.0
        %2728 = vmatmul.mubr.f32.gmra.mrb[0].mxu0 %v2525
        %v2729 = vpop.f32.mrb[0].mxu0
        %v2730 = vadd.f32 %v2462, %v2729
        %v2731 = vpop.f32.mrb[0].mxu0
        %2732 = vmatprep.mubr.f32.mxu0 0.0
        %2733 = vmatmul.mubr.f32.gmra.mrb[0].mxu0 %v2528
        %v2734 = vpop.f32.mrb[0].mxu0
        %v2735 = vadd.f32 %v2462, %v2734
        %v2736 = vpop.f32.mrb[0].mxu0
        %2737 = vmatprep.mubr.f32.mxu0 0.0
        %2738 = vmatmul.mubr.f32.gmra.mrb[0].mxu0 %v2531
        %v2739 = vpop.f32.mrb[0].mxu0
        %v2740 = vadd.f32 %v2462, %v2739
        %v2741 = vpop.f32.mrb[0].mxu0
        %2742 = vmatprep.mubr.f32.mxu0 0.0
        %2743 = vmatmul.mubr.f32.gmra.mrb[0].mxu0 %v2534
        %v2744 = vpop.f32.mrb[0].mxu0
        %v2745 = vadd.f32 %v2462, %v2744
        %v2746 = vpop.f32.mrb[0].mxu0
        %2747 = vmatprep.mubr.f32.mxu0 0.0
        %2748 = vmatmul.mubr.f32.gmra.mrb[0].mxu0 %v2537
        %v2749 = vpop.f32.mrb[0].mxu0
        %v2750 = vadd.f32 %v2462, %v2749
        %v2751 = vpop.f32.mrb[0].mxu0
        %2752 = vmatprep.mubr.f32.mxu0 0.0
        %2753 = vmatmul.mubr.f32.gmra.mrb[0].mxu0 %v2540
        %v2754 = vpop.f32.mrb[0].mxu0
        %v2755 = vadd.f32 %v2462, %v2754
        %v2756 = vpop.f32.mrb[0].mxu0
        %2757 = vmatprep.mubr.f32.mxu0 0.0
        %2758 = vmatmul.mubr.f32.gmra.mrb[0].mxu0 %v2543
        %v2759 = vpop.f32.mrb[0].mxu0
        %v2760 = vadd.f32 %v2462, %v2759
        %v2761 = vpop.f32.mrb[0].mxu0
        %2762 = vmatprep.mubr.f32.mxu0 0.0
        %2763 = vmatmul.mubr.f32.gmra.mrb[0].mxu0 %v2546
        %v2764 = vpop.f32.mrb[0].mxu0
        %v2765 = vadd.f32 %v2462, %v2764
        %v2766 = vpop.f32.mrb[0].mxu0
        %2767 = vmatprep.mubr.f32.mxu0 0.0
        %2768 = vmatmul.mubr.f32.gmra.mrb[0].mxu0 %v2549
        %v2769 = vpop.f32.mrb[0].mxu0
        %v2770 = vadd.f32 %v2462, %v2769
        %v2771 = vpop.f32.mrb[0].mxu0
        %2772 = vmatprep.mubr.f32.mxu0 0.0
        %2773 = vmatmul.mubr.f32.gmra.mrb[0].mxu0 %v2552
        %v2774 = vpop.f32.mrb[0].mxu0
        %v2775 = vadd.f32 %v2462, %v2774
        %v2776 = vpop.f32.mrb[0].mxu0
        %2777 = vmatprep.mubr.f32.mxu0 0.0
        %2778 = vmatmul.mubr.f32.gmra.mrb[0].mxu0 %v2555
        %v2779 = vpop.f32.mrb[0].mxu0
        %v2780 = vadd.f32 %v2462, %v2779
        %v2781 = vpop.f32.mrb[0].mxu0
        %2782 = vmatprep.mubr.f32.mxu0 0.0
        %2783 = vmatmul.mubr.f32.gmra.mrb[0].mxu0 %v2558
        %v2784 = vpop.f32.mrb[0].mxu0
        %v2785 = vadd.f32 %v2462, %v2784
        %v2786 = vpop.f32.mrb[0].mxu0
        %2787 = vdwg.mxu0
        %v2788 = vadd.f32 %v2630, %v360
        %v2789 = vadd.f32 %v2635, %v361
        %v2790 = vadd.f32 %v2640, %v362
        %v2791 = vadd.f32 %v2645, %v363
        %v2792 = vadd.f32 %v2650, %v364
        %v2793 = vadd.f32 %v2655, %v365
        %v2794 = vadd.f32 %v2660, %v366
        %v2795 = vadd.f32 %v2665, %v367
        %v2796 = vadd.f32 %v2670, %v368
        %v2797 = vadd.f32 %v2675, %v369
        %v2798 = vadd.f32 %v2680, %v370
        %v2799 = vadd.f32 %v2685, %v371
        %v2800 = vadd.f32 %v2690, %v372
        %v2801 = vadd.f32 %v2695, %v373
        %v2802 = vadd.f32 %v2700, %v374
        %v2803 = vadd.f32 %v2705, %v375
        %v2804 = vadd.f32 %v2710, %v376
        %v2805 = vadd.f32 %v2715, %v377
        %v2806 = vadd.f32 %v2720, %v378
        %v2807 = vadd.f32 %v2725, %v379
        %v2808 = vadd.f32 %v2730, %v380
        %v2809 = vadd.f32 %v2735, %v381
        %v2810 = vadd.f32 %v2740, %v382
        %v2811 = vadd.f32 %v2745, %v383
        %v2812 = vadd.f32 %v2750, %v384
        %v2813 = vadd.f32 %v2755, %v385
        %v2814 = vadd.f32 %v2760, %v386
        %v2815 = vadd.f32 %v2765, %v387
        %v2816 = vadd.f32 %v2770, %v388
        %v2817 = vadd.f32 %v2775, %v389
        %v2818 = vadd.f32 %v2780, %v390
        %v2819 = vadd.f32 %v2785, %v391
        %v2820 = vmax.f32 %v2788, 0.0
        %v2821 = vmax.f32 %v2789, 0.0
        %v2822 = vmax.f32 %v2790, 0.0
        %v2823 = vmax.f32 %v2791, 0.0
        %v2824 = vmax.f32 %v2792, 0.0
        %v2825 = vmax.f32 %v2793, 0.0
        %v2826 = vmax.f32 %v2794, 0.0
        %v2827 = vmax.f32 %v2795, 0.0
        %v2828 = vmax.f32 %v2796, 0.0
        %v2829 = vmax.f32 %v2797, 0.0
        %v2830 = vmax.f32 %v2798, 0.0
        %v2831 = vmax.f32 %v2799, 0.0
        %v2832 = vmax.f32 %v2800, 0.0
        %v2833 = vmax.f32 %v2801, 0.0
        %v2834 = vmax.f32 %v2802, 0.0
        %v2835 = vmax.f32 %v2803, 0.0
        %v2836 = vmax.f32 %v2804, 0.0
        %v2837 = vmax.f32 %v2805, 0.0
        %v2838 = vmax.f32 %v2806, 0.0
        %v2839 = vmax.f32 %v2807, 0.0
        %v2840 = vmax.f32 %v2808, 0.0
        %v2841 = vmax.f32 %v2809, 0.0
        %v2842 = vmax.f32 %v2810, 0.0
        %v2843 = vmax.f32 %v2811, 0.0
        %v2844 = vmax.f32 %v2812, 0.0
        %v2845 = vmax.f32 %v2813, 0.0
        %v2846 = vmax.f32 %v2814, 0.0
        %v2847 = vmax.f32 %v2815, 0.0
        %v2848 = vmax.f32 %v2816, 0.0
        %v2849 = vmax.f32 %v2817, 0.0
        %v2850 = vmax.f32 %v2818, 0.0
        %v2851 = vmax.f32 %v2819, 0.0
        %2852 = vst.msk [vmem:[%s316] sm:$0xff] %vm401, %v2820
        %2853 = vst.msk [vmem:[%s316 + $0x8] sm:$0xff] %vm401, %v2821
        %2854 = vst.msk [vmem:[%s316 + $0x10] sm:$0xff] %vm401, %v2822
        %2855 = vst.msk [vmem:[%s316 + $0x18] sm:$0xff] %vm401, %v2823
        %2856 = vst.msk [vmem:[%s316 + $0x20] sm:$0xff] %vm401, %v2824
        %2857 = vst.msk [vmem:[%s316 + $0x28] sm:$0xff] %vm401, %v2825
        %2858 = vst.msk [vmem:[%s316 + $0x30] sm:$0xff] %vm401, %v2826
        %2859 = vst.msk [vmem:[%s316 + $0x38] sm:$0xff] %vm401, %v2827
        %2860 = vst.msk [vmem:[%s316 + $0x40] sm:$0xff] %vm401, %v2828
        %2861 = vst.msk [vmem:[%s316 + $0x48] sm:$0xff] %vm401, %v2829
        %2862 = vst.msk [vmem:[%s316 + $0x50] sm:$0xff] %vm401, %v2830
        %2863 = vst.msk [vmem:[%s316 + $0x58] sm:$0xff] %vm401, %v2831
        %2864 = vst.msk [vmem:[%s316 + $0x60] sm:$0xff] %vm401, %v2832
        %2865 = vst.msk [vmem:[%s316 + $0x68] sm:$0xff] %vm401, %v2833
        %2866 = vst.msk [vmem:[%s316 + $0x70] sm:$0xff] %vm401, %v2834
        %2867 = vst.msk [vmem:[%s316 + $0x78] sm:$0xff] %vm401, %v2835
        %2868 = vst.msk [vmem:[%s316 + $0x80] sm:$0xff] %vm401, %v2836
        %2869 = vst.msk [vmem:[%s316 + $0x88] sm:$0xff] %vm401, %v2837
        %2870 = vst.msk [vmem:[%s316 + $0x90] sm:$0xff] %vm401, %v2838
        %2871 = vst.msk [vmem:[%s316 + $0x98] sm:$0xff] %vm401, %v2839
        %2872 = vst.msk [vmem:[%s316 + $0xa0] sm:$0xff] %vm401, %v2840
        %2873 = vst.msk [vmem:[%s316 + $0xa8] sm:$0xff] %vm401, %v2841
        %2874 = vst.msk [vmem:[%s316 + $0xb0] sm:$0xff] %vm401, %v2842
        %2875 = vst.msk [vmem:[%s316 + $0xb8] sm:$0xff] %vm401, %v2843
        %2876 = vst.msk [vmem:[%s316 + $0xc0] sm:$0xff] %vm401, %v2844
        %2877 = vst.msk [vmem:[%s316 + $0xc8] sm:$0xff] %vm401, %v2845
        %2878 = vst.msk [vmem:[%s316 + $0xd0] sm:$0xff] %vm401, %v2846
        %2879 = vst.msk [vmem:[%s316 + $0xd8] sm:$0xff] %vm401, %v2847
        %2880 = vst.msk [vmem:[%s316 + $0xe0] sm:$0xff] %vm401, %v2848
        %2881 = vst.msk [vmem:[%s316 + $0xe8] sm:$0xff] %vm401, %v2849
        %2882 = vst.msk [vmem:[%s316 + $0xf0] sm:$0xff] %vm401, %v2850
        %2883 = vst.msk [vmem:[%s316 + $0xf8] sm:$0xff] %vm401, %v2851
        %s2884 = sand.u32 %s201, 1
        %s2885 = scalar_lea.sflag [#allocation7], %s2884
        %s2886 = sand.u32 %s201, 1
        %s2887 = smul.addr %s2886, 256
        %s2888 = scalar_lea.vmem [#allocation8], %s2887
        // Predicated region
        $region61: #{tpu_custom_call.1} parent=47 // pred_check
          %p2889 = pneg %p211
        $region62: #{tpu_custom_call.1} parent=47 // pred_check_branch
          %2891 = sbr.rel (%p2889) target = $region64
        $region63: #{tpu_custom_call.1} parent=47 // pred_region
          %s2892 = smul.u32 16, %s30
          %s2894 = ssub.s32 4096, 4096
          %2895 = vsyncadd %s2885, %s2894
          %s2896 = smul.addr %s2892, 2
          %s2897 = smul.addr %s29, 32
          %s2898 = sadd.s32 %s2896, %s2897
          %s2899 = smul.addr %s2898, 128
          %s2900 = scalar_lea.hbm %s8, %s2899
          %s2901 = sshll.u32 %s2888, 4
          %s2902 = int_to_ptr.vmem [resolvable:$true] %s2901
          %2907 = dma.vmem_to_hbm [thread:$0]  %s2902, 4096, %s2900, %s2885, 128, 128, 8
        $region64: #{tpu_custom_call.1} parent=47 // pred_fallthru
          _
      $region48: #{tpu_custom_call.1} parent=5 // pred_fallthru
        _
      %p2908 = scmp.le.s32.totalorder 2, %s20
      // Predicated region
      $region65: #{tpu_custom_call.1} parent=5 // pred_check
        %p2909 = pneg %p2908
      $region66: #{tpu_custom_call.1} parent=5 // pred_check_branch
        %2911 = sbr.rel (%p2909) target = $region68
      $region67: #{tpu_custom_call.1} parent=5 // pred_region
        %s2912 = ssub.s32 %s20, 2
        // Predicated region
        $region69: #{tpu_custom_call.1} parent=67 // pred_check
          %p2913 = pneg %p217
        $region70: #{tpu_custom_call.1} parent=67 // pred_check_branch
          %2915 = sbr.rel (%p2913) target = $region72
        $region71: #{tpu_custom_call.1} parent=67 // pred_region
          %s2916 = sand.u32 %s202, 1
          %s2917 = scalar_lea.sflag [#allocation7], %s2916
          %s2918 = sand.u32 %s202, 1
          %s2919 = smul.addr %s2918, 256
          %s2920 = scalar_lea.vmem [#allocation8], %s2919
          %2921 = dma.done %s2917, 4096
        $region72: #{tpu_custom_call.1} parent=67 // pred_fallthru
          _
      $region68: #{tpu_custom_call.1} parent=5 // pred_fallthru
        _
    $region6: #{tpu_custom_call.1} parent=1 // loop_footer
      %s24 = sadd.s32 1, %s20
    $region7: #{tpu_custom_call.1} parent=1 // loop_footer_branch
      %19 = sbr.rel target = $region3
    $region8: #{tpu_custom_call.1} parent=1 // loop_exit
      _
    %2922 = vsyncpa [#allocation6], 1
    %s2923 = scalar_lea.sflag [#allocation6], 1
    %2924 = vsyncpa %s2923, 1
    %2925 = vsyncpa [#allocation7], 1
    %s2926 = scalar_lea.sflag [#allocation7], 1
    %2927 = vsyncpa %s2926, 1
  %2928 = vsyncmov [#allocation3]
  %s2929 = vpop.sfrf %2928
  %p2930 = scmp.eq.s32.totalorder %s2929, 0
  %p2931 = pneg %p2930
  %2933 = shalt.err (%p2931)
  %s2934 = scalar_lea.sflag [#allocation3], 1
  %2935 = vsyncmov %s2934
  %s2936 = vpop.sfrf %2935
  %p2937 = scmp.eq.s32.totalorder %s2936, 0
  %p2938 = pneg %p2937
  %2940 = shalt.err (%p2938)

</llo_original>
